<compile_context>
chip_gen: v7x
topology: tpu7x:2x2x1
jax: 0.10.0
libtpu: 0.0.40
codegen_flags: <defaults>
</compile_context>

<pallas_src>
import functools

import jax
import jax.numpy as jnp
from jax.experimental import pallas as pl
from jax.experimental.pallas import tpu as pltpu


def _res_attn_bn_kernel(x_ref, wqkv_ref, bqkv_ref, wo_ref, bo_ref,
                        gamma_ref, beta_ref, o_ref, *, n_head):
    """Fused Attention(dim='f') + residual + training-mode BatchNorm2d.

    x_ref:     (B, C, T, F) input, native layout (no host transpose).
    wqkv_ref:  (T, 3T) packed [Wq.T*s | Wk.T*s | Wv.T] (pre-transposed, scale folded).
    bqkv_ref:  (1, 3T) packed [bq*s | 0 | bv].
    wo_ref:    (T, T)  Wo.T;   bo_ref: (1, T).
    gamma_ref / beta_ref: (1, C, 1, 1) BatchNorm affine parameters.
    o_ref:     (B, C, T, F) output, native layout (no host un-permute).
    """
    B, C, T, Fd = x_ref.shape
    H = n_head
    dh = T // H
    N = B * C          # batched (b, c) attention problems
    M = N * Fd         # total projection rows

    # --- attention permute (T,F) -> (F,T), done in-kernel (tiny XLU transposes) ---
    xp = jnp.swapaxes(x_ref[...], 2, 3)                      # (B, C, F, T)
    x2 = xp.reshape(M, T)                                    # all rows at once

    # --- single fused QKV projection: (M, T) @ (T, 3T) + bias ---
    qkv = jnp.dot(x2, wqkv_ref[...],
                  preferred_element_type=jnp.float32) + bqkv_ref[...]
    q = qkv[:, 0 * T:1 * T].reshape(N, Fd, T)
    k = qkv[:, 1 * T:2 * T].reshape(N, Fd, T)
    v = qkv[:, 2 * T:3 * T].reshape(N, Fd, T)

    # --- per-head attention: static loop over lane slices (no q/k/v concats) ---
    wv_heads = []
    for h in range(H):
        sl = slice(h * dh, (h + 1) * dh)
        s = jnp.einsum('nfd,ngd->nfg', q[:, :, sl], k[:, :, sl],
                       preferred_element_type=jnp.float32)   # (N, F, F)
        s = s - jnp.max(s, axis=-1, keepdims=True)
        e = jnp.exp(s)
        p = e / jnp.sum(e, axis=-1, keepdims=True)            # exact softmax
        wv_heads.append(jnp.einsum('nfg,ngd->nfd', p, v[:, :, sl],
                                   preferred_element_type=jnp.float32))
    # Merge heads along lanes, head-major (matches torch .flatten(start_dim=3)).
    wv = jnp.concatenate(wv_heads, axis=-1)                   # (N, F, T)

    # --- output projection + residual (still in the permuted (F,T) layout) ---
    out = jnp.dot(wv.reshape(M, T), wo_ref[...],
                  preferred_element_type=jnp.float32) + bo_ref[...]
    y = (out + x2).reshape(B, C, Fd, T)

    # --- BatchNorm2d, training-mode batch stats, vectorized over all channels ---
    inv_count = 1.0 / float(B * Fd * T)

    def chan_sum(t):                                          # (B,C,F,T)->(1,C,1,1)
        t = jnp.sum(t, axis=3, keepdims=True)                 # lane reduce
        t = jnp.sum(t, axis=2, keepdims=True)                 # sublane reduce
        return jnp.sum(t, axis=0, keepdims=True)              # batch reduce

    mean = chan_sum(y) * inv_count
    d = y - mean
    var = chan_sum(d * d) * inv_count                         # biased variance
    scale = jax.lax.rsqrt(var + 1e-5) * gamma_ref[...]        # (1, C, 1, 1)
    shift = beta_ref[...] - mean * scale
    yn = y * scale + shift

    # Back to the native (B, C, T, F) layout; one full-block store.
    o_ref[...] = jnp.swapaxes(yn, 2, 3)


def res_attention_forward(x, params, n_head):
    """Res_Attention forward (dim='f', dim_num=4, with_head=True, BatchNorm2d,
    use_FFN=False).  x: (B, C, T, F) -> (B, C, T, F)."""
    if x.ndim != 4:
        raise ValueError(f"expected 4-D (B, C, T, F) input, got {x.shape}")
    B, C, T, Fd = x.shape
    if T % n_head != 0:
        raise ValueError("n_state (T) must be divisible by n_head")
    dh = T // n_head
    scl = float(dh) ** -0.25

    x = x.astype(jnp.float32)

    # Pack weights host-side: pre-transposed, q/k scale folded in.
    wqkv = jnp.concatenate(
        [params["Wq"].T * scl, params["Wk"].T * scl, params["Wv"].T],
        axis=1).astype(jnp.float32)                                      # (T, 3T)
    bqkv = jnp.concatenate(
        [params["bq"] * scl, jnp.zeros((T,), jnp.float32), params["bv"]]
    ).astype(jnp.float32)[None, :]                                       # (1, 3T)
    wo = params["Wo"].T.astype(jnp.float32)                              # (T, T)
    bo = params["bo"].astype(jnp.float32)[None, :]                       # (1, T)
    gamma = params["gamma"].astype(jnp.float32).reshape(1, C, 1, 1)
    beta = params["beta"].astype(jnp.float32).reshape(1, C, 1, 1)

    # Single invocation, no grid: every operand (and the output) is a whole
    # array resident in VMEM — the entire problem is only a few KB.
    vmem = pltpu.MemorySpace.VMEM
    return pl.pallas_call(
        functools.partial(_res_attn_bn_kernel, n_head=n_head),
        out_shape=jax.ShapeDtypeStruct((B, C, T, Fd), jnp.float32),
        in_specs=[pl.BlockSpec(memory_space=vmem)] * 7,
        out_specs=pl.BlockSpec(memory_space=vmem),
    )(x, wqkv, bqkv, wo, bo, gamma, beta)


def ref_forward(x, params, n_head):
    """Pure-JAX reference mirroring the PyTorch forward exactly."""
    xp = jnp.transpose(x, (0, 1, 3, 2)).astype(jnp.float32)   # (B, C, F, T)
    B, C, F, T = xp.shape
    dh = T // n_head
    scale = float(dh) ** -0.25

    q = xp @ params["Wq"].T + params["bq"]
    k = xp @ params["Wk"].T
    v = xp @ params["Wv"].T + params["bv"]

    qh = q.reshape(B, C, F, n_head, dh).transpose(0, 3, 1, 2, 4) * scale
    kh = k.reshape(B, C, F, n_head, dh).transpose(0, 3, 1, 4, 2) * scale
    vh = v.reshape(B, C, F, n_head, dh).transpose(0, 3, 1, 2, 4)
    qk = qh @ kh
    w = jax.nn.softmax(qk.astype(jnp.float32), axis=-1)
    wv = (w @ vh).transpose(0, 2, 3, 1, 4).reshape(B, C, F, T)
    out = wv @ params["Wo"].T + params["bo"]

    y = out + xp                                               # residual
    mean = y.mean(axis=(0, 2, 3), keepdims=True)
    var = ((y - mean) ** 2).mean(axis=(0, 2, 3), keepdims=True)
    yn = (y - mean) / jnp.sqrt(var + 1e-5)
    yn = yn * params["gamma"][None, :, None, None] + params["beta"][None, :, None, None]
    return jnp.transpose(yn, (0, 1, 3, 2))


if __name__ == "__main__":
    B, C, T, F = 2, 4, 16, 16      # x: (B, C, T, F); n_state = T = 16
    n_head = 2

    key = jax.random.PRNGKey(0)
    ks = jax.random.split(key, 10)
    x = jax.random.normal(ks[0], (B, C, T, F), jnp.float32)
    params = {
        "Wq": 0.3 * jax.random.normal(ks[1], (T, T), jnp.float32),
        "bq": 0.1 * jax.random.normal(ks[2], (T,), jnp.float32),
        "Wk": 0.3 * jax.random.normal(ks[3], (T, T), jnp.float32),
        "Wv": 0.3 * jax.random.normal(ks[4], (T, T), jnp.float32),
        "bv": 0.1 * jax.random.normal(ks[5], (T,), jnp.float32),
        "Wo": 0.3 * jax.random.normal(ks[6], (T, T), jnp.float32),
        "bo": 0.1 * jax.random.normal(ks[7], (T,), jnp.float32),
        "gamma": 1.0 + 0.1 * jax.random.normal(ks[8], (C,), jnp.float32),
        "beta": 0.1 * jax.random.normal(ks[9], (C,), jnp.float32),
    }

    out = jax.block_until_ready(res_attention_forward(x, params, n_head))
    ref = jax.block_until_ready(ref_forward(x, params, n_head))

    assert out.shape == (B, C, T, F), out.shape
    err = float(jnp.max(jnp.abs(out - ref)))
    assert err < 1e-3, f"max abs error {err}"
    print("KERNEL_OK")
</pallas_src>

<mosaic_0001>
module attributes {stable_mosaic.version = 11 : i64} {
  func.func @_res_attn_bn_kernel(%arg0: memref<2x4x16x16xf32, #tpu.memory_space<vmem>>, %arg1: memref<16x48xf32, #tpu.memory_space<vmem>>, %arg2: memref<1x48xf32, #tpu.memory_space<vmem>>, %arg3: memref<16x16xf32, #tpu.memory_space<vmem>>, %arg4: memref<1x16xf32, #tpu.memory_space<vmem>>, %arg5: memref<1x4x1x1xf32, #tpu.memory_space<vmem>>, %arg6: memref<1x4x1x1xf32, #tpu.memory_space<vmem>>, %arg7: memref<2x4x16x16xf32, #tpu.memory_space<vmem>>) attributes {dimension_semantics = [], scalar_prefetch = 0 : i64, scratch_operands = 0 : i64, tpu.core_type = #tpu.core_type<tc>} {
    %c0 = arith.constant 0 : index
    %c0_0 = arith.constant 0 : index
    %c0_1 = arith.constant 0 : index
    %c0_2 = arith.constant 0 : index
    %0 = vector.load %arg0[%c0, %c0_0, %c0_1, %c0_2] : memref<2x4x16x16xf32, #tpu.memory_space<vmem>>, vector<2x4x16x16xf32>
    %1 = tpu.transpose %0, [0, 1, 3, 2] : vector<2x4x16x16xf32> -> vector<2x4x16x16xf32>
    %2 = vector.shape_cast %1 : vector<2x4x16x16xf32> to vector<128x16xf32>
    %c0_3 = arith.constant 0 : index
    %c0_4 = arith.constant 0 : index
    %3 = vector.load %arg1[%c0_3, %c0_4] : memref<16x48xf32, #tpu.memory_space<vmem>>, vector<16x48xf32>
    %cst = arith.constant dense<0.000000e+00> : vector<128x48xf32>
    %4 = tpu.matmul %2, %3, %cst {dimension_numbers = #tpu.dot_dimension_numbers<[1], [0], [0], [1], [0, 0, 1, 1], [], []>} : vector<128x16xf32>, vector<16x48xf32>, vector<128x48xf32> -> vector<128x48xf32>
    %c0_5 = arith.constant 0 : index
    %c0_6 = arith.constant 0 : index
    %5 = vector.load %arg2[%c0_5, %c0_6] : memref<1x48xf32, #tpu.memory_space<vmem>>, vector<1x48xf32>
    %6 = vector.broadcast %5 : vector<1x48xf32> to vector<128x48xf32>
    %7 = arith.addf %4, %6 : vector<128x48xf32>
    %8 = vector.extract_strided_slice %7 {offsets = [0, 0], sizes = [128, 16], strides = [1, 1]} : vector<128x48xf32> to vector<128x16xf32>
    %9 = vector.shape_cast %8 : vector<128x16xf32> to vector<8x16x16xf32>
    %10 = vector.extract_strided_slice %7 {offsets = [0, 16], sizes = [128, 16], strides = [1, 1]} : vector<128x48xf32> to vector<128x16xf32>
    %11 = vector.shape_cast %10 : vector<128x16xf32> to vector<8x16x16xf32>
    %12 = vector.extract_strided_slice %7 {offsets = [0, 32], sizes = [128, 16], strides = [1, 1]} : vector<128x48xf32> to vector<128x16xf32>
    %13 = vector.shape_cast %12 : vector<128x16xf32> to vector<8x16x16xf32>
    %14 = vector.extract_strided_slice %9 {offsets = [0, 0, 0], sizes = [8, 16, 8], strides = [1, 1, 1]} : vector<8x16x16xf32> to vector<8x16x8xf32>
    %15 = vector.extract_strided_slice %11 {offsets = [0, 0, 0], sizes = [8, 16, 8], strides = [1, 1, 1]} : vector<8x16x16xf32> to vector<8x16x8xf32>
    "tpu.trace_start"() <{level = 10 : i32, message = "nfd,ngd->nfg"}> : () -> ()
    %cst_7 = arith.constant dense<0.000000e+00> : vector<8x16x16xf32>
    %16 = tpu.matmul %14, %15, %cst_7 {dimension_numbers = #tpu.dot_dimension_numbers<[2], [2], [1], [1], [0, 0, 0, 1, 1, 1], [0], [0]>} : vector<8x16x8xf32>, vector<8x16x8xf32>, vector<8x16x16xf32> -> vector<8x16x16xf32>
    "tpu.trace_stop"() : () -> ()
    %cst_8 = arith.constant dense<0xFF800000> : vector<8x16xf32>
    %17 = vector.multi_reduction <maximumf>, %16, %cst_8 [2] : vector<8x16x16xf32> to vector<8x16xf32>
    %18 = vector.shape_cast %17 : vector<8x16xf32> to vector<8x16x1xf32>
    %19 = vector.broadcast %18 : vector<8x16x1xf32> to vector<8x16x16xf32>
    %20 = arith.subf %16, %19 : vector<8x16x16xf32>
    %21 = math.exp %20 : vector<8x16x16xf32>
    %cst_9 = arith.constant dense<0.000000e+00> : vector<8x16xf32>
    %22 = vector.multi_reduction <add>, %21, %cst_9 [2] : vector<8x16x16xf32> to vector<8x16xf32>
    %23 = vector.shape_cast %22 : vector<8x16xf32> to vector<8x16x1xf32>
    %24 = vector.broadcast %23 : vector<8x16x1xf32> to vector<8x16x16xf32>
    %25 = arith.divf %21, %24 : vector<8x16x16xf32>
    %26 = vector.extract_strided_slice %13 {offsets = [0, 0, 0], sizes = [8, 16, 8], strides = [1, 1, 1]} : vector<8x16x16xf32> to vector<8x16x8xf32>
    "tpu.trace_start"() <{level = 10 : i32, message = "nfg,ngd->nfd"}> : () -> ()
    %cst_10 = arith.constant dense<0.000000e+00> : vector<8x16x8xf32>
    %27 = tpu.matmul %25, %26, %cst_10 {dimension_numbers = #tpu.dot_dimension_numbers<[2], [1], [1], [2], [0, 0, 0, 1, 1, 2], [0], [0]>} : vector<8x16x16xf32>, vector<8x16x8xf32>, vector<8x16x8xf32> -> vector<8x16x8xf32>
    "tpu.trace_stop"() : () -> ()
    %28 = vector.extract_strided_slice %9 {offsets = [0, 0, 8], sizes = [8, 16, 8], strides = [1, 1, 1]} : vector<8x16x16xf32> to vector<8x16x8xf32>
    %29 = vector.extract_strided_slice %11 {offsets = [0, 0, 8], sizes = [8, 16, 8], strides = [1, 1, 1]} : vector<8x16x16xf32> to vector<8x16x8xf32>
    "tpu.trace_start"() <{level = 10 : i32, message = "nfd,ngd->nfg"}> : () -> ()
    %cst_11 = arith.constant dense<0.000000e+00> : vector<8x16x16xf32>
    %30 = tpu.matmul %28, %29, %cst_11 {dimension_numbers = #tpu.dot_dimension_numbers<[2], [2], [1], [1], [0, 0, 0, 1, 1, 1], [0], [0]>} : vector<8x16x8xf32>, vector<8x16x8xf32>, vector<8x16x16xf32> -> vector<8x16x16xf32>
    "tpu.trace_stop"() : () -> ()
    %cst_12 = arith.constant dense<0xFF800000> : vector<8x16xf32>
    %31 = vector.multi_reduction <maximumf>, %30, %cst_12 [2] : vector<8x16x16xf32> to vector<8x16xf32>
    %32 = vector.shape_cast %31 : vector<8x16xf32> to vector<8x16x1xf32>
    %33 = vector.broadcast %32 : vector<8x16x1xf32> to vector<8x16x16xf32>
    %34 = arith.subf %30, %33 : vector<8x16x16xf32>
    %35 = math.exp %34 : vector<8x16x16xf32>
    %cst_13 = arith.constant dense<0.000000e+00> : vector<8x16xf32>
    %36 = vector.multi_reduction <add>, %35, %cst_13 [2] : vector<8x16x16xf32> to vector<8x16xf32>
    %37 = vector.shape_cast %36 : vector<8x16xf32> to vector<8x16x1xf32>
    %38 = vector.broadcast %37 : vector<8x16x1xf32> to vector<8x16x16xf32>
    %39 = arith.divf %35, %38 : vector<8x16x16xf32>
    %40 = vector.extract_strided_slice %13 {offsets = [0, 0, 8], sizes = [8, 16, 8], strides = [1, 1, 1]} : vector<8x16x16xf32> to vector<8x16x8xf32>
    "tpu.trace_start"() <{level = 10 : i32, message = "nfg,ngd->nfd"}> : () -> ()
    %cst_14 = arith.constant dense<0.000000e+00> : vector<8x16x8xf32>
    %41 = tpu.matmul %39, %40, %cst_14 {dimension_numbers = #tpu.dot_dimension_numbers<[2], [1], [1], [2], [0, 0, 0, 1, 1, 2], [0], [0]>} : vector<8x16x16xf32>, vector<8x16x8xf32>, vector<8x16x8xf32> -> vector<8x16x8xf32>
    "tpu.trace_stop"() : () -> ()
    %42 = tpu.concatenate %27, %41 in 2 : vector<8x16x8xf32>, vector<8x16x8xf32> -> vector<8x16x16xf32>
    %43 = vector.shape_cast %42 : vector<8x16x16xf32> to vector<128x16xf32>
    %c0_15 = arith.constant 0 : index
    %c0_16 = arith.constant 0 : index
    %44 = vector.load %arg3[%c0_15, %c0_16] : memref<16x16xf32, #tpu.memory_space<vmem>>, vector<16x16xf32>
    %cst_17 = arith.constant dense<0.000000e+00> : vector<128x16xf32>
    %45 = tpu.matmul %43, %44, %cst_17 {dimension_numbers = #tpu.dot_dimension_numbers<[1], [0], [0], [1], [0, 0, 1, 1], [], []>} : vector<128x16xf32>, vector<16x16xf32>, vector<128x16xf32> -> vector<128x16xf32>
    %c0_18 = arith.constant 0 : index
    %c0_19 = arith.constant 0 : index
    %46 = vector.load %arg4[%c0_18, %c0_19] : memref<1x16xf32, #tpu.memory_space<vmem>>, vector<1x16xf32>
    %47 = vector.broadcast %46 : vector<1x16xf32> to vector<128x16xf32>
    %48 = arith.addf %45, %47 : vector<128x16xf32>
    %49 = arith.addf %48, %2 : vector<128x16xf32>
    %50 = vector.shape_cast %49 : vector<128x16xf32> to vector<2x4x16x16xf32>
    %cst_20 = arith.constant dense<0.000000e+00> : vector<2x4x16xf32>
    %51 = vector.multi_reduction <add>, %50, %cst_20 [3] : vector<2x4x16x16xf32> to vector<2x4x16xf32>
    %52 = vector.shape_cast %51 : vector<2x4x16xf32> to vector<2x4x16x1xf32>
    %cst_21 = arith.constant dense<0.000000e+00> : vector<2x4x1xf32>
    %53 = vector.multi_reduction <add>, %52, %cst_21 [2] : vector<2x4x16x1xf32> to vector<2x4x1xf32>
    %54 = vector.shape_cast %53 : vector<2x4x1xf32> to vector<2x4x1x1xf32>
    %cst_22 = arith.constant dense<0.000000e+00> : vector<4x1x1xf32>
    %55 = vector.multi_reduction <add>, %54, %cst_22 [0] : vector<2x4x1x1xf32> to vector<4x1x1xf32>
    %56 = vector.shape_cast %55 : vector<4x1x1xf32> to vector<1x4x1x1xf32>
    %cst_23 = arith.constant 0.001953125 : f32
    %57 = vector.broadcast %cst_23 : f32 to vector<1x4x1x1xf32>
    %58 = arith.mulf %56, %57 : vector<1x4x1x1xf32>
    %59 = vector.broadcast %58 : vector<1x4x1x1xf32> to vector<2x4x16x16xf32>
    %60 = arith.subf %50, %59 : vector<2x4x16x16xf32>
    %61 = arith.mulf %60, %60 : vector<2x4x16x16xf32>
    %cst_24 = arith.constant dense<0.000000e+00> : vector<2x4x16xf32>
    %62 = vector.multi_reduction <add>, %61, %cst_24 [3] : vector<2x4x16x16xf32> to vector<2x4x16xf32>
    %63 = vector.shape_cast %62 : vector<2x4x16xf32> to vector<2x4x16x1xf32>
    %cst_25 = arith.constant dense<0.000000e+00> : vector<2x4x1xf32>
    %64 = vector.multi_reduction <add>, %63, %cst_25 [2] : vector<2x4x16x1xf32> to vector<2x4x1xf32>
    %65 = vector.shape_cast %64 : vector<2x4x1xf32> to vector<2x4x1x1xf32>
    %cst_26 = arith.constant dense<0.000000e+00> : vector<4x1x1xf32>
    %66 = vector.multi_reduction <add>, %65, %cst_26 [0] : vector<2x4x1x1xf32> to vector<4x1x1xf32>
    %67 = vector.shape_cast %66 : vector<4x1x1xf32> to vector<1x4x1x1xf32>
    %cst_27 = arith.constant 0.001953125 : f32
    %68 = vector.broadcast %cst_27 : f32 to vector<1x4x1x1xf32>
    %69 = arith.mulf %67, %68 : vector<1x4x1x1xf32>
    %cst_28 = arith.constant 9.99999974E-6 : f32
    %70 = vector.broadcast %cst_28 : f32 to vector<1x4x1x1xf32>
    %71 = arith.addf %69, %70 : vector<1x4x1x1xf32>
    %72 = math.rsqrt %71 : vector<1x4x1x1xf32>
    %c0_29 = arith.constant 0 : index
    %c0_30 = arith.constant 0 : index
    %c0_31 = arith.constant 0 : index
    %c0_32 = arith.constant 0 : index
    %73 = vector.load %arg5[%c0_29, %c0_30, %c0_31, %c0_32] : memref<1x4x1x1xf32, #tpu.memory_space<vmem>>, vector<1x4x1x1xf32>
    %74 = arith.mulf %72, %73 : vector<1x4x1x1xf32>
    %c0_33 = arith.constant 0 : index
    %c0_34 = arith.constant 0 : index
    %c0_35 = arith.constant 0 : index
    %c0_36 = arith.constant 0 : index
    %75 = vector.load %arg6[%c0_33, %c0_34, %c0_35, %c0_36] : memref<1x4x1x1xf32, #tpu.memory_space<vmem>>, vector<1x4x1x1xf32>
    %76 = arith.mulf %58, %74 : vector<1x4x1x1xf32>
    %77 = arith.subf %75, %76 : vector<1x4x1x1xf32>
    %78 = vector.broadcast %74 : vector<1x4x1x1xf32> to vector<2x4x16x16xf32>
    %79 = arith.mulf %50, %78 : vector<2x4x16x16xf32>
    %80 = vector.broadcast %77 : vector<1x4x1x1xf32> to vector<2x4x16x16xf32>
    %81 = arith.addf %79, %80 : vector<2x4x16x16xf32>
    %82 = tpu.transpose %81, [0, 1, 3, 2] : vector<2x4x16x16xf32> -> vector<2x4x16x16xf32>
    %c0_37 = arith.constant 0 : index
    %c0_38 = arith.constant 0 : index
    %c0_39 = arith.constant 0 : index
    %c0_40 = arith.constant 0 : index
    %83 = vector.load %arg7[%c0_37, %c0_38, %c0_39, %c0_40] : memref<2x4x16x16xf32, #tpu.memory_space<vmem>>, vector<2x4x16x16xf32>
    tpu.vector_store %arg7[%c0_37, %c0_38, %c0_39, %c0_40], %82 {strides = array<i32>} : memref<2x4x16x16xf32, #tpu.memory_space<vmem>>, vector<2x4x16x16xf32>,
    return
  }
}

</mosaic_0001>

<llo_original>
// kernel: tpu_custom_call.1
$region0: #{tpu_custom_call.1}
  #allocation0 [shape = 'u32[]', space=smem, size = 0x4, offset = 0x4, fixed_abs, tag = 'smem constant byte address 0x4 - core index']
  #allocation1 [shape = 'u32[144,128]{1,0:T(1,128)}', space=vmem, size = 0x12000, scoped, tag = 'internal scratch']
  %s0 = inlined_call_operand.hbm [shape: f32[2,4,16,16], index: 0, kind: input, shape index: {}]
  %s1 = inlined_call_operand.hbm [shape: f32[16,48], index: 1, kind: input, shape index: {}]
  %s2 = inlined_call_operand.vmem [shape: f32[1,48], index: 2, kind: input, shape index: {}]
  %s3 = inlined_call_operand.vmem [shape: f32[16,16], index: 3, kind: input, shape index: {}]
  %s4 = inlined_call_operand.vmem [shape: f32[1,16], index: 4, kind: input, shape index: {}]
  %s5 = inlined_call_operand.vmem [shape: f32[1,4,1,1], index: 5, kind: input, shape index: {}]
  %s6 = inlined_call_operand.vmem [shape: f32[1,4,1,1], index: 6, kind: input, shape index: {}]
  %s7 = inlined_call_operand.hbm [shape: f32[2,4,16,16], index: 7, kind: output, shape index: {}]
  %s8 = sld [smem:[#allocation0]]
  $region46: #{tpu_custom_call.1} parent=0
    _
  %s10 = ssub.s32 1, %s8
  %s11 = scalar_select 0, %s10, %s8
  $region1: #{tpu_custom_call.1} parent=0
    #allocation2 [shape = 'u8[65536]{0}', space=vmem, size = 0x10000, scoped, tag = 'input window, operand 0, single buffered']
    #allocation3 [shape = 's32[1]{0}', space=sflag, size = 0x4, scoped, tag = 'scoped memory for tpu_custom_call.1']
    #allocation4 [shape = 's32[1]{0}', space=sflag, size = 0x4, scoped, tag = 'scoped memory for tpu_custom_call.1']
    #allocation5 [shape = 'u8[8192]{0}', space=vmem, size = 0x2000, scoped, tag = 'input window, operand 1, single buffered']
    #allocation6 [shape = 's32[1]{0}', space=sflag, size = 0x4, scoped, tag = 'scoped memory for tpu_custom_call.1']
    #allocation7 [shape = 'u8[65536]{0}', space=vmem, size = 0x10000, scoped, tag = 'output window, operand 0, single buffered']
    %12 = vsyncpa [#allocation3], 0
    %13 = vsyncpa [#allocation6], 0
    %14 = vsyncpa [#allocation4], 0
    // Predicated region
    $region2: #{tpu_custom_call.1} parent=1 // pred_check
      _
    $region3: #{tpu_custom_call.1} parent=1 // pred_check_branch
      %16 = sbr.rel (0) target = $region5
    $region4: #{tpu_custom_call.1} parent=1 // pred_region
      %s18 = ssub.s32 2048, 2048
      %19 = vsyncadd [#allocation3], %s18
      %s20 = sshll.u32 [#allocation2], 4
      %s21 = int_to_ptr.vmem [resolvable:$true] %s20
      %26 = dma.hbm_to_vmem [thread:$0]  %s0, 2048, %s21, [#allocation3], 128, 128, 8
    $region5: #{tpu_custom_call.1} parent=1 // pred_fallthru
      _
    // Predicated region
    $region6: #{tpu_custom_call.1} parent=1 // pred_check
      _
    $region7: #{tpu_custom_call.1} parent=1 // pred_check_branch
      %28 = sbr.rel (0) target = $region9
    $region8: #{tpu_custom_call.1} parent=1 // pred_region
      %s30 = ssub.s32 256, 256
      %31 = vsyncadd [#allocation6], %s30
      %s32 = sshll.u32 [#allocation5], 4
      %s33 = int_to_ptr.vmem [resolvable:$true] %s32
      %38 = dma.hbm_to_vmem [thread:$0]  %s1, 256, %s33, [#allocation6], 128, 128, 8
    $region9: #{tpu_custom_call.1} parent=1 // pred_fallthru
      _
    // Predicated region
    $region10: #{tpu_custom_call.1} parent=1 // pred_check
      _
    $region11: #{tpu_custom_call.1} parent=1 // pred_check_branch
      %40 = sbr.rel (0) target = $region13
    $region12: #{tpu_custom_call.1} parent=1 // pred_region
      _
    $region13: #{tpu_custom_call.1} parent=1 // pred_fallthru
      _
    // Predicated region
    $region14: #{tpu_custom_call.1} parent=1 // pred_check
      _
    $region15: #{tpu_custom_call.1} parent=1 // pred_check_branch
      %42 = sbr.rel (0) target = $region17
    $region16: #{tpu_custom_call.1} parent=1 // pred_region
      _
    $region17: #{tpu_custom_call.1} parent=1 // pred_fallthru
      _
    // Predicated region
    $region18: #{tpu_custom_call.1} parent=1 // pred_check
      _
    $region19: #{tpu_custom_call.1} parent=1 // pred_check_branch
      %44 = sbr.rel (0) target = $region21
    $region20: #{tpu_custom_call.1} parent=1 // pred_region
      _
    $region21: #{tpu_custom_call.1} parent=1 // pred_fallthru
      _
    // Predicated region
    $region22: #{tpu_custom_call.1} parent=1 // pred_check
      _
    $region23: #{tpu_custom_call.1} parent=1 // pred_check_branch
      %46 = sbr.rel (0) target = $region25
    $region24: #{tpu_custom_call.1} parent=1 // pred_region
      _
    $region25: #{tpu_custom_call.1} parent=1 // pred_fallthru
      _
    // Predicated region
    $region26: #{tpu_custom_call.1} parent=1 // pred_check
      _
    $region27: #{tpu_custom_call.1} parent=1 // pred_check_branch
      %48 = sbr.rel (0) target = $region29
    $region28: #{tpu_custom_call.1} parent=1 // pred_region
      _
    $region29: #{tpu_custom_call.1} parent=1 // pred_fallthru
      _
    // Predicated region
    $region30: #{tpu_custom_call.1} parent=1 // pred_check
      _
    $region31: #{tpu_custom_call.1} parent=1 // pred_check_branch
      %50 = sbr.rel (0) target = $region33
    $region32: #{tpu_custom_call.1} parent=1 // pred_region
      %51 = dma.done [#allocation3], 2048
    $region33: #{tpu_custom_call.1} parent=1 // pred_fallthru
      _
    // Predicated region
    $region34: #{tpu_custom_call.1} parent=1 // pred_check
      _
    $region35: #{tpu_custom_call.1} parent=1 // pred_check_branch
      %53 = sbr.rel (0) target = $region37
    $region36: #{tpu_custom_call.1} parent=1 // pred_region
      %54 = dma.done [#allocation6], 256
    $region37: #{tpu_custom_call.1} parent=1 // pred_fallthru
      _
    %v55 = vld [vmem:[#allocation2] sm:$0xff]
    %v56 = vld [vmem:[#allocation2 + $0x8] sm:$0xff]
    %v57 = vld [vmem:[#allocation2 + $0x10] sm:$0xff]
    %v58 = vld [vmem:[#allocation2 + $0x18] sm:$0xff]
    %v59 = vld [vmem:[#allocation2 + $0x20] sm:$0xff]
    %v60 = vld [vmem:[#allocation2 + $0x28] sm:$0xff]
    %v61 = vld [vmem:[#allocation2 + $0x30] sm:$0xff]
    %v62 = vld [vmem:[#allocation2 + $0x38] sm:$0xff]
    %v63 = vld [vmem:[#allocation2 + $0x40] sm:$0xff]
    %v64 = vld [vmem:[#allocation2 + $0x48] sm:$0xff]
    %v65 = vld [vmem:[#allocation2 + $0x50] sm:$0xff]
    %v66 = vld [vmem:[#allocation2 + $0x58] sm:$0xff]
    %v67 = vld [vmem:[#allocation2 + $0x60] sm:$0xff]
    %v68 = vld [vmem:[#allocation2 + $0x68] sm:$0xff]
    %v69 = vld [vmem:[#allocation2 + $0x70] sm:$0xff]
    %v70 = vld [vmem:[#allocation2 + $0x78] sm:$0xff]
    %71 = vxpose.xlu0.b32.start [1/16] %v55, 128
    %72 = vxpose.xlu0.b32.cont [2/16] %v56, 128
    %73 = vxpose.xlu0.b32.cont [3/16] 0.0, 128
    %74 = vxpose.xlu0.b32.cont [4/16] 0.0, 128
    %75 = vxpose.xlu0.b32.cont [5/16] 0.0, 128
    %76 = vxpose.xlu0.b32.cont [6/16] 0.0, 128
    %77 = vxpose.xlu0.b32.cont [7/16] 0.0, 128
    %78 = vxpose.xlu0.b32.cont [8/16] 0.0, 128
    %79 = vxpose.xlu0.b32.cont [9/16] 0.0, 128
    %80 = vxpose.xlu0.b32.cont [10/16] 0.0, 128
    %81 = vxpose.xlu0.b32.cont [11/16] 0.0, 128
    %82 = vxpose.xlu0.b32.cont [12/16] 0.0, 128
    %83 = vxpose.xlu0.b32.cont [13/16] 0.0, 128
    %84 = vxpose.xlu0.b32.cont [14/16] 0.0, 128
    %85 = vxpose.xlu0.b32.cont [15/16] 0.0, 128
    %86 = vxpose.xlu0.b32.end [16/16] 0.0, 128
    %v87 = vpop.trf.xlu0
    %v88 = vpop.trf.xlu0
    %v89 = vpop.trf.xlu0
    %v90 = vpop.trf.xlu0
    %v91 = vpop.trf.xlu0
    %v92 = vpop.trf.xlu0
    %v93 = vpop.trf.xlu0
    %v94 = vpop.trf.xlu0
    %v95 = vpop.trf.xlu0
    %v96 = vpop.trf.xlu0
    %v97 = vpop.trf.xlu0
    %v98 = vpop.trf.xlu0
    %v99 = vpop.trf.xlu0
    %v100 = vpop.trf.xlu0
    %v101 = vpop.trf.xlu0
    %v102 = vpop.trf.xlu0
    %103 = vxpose.xlu0.b32.start [1/16] %v57, 128
    %104 = vxpose.xlu0.b32.cont [2/16] %v58, 128
    %105 = vxpose.xlu0.b32.cont [3/16] 0.0, 128
    %106 = vxpose.xlu0.b32.cont [4/16] 0.0, 128
    %107 = vxpose.xlu0.b32.cont [5/16] 0.0, 128
    %108 = vxpose.xlu0.b32.cont [6/16] 0.0, 128
    %109 = vxpose.xlu0.b32.cont [7/16] 0.0, 128
    %110 = vxpose.xlu0.b32.cont [8/16] 0.0, 128
    %111 = vxpose.xlu0.b32.cont [9/16] 0.0, 128
    %112 = vxpose.xlu0.b32.cont [10/16] 0.0, 128
    %113 = vxpose.xlu0.b32.cont [11/16] 0.0, 128
    %114 = vxpose.xlu0.b32.cont [12/16] 0.0, 128
    %115 = vxpose.xlu0.b32.cont [13/16] 0.0, 128
    %116 = vxpose.xlu0.b32.cont [14/16] 0.0, 128
    %117 = vxpose.xlu0.b32.cont [15/16] 0.0, 128
    %118 = vxpose.xlu0.b32.end [16/16] 0.0, 128
    %v119 = vpop.trf.xlu0
    %v120 = vpop.trf.xlu0
    %v121 = vpop.trf.xlu0
    %v122 = vpop.trf.xlu0
    %v123 = vpop.trf.xlu0
    %v124 = vpop.trf.xlu0
    %v125 = vpop.trf.xlu0
    %v126 = vpop.trf.xlu0
    %v127 = vpop.trf.xlu0
    %v128 = vpop.trf.xlu0
    %v129 = vpop.trf.xlu0
    %v130 = vpop.trf.xlu0
    %v131 = vpop.trf.xlu0
    %v132 = vpop.trf.xlu0
    %v133 = vpop.trf.xlu0
    %v134 = vpop.trf.xlu0
    %135 = vxpose.xlu0.b32.start [1/16] %v59, 128
    %136 = vxpose.xlu0.b32.cont [2/16] %v60, 128
    %137 = vxpose.xlu0.b32.cont [3/16] 0.0, 128
    %138 = vxpose.xlu0.b32.cont [4/16] 0.0, 128
    %139 = vxpose.xlu0.b32.cont [5/16] 0.0, 128
    %140 = vxpose.xlu0.b32.cont [6/16] 0.0, 128
    %141 = vxpose.xlu0.b32.cont [7/16] 0.0, 128
    %142 = vxpose.xlu0.b32.cont [8/16] 0.0, 128
    %143 = vxpose.xlu0.b32.cont [9/16] 0.0, 128
    %144 = vxpose.xlu0.b32.cont [10/16] 0.0, 128
    %145 = vxpose.xlu0.b32.cont [11/16] 0.0, 128
    %146 = vxpose.xlu0.b32.cont [12/16] 0.0, 128
    %147 = vxpose.xlu0.b32.cont [13/16] 0.0, 128
    %148 = vxpose.xlu0.b32.cont [14/16] 0.0, 128
    %149 = vxpose.xlu0.b32.cont [15/16] 0.0, 128
    %150 = vxpose.xlu0.b32.end [16/16] 0.0, 128
    %v151 = vpop.trf.xlu0
    %v152 = vpop.trf.xlu0
    %v153 = vpop.trf.xlu0
    %v154 = vpop.trf.xlu0
    %v155 = vpop.trf.xlu0
    %v156 = vpop.trf.xlu0
    %v157 = vpop.trf.xlu0
    %v158 = vpop.trf.xlu0
    %v159 = vpop.trf.xlu0
    %v160 = vpop.trf.xlu0
    %v161 = vpop.trf.xlu0
    %v162 = vpop.trf.xlu0
    %v163 = vpop.trf.xlu0
    %v164 = vpop.trf.xlu0
    %v165 = vpop.trf.xlu0
    %v166 = vpop.trf.xlu0
    %167 = vxpose.xlu0.b32.start [1/16] %v61, 128
    %168 = vxpose.xlu0.b32.cont [2/16] %v62, 128
    %169 = vxpose.xlu0.b32.cont [3/16] 0.0, 128
    %170 = vxpose.xlu0.b32.cont [4/16] 0.0, 128
    %171 = vxpose.xlu0.b32.cont [5/16] 0.0, 128
    %172 = vxpose.xlu0.b32.cont [6/16] 0.0, 128
    %173 = vxpose.xlu0.b32.cont [7/16] 0.0, 128
    %174 = vxpose.xlu0.b32.cont [8/16] 0.0, 128
    %175 = vxpose.xlu0.b32.cont [9/16] 0.0, 128
    %176 = vxpose.xlu0.b32.cont [10/16] 0.0, 128
    %177 = vxpose.xlu0.b32.cont [11/16] 0.0, 128
    %178 = vxpose.xlu0.b32.cont [12/16] 0.0, 128
    %179 = vxpose.xlu0.b32.cont [13/16] 0.0, 128
    %180 = vxpose.xlu0.b32.cont [14/16] 0.0, 128
    %181 = vxpose.xlu0.b32.cont [15/16] 0.0, 128
    %182 = vxpose.xlu0.b32.end [16/16] 0.0, 128
    %v183 = vpop.trf.xlu0
    %v184 = vpop.trf.xlu0
    %v185 = vpop.trf.xlu0
    %v186 = vpop.trf.xlu0
    %v187 = vpop.trf.xlu0
    %v188 = vpop.trf.xlu0
    %v189 = vpop.trf.xlu0
    %v190 = vpop.trf.xlu0
    %v191 = vpop.trf.xlu0
    %v192 = vpop.trf.xlu0
    %v193 = vpop.trf.xlu0
    %v194 = vpop.trf.xlu0
    %v195 = vpop.trf.xlu0
    %v196 = vpop.trf.xlu0
    %v197 = vpop.trf.xlu0
    %v198 = vpop.trf.xlu0
    %199 = vxpose.xlu0.b32.start [1/16] %v63, 128
    %200 = vxpose.xlu0.b32.cont [2/16] %v64, 128
    %201 = vxpose.xlu0.b32.cont [3/16] 0.0, 128
    %202 = vxpose.xlu0.b32.cont [4/16] 0.0, 128
    %203 = vxpose.xlu0.b32.cont [5/16] 0.0, 128
    %204 = vxpose.xlu0.b32.cont [6/16] 0.0, 128
    %205 = vxpose.xlu0.b32.cont [7/16] 0.0, 128
    %206 = vxpose.xlu0.b32.cont [8/16] 0.0, 128
    %207 = vxpose.xlu0.b32.cont [9/16] 0.0, 128
    %208 = vxpose.xlu0.b32.cont [10/16] 0.0, 128
    %209 = vxpose.xlu0.b32.cont [11/16] 0.0, 128
    %210 = vxpose.xlu0.b32.cont [12/16] 0.0, 128
    %211 = vxpose.xlu0.b32.cont [13/16] 0.0, 128
    %212 = vxpose.xlu0.b32.cont [14/16] 0.0, 128
    %213 = vxpose.xlu0.b32.cont [15/16] 0.0, 128
    %214 = vxpose.xlu0.b32.end [16/16] 0.0, 128
    %v215 = vpop.trf.xlu0
    %v216 = vpop.trf.xlu0
    %v217 = vpop.trf.xlu0
    %v218 = vpop.trf.xlu0
    %v219 = vpop.trf.xlu0
    %v220 = vpop.trf.xlu0
    %v221 = vpop.trf.xlu0
    %v222 = vpop.trf.xlu0
    %v223 = vpop.trf.xlu0
    %v224 = vpop.trf.xlu0
    %v225 = vpop.trf.xlu0
    %v226 = vpop.trf.xlu0
    %v227 = vpop.trf.xlu0
    %v228 = vpop.trf.xlu0
    %v229 = vpop.trf.xlu0
    %v230 = vpop.trf.xlu0
    %231 = vxpose.xlu0.b32.start [1/16] %v65, 128
    %232 = vxpose.xlu0.b32.cont [2/16] %v66, 128
    %233 = vxpose.xlu0.b32.cont [3/16] 0.0, 128
    %234 = vxpose.xlu0.b32.cont [4/16] 0.0, 128
    %235 = vxpose.xlu0.b32.cont [5/16] 0.0, 128
    %236 = vxpose.xlu0.b32.cont [6/16] 0.0, 128
    %237 = vxpose.xlu0.b32.cont [7/16] 0.0, 128
    %238 = vxpose.xlu0.b32.cont [8/16] 0.0, 128
    %239 = vxpose.xlu0.b32.cont [9/16] 0.0, 128
    %240 = vxpose.xlu0.b32.cont [10/16] 0.0, 128
    %241 = vxpose.xlu0.b32.cont [11/16] 0.0, 128
    %242 = vxpose.xlu0.b32.cont [12/16] 0.0, 128
    %243 = vxpose.xlu0.b32.cont [13/16] 0.0, 128
    %244 = vxpose.xlu0.b32.cont [14/16] 0.0, 128
    %245 = vxpose.xlu0.b32.cont [15/16] 0.0, 128
    %246 = vxpose.xlu0.b32.end [16/16] 0.0, 128
    %v247 = vpop.trf.xlu0
    %v248 = vpop.trf.xlu0
    %v249 = vpop.trf.xlu0
    %v250 = vpop.trf.xlu0
    %v251 = vpop.trf.xlu0
    %v252 = vpop.trf.xlu0
    %v253 = vpop.trf.xlu0
    %v254 = vpop.trf.xlu0
    %v255 = vpop.trf.xlu0
    %v256 = vpop.trf.xlu0
    %v257 = vpop.trf.xlu0
    %v258 = vpop.trf.xlu0
    %v259 = vpop.trf.xlu0
    %v260 = vpop.trf.xlu0
    %v261 = vpop.trf.xlu0
    %v262 = vpop.trf.xlu0
    %263 = vxpose.xlu0.b32.start [1/16] %v67, 128
    %264 = vxpose.xlu0.b32.cont [2/16] %v68, 128
    %265 = vxpose.xlu0.b32.cont [3/16] 0.0, 128
    %266 = vxpose.xlu0.b32.cont [4/16] 0.0, 128
    %267 = vxpose.xlu0.b32.cont [5/16] 0.0, 128
    %268 = vxpose.xlu0.b32.cont [6/16] 0.0, 128
    %269 = vxpose.xlu0.b32.cont [7/16] 0.0, 128
    %270 = vxpose.xlu0.b32.cont [8/16] 0.0, 128
    %271 = vxpose.xlu0.b32.cont [9/16] 0.0, 128
    %272 = vxpose.xlu0.b32.cont [10/16] 0.0, 128
    %273 = vxpose.xlu0.b32.cont [11/16] 0.0, 128
    %274 = vxpose.xlu0.b32.cont [12/16] 0.0, 128
    %275 = vxpose.xlu0.b32.cont [13/16] 0.0, 128
    %276 = vxpose.xlu0.b32.cont [14/16] 0.0, 128
    %277 = vxpose.xlu0.b32.cont [15/16] 0.0, 128
    %278 = vxpose.xlu0.b32.end [16/16] 0.0, 128
    %v279 = vpop.trf.xlu0
    %v280 = vpop.trf.xlu0
    %v281 = vpop.trf.xlu0
    %v282 = vpop.trf.xlu0
    %v283 = vpop.trf.xlu0
    %v284 = vpop.trf.xlu0
    %v285 = vpop.trf.xlu0
    %v286 = vpop.trf.xlu0
    %v287 = vpop.trf.xlu0
    %v288 = vpop.trf.xlu0
    %v289 = vpop.trf.xlu0
    %v290 = vpop.trf.xlu0
    %v291 = vpop.trf.xlu0
    %v292 = vpop.trf.xlu0
    %v293 = vpop.trf.xlu0
    %v294 = vpop.trf.xlu0
    %295 = vxpose.xlu0.b32.start [1/16] %v69, 128
    %296 = vxpose.xlu0.b32.cont [2/16] %v70, 128
    %297 = vxpose.xlu0.b32.cont [3/16] 0.0, 128
    %298 = vxpose.xlu0.b32.cont [4/16] 0.0, 128
    %299 = vxpose.xlu0.b32.cont [5/16] 0.0, 128
    %300 = vxpose.xlu0.b32.cont [6/16] 0.0, 128
    %301 = vxpose.xlu0.b32.cont [7/16] 0.0, 128
    %302 = vxpose.xlu0.b32.cont [8/16] 0.0, 128
    %303 = vxpose.xlu0.b32.cont [9/16] 0.0, 128
    %304 = vxpose.xlu0.b32.cont [10/16] 0.0, 128
    %305 = vxpose.xlu0.b32.cont [11/16] 0.0, 128
    %306 = vxpose.xlu0.b32.cont [12/16] 0.0, 128
    %307 = vxpose.xlu0.b32.cont [13/16] 0.0, 128
    %308 = vxpose.xlu0.b32.cont [14/16] 0.0, 128
    %309 = vxpose.xlu0.b32.cont [15/16] 0.0, 128
    %310 = vxpose.xlu0.b32.end [16/16] 0.0, 128
    %v311 = vpop.trf.xlu0
    %v312 = vpop.trf.xlu0
    %v313 = vpop.trf.xlu0
    %v314 = vpop.trf.xlu0
    %v315 = vpop.trf.xlu0
    %v316 = vpop.trf.xlu0
    %v317 = vpop.trf.xlu0
    %v318 = vpop.trf.xlu0
    %v319 = vpop.trf.xlu0
    %v320 = vpop.trf.xlu0
    %v321 = vpop.trf.xlu0
    %v322 = vpop.trf.xlu0
    %v323 = vpop.trf.xlu0
    %v324 = vpop.trf.xlu0
    %v325 = vpop.trf.xlu0
    %v326 = vpop.trf.xlu0
    %v327 = vld [vmem:[#allocation5] sm:$0xff]
    %v328 = vld [vmem:[#allocation5 + $0x8] sm:$0xff]
    %v329 = vld [vmem:[%s2] sm:$0x1]
    %v331 = vlaneseq
    %v332 = vshrl.u32 %v331, 7
    %v333 = vsub.s32 0, %v332
    %v334 = vrot.slane %v329, %v333
    %vm336 = vcmask 130048
    %v338 = vsel %vm336, %v87, 0
    %v341 = vsel %vm336, %v88, 0
    %v344 = vsel %vm336, %v119, 0
    %v347 = vsel %vm336, %v120, 0
    %v350 = vsel %vm336, %v151, 0
    %v353 = vsel %vm336, %v152, 0
    %v356 = vsel %vm336, %v183, 0
    %v359 = vsel %vm336, %v184, 0
    %v362 = vsel %vm336, %v215, 0
    %v365 = vsel %vm336, %v216, 0
    %v368 = vsel %vm336, %v247, 0
    %v371 = vsel %vm336, %v248, 0
    %v374 = vsel %vm336, %v279, 0
    %v377 = vsel %vm336, %v280, 0
    %v380 = vsel %vm336, %v311, 0
    %v383 = vsel %vm336, %v312, 0
    %385 = vmatprep.subr.mxu0 0.0
    %386 = vmatpush1.msra.mxu0 %v327
    %387 = vmatprep.subr.mxu0 0.0
    %388 = vmatpush1.msra.mxu0 %v328
    %389 = vmatprep.subr.mxu0 0.0
    %390 = vmatpush1.msra.mxu0 0.0
    %391 = vmatprep.subr.mxu0 0.0
    %392 = vmatpush1.msra.mxu0 0.0
    %393 = vmatprep.subr.mxu0 0.0
    %394 = vmatpush1.msra.mxu0 0.0
    %395 = vmatprep.subr.mxu0 0.0
    %396 = vmatpush1.msra.mxu0 0.0
    %397 = vmatprep.subr.mxu0 0.0
    %398 = vmatpush1.msra.mxu0 0.0
    %399 = vmatprep.subr.mxu0 0.0
    %400 = vmatpush1.msra.mxu0 0.0
    %401 = vmatprep.subr.mxu0 0.0
    %402 = vmatpush1.msra.mxu0 0.0
    %403 = vmatprep.subr.mxu0 0.0
    %404 = vmatpush1.msra.mxu0 0.0
    %405 = vmatprep.subr.mxu0 0.0
    %406 = vmatpush1.msra.mxu0 0.0
    %407 = vmatprep.subr.mxu0 0.0
    %408 = vmatpush1.msra.mxu0 0.0
    %409 = vmatprep.subr.mxu0 0.0
    %410 = vmatpush1.msra.mxu0 0.0
    %411 = vmatprep.subr.mxu0 0.0
    %412 = vmatpush1.msra.mxu0 0.0
    %413 = vmatprep.subr.mxu0 0.0
    %414 = vmatpush1.msra.mxu0 0.0
    %415 = vmatprep.subr.mxu0 0.0
    %416 = vmatpush1.msra.mxu0 0.0
    %417 = vmatprep.subr.mxu0 0.0
    %418 = vmatpush1.msra.mxu0 0.0
    %419 = vmatprep.subr.mxu0 0.0
    %420 = vmatpush1.msra.mxu0 0.0
    %421 = vmatprep.subr.mxu0 0.0
    %422 = vmatpush1.msra.mxu0 0.0
    %423 = vmatprep.subr.mxu0 0.0
    %424 = vmatpush1.msra.mxu0 0.0
    %425 = vmatprep.subr.mxu0 0.0
    %426 = vmatpush1.msra.mxu0 0.0
    %427 = vmatprep.subr.mxu0 0.0
    %428 = vmatpush1.msra.mxu0 0.0
    %429 = vmatprep.subr.mxu0 0.0
    %430 = vmatpush1.msra.mxu0 0.0
    %431 = vmatprep.subr.mxu0 0.0
    %432 = vmatpush1.msra.mxu0 0.0
    %433 = vmatprep.subr.mxu0 0.0
    %434 = vmatpush1.msra.mxu0 0.0
    %435 = vmatprep.subr.mxu0 0.0
    %436 = vmatpush1.msra.mxu0 0.0
    %437 = vmatprep.subr.mxu0 0.0
    %438 = vmatpush1.msra.mxu0 0.0
    %439 = vmatprep.subr.mxu0 0.0
    %440 = vmatpush1.msra.mxu0 0.0
    %441 = vmatprep.subr.mxu0 0.0
    %442 = vmatpush1.msra.mxu0 0.0
    %443 = vmatprep.subr.mxu0 0.0
    %444 = vmatpush1.msra.mxu0 0.0
    %445 = vmatprep.subr.mxu0 0.0
    %446 = vmatpush1.msra.mxu0 0.0
    %447 = vmatprep.subr.mxu0 0.0
    %448 = vmatpush1.msra.mxu0 0.0
    %449 = vmatprep.mubr.f32.mxu0 0.0
    %450 = vmatmul.mubr.f32.gmra.mrb[0].mxu0 %v338
    %v451 = vpop.f32.mrb[0].mxu0
    %v452 = vadd.f32 %v334, %v451
    %v453 = vpop.f32.mrb[0].mxu0
    %454 = vmatprep.mubr.f32.mxu0 0.0
    %455 = vmatmul.mubr.f32.gmra.mrb[0].mxu0 %v341
    %v456 = vpop.f32.mrb[0].mxu0
    %v457 = vadd.f32 %v334, %v456
    %v458 = vpop.f32.mrb[0].mxu0
    %459 = vmatprep.mubr.f32.mxu0 0.0
    %460 = vmatmul.mubr.f32.gmra.mrb[0].mxu0 %v344
    %v461 = vpop.f32.mrb[0].mxu0
    %v462 = vadd.f32 %v334, %v461
    %v463 = vpop.f32.mrb[0].mxu0
    %464 = vmatprep.mubr.f32.mxu0 0.0
    %465 = vmatmul.mubr.f32.gmra.mrb[0].mxu0 %v347
    %v466 = vpop.f32.mrb[0].mxu0
    %v467 = vadd.f32 %v334, %v466
    %v468 = vpop.f32.mrb[0].mxu0
    %469 = vmatprep.mubr.f32.mxu0 0.0
    %470 = vmatmul.mubr.f32.gmra.mrb[0].mxu0 %v350
    %v471 = vpop.f32.mrb[0].mxu0
    %v472 = vadd.f32 %v334, %v471
    %v473 = vpop.f32.mrb[0].mxu0
    %474 = vmatprep.mubr.f32.mxu0 0.0
    %475 = vmatmul.mubr.f32.gmra.mrb[0].mxu0 %v353
    %v476 = vpop.f32.mrb[0].mxu0
    %v477 = vadd.f32 %v334, %v476
    %v478 = vpop.f32.mrb[0].mxu0
    %479 = vmatprep.mubr.f32.mxu0 0.0
    %480 = vmatmul.mubr.f32.gmra.mrb[0].mxu0 %v356
    %v481 = vpop.f32.mrb[0].mxu0
    %v482 = vadd.f32 %v334, %v481
    %v483 = vpop.f32.mrb[0].mxu0
    %484 = vmatprep.mubr.f32.mxu0 0.0
    %485 = vmatmul.mubr.f32.gmra.mrb[0].mxu0 %v359
    %v486 = vpop.f32.mrb[0].mxu0
    %v487 = vadd.f32 %v334, %v486
    %v488 = vpop.f32.mrb[0].mxu0
    %489 = vmatprep.mubr.f32.mxu0 0.0
    %490 = vmatmul.mubr.f32.gmra.mrb[0].mxu0 %v362
    %v491 = vpop.f32.mrb[0].mxu0
    %v492 = vadd.f32 %v334, %v491
    %v493 = vpop.f32.mrb[0].mxu0
    %494 = vmatprep.mubr.f32.mxu0 0.0
    %495 = vmatmul.mubr.f32.gmra.mrb[0].mxu0 %v365
    %v496 = vpop.f32.mrb[0].mxu0
    %v497 = vadd.f32 %v334, %v496
    %v498 = vpop.f32.mrb[0].mxu0
    %499 = vmatprep.mubr.f32.mxu0 0.0
    %500 = vmatmul.mubr.f32.gmra.mrb[0].mxu0 %v368
    %v501 = vpop.f32.mrb[0].mxu0
    %v502 = vadd.f32 %v334, %v501
    %v503 = vpop.f32.mrb[0].mxu0
    %504 = vmatprep.mubr.f32.mxu0 0.0
    %505 = vmatmul.mubr.f32.gmra.mrb[0].mxu0 %v371
    %v506 = vpop.f32.mrb[0].mxu0
    %v507 = vadd.f32 %v334, %v506
    %v508 = vpop.f32.mrb[0].mxu0
    %509 = vmatprep.mubr.f32.mxu0 0.0
    %510 = vmatmul.mubr.f32.gmra.mrb[0].mxu0 %v374
    %v511 = vpop.f32.mrb[0].mxu0
    %v512 = vadd.f32 %v334, %v511
    %v513 = vpop.f32.mrb[0].mxu0
    %514 = vmatprep.mubr.f32.mxu0 0.0
    %515 = vmatmul.mubr.f32.gmra.mrb[0].mxu0 %v377
    %v516 = vpop.f32.mrb[0].mxu0
    %v517 = vadd.f32 %v334, %v516
    %v518 = vpop.f32.mrb[0].mxu0
    %519 = vmatprep.mubr.f32.mxu0 0.0
    %520 = vmatmul.mubr.f32.gmra.mrb[0].mxu0 %v380
    %v521 = vpop.f32.mrb[0].mxu0
    %v522 = vadd.f32 %v334, %v521
    %v523 = vpop.f32.mrb[0].mxu0
    %524 = vmatprep.mubr.f32.mxu0 0.0
    %525 = vmatmul.mubr.f32.gmra.mrb[0].mxu0 %v383
    %v526 = vpop.f32.mrb[0].mxu0
    %v527 = vadd.f32 %v334, %v526
    %v528 = vpop.f32.mrb[0].mxu0
    %529 = vdwg.mxu0
    %532 = vrot.lane.b32.xlu0 %v452, 112
    %v533 = vpop.permute.xlu0 %532
    %534 = vrot.lane.b32.xlu0 %v457, 112
    %v535 = vpop.permute.xlu0 %534
    %vm536 = vcmask 64512
    %v537 = vsel %vm536, %v452, 0
    %v539 = vsel %vm536, %v457, 0
    %v541 = vsel %vm536, %v533, 0
    %v543 = vsel %vm536, %v535, 0
    %545 = vmatprep.subr.mxu0 0.0
    %546 = vmatpush1.xpose.msra.mxu0 %v541
    %547 = vmatprep.subr.mxu0 0.0
    %548 = vmatpush1.xpose.msra.mxu0 %v543
    %549 = vmatprep.subr.mxu0 0.0
    %550 = vmatpush1.xpose.msra.mxu0 0.0
    %551 = vmatprep.subr.mxu0 0.0
    %552 = vmatpush1.xpose.msra.mxu0 0.0
    %553 = vmatprep.subr.mxu0 0.0
    %554 = vmatpush1.xpose.msra.mxu0 0.0
    %555 = vmatprep.subr.mxu0 0.0
    %556 = vmatpush1.xpose.msra.mxu0 0.0
    %557 = vmatprep.subr.mxu0 0.0
    %558 = vmatpush1.xpose.msra.mxu0 0.0
    %559 = vmatprep.subr.mxu0 0.0
    %560 = vmatpush1.xpose.msra.mxu0 0.0
    %561 = vmatprep.subr.mxu0 0.0
    %562 = vmatpush1.xpose.msra.mxu0 0.0
    %563 = vmatprep.subr.mxu0 0.0
    %564 = vmatpush1.xpose.msra.mxu0 0.0
    %565 = vmatprep.subr.mxu0 0.0
    %566 = vmatpush1.xpose.msra.mxu0 0.0
    %567 = vmatprep.subr.mxu0 0.0
    %568 = vmatpush1.xpose.msra.mxu0 0.0
    %569 = vmatprep.subr.mxu0 0.0
    %570 = vmatpush1.xpose.msra.mxu0 0.0
    %571 = vmatprep.subr.mxu0 0.0
    %572 = vmatpush1.xpose.msra.mxu0 0.0
    %573 = vmatprep.subr.mxu0 0.0
    %574 = vmatpush1.xpose.msra.mxu0 0.0
    %575 = vmatprep.subr.mxu0 0.0
    %576 = vmatpush1.xpose.msra.mxu0 0.0
    %577 = vmatprep.subr.mxu0 0.0
    %578 = vmatpush1.xpose.msra.mxu0 0.0
    %579 = vmatprep.subr.mxu0 0.0
    %580 = vmatpush1.xpose.msra.mxu0 0.0
    %581 = vmatprep.subr.mxu0 0.0
    %582 = vmatpush1.xpose.msra.mxu0 0.0
    %583 = vmatprep.subr.mxu0 0.0
    %584 = vmatpush1.xpose.msra.mxu0 0.0
    %585 = vmatprep.subr.mxu0 0.0
    %586 = vmatpush1.xpose.msra.mxu0 0.0
    %587 = vmatprep.subr.mxu0 0.0
    %588 = vmatpush1.xpose.msra.mxu0 0.0
    %589 = vmatprep.subr.mxu0 0.0
    %590 = vmatpush1.xpose.msra.mxu0 0.0
    %591 = vmatprep.subr.mxu0 0.0
    %592 = vmatpush1.xpose.msra.mxu0 0.0
    %593 = vmatprep.subr.mxu0 0.0
    %594 = vmatpush1.xpose.msra.mxu0 0.0
    %595 = vmatprep.subr.mxu0 0.0
    %596 = vmatpush1.xpose.msra.mxu0 0.0
    %597 = vmatprep.subr.mxu0 0.0
    %598 = vmatpush1.xpose.msra.mxu0 0.0
    %599 = vmatprep.subr.mxu0 0.0
    %600 = vmatpush1.xpose.msra.mxu0 0.0
    %601 = vmatprep.subr.mxu0 0.0
    %602 = vmatpush1.xpose.msra.mxu0 0.0
    %603 = vmatprep.subr.mxu0 0.0
    %604 = vmatpush1.xpose.msra.mxu0 0.0
    %605 = vmatprep.subr.mxu0 0.0
    %606 = vmatpush1.xpose.msra.mxu0 0.0
    %607 = vmatprep.subr.mxu0 0.0
    %608 = vmatpush1.xpose.msra.mxu0 0.0
    %609 = vmatprep.mubr.f32.mxu0 0.0
    %610 = vmatmul.mubr.f32.gmra.mrb[0].mxu0 %v537
    %v611 = vpop.f32.mrb[0].mxu0
    %v612 = vadd.f32 0.0, %v611
    %v613 = vpop.f32.mrb[0].mxu0
    %614 = vmatprep.mubr.f32.mxu0 0.0
    %615 = vmatmul.mubr.f32.gmra.mrb[0].mxu0 %v539
    %v616 = vpop.f32.mrb[0].mxu0
    %v617 = vadd.f32 0.0, %v616
    %v618 = vpop.f32.mrb[0].mxu0
    %619 = vdwg.mxu0
    %622 = vrot.lane.b32.xlu0 %v462, 112
    %v623 = vpop.permute.xlu0 %622
    %624 = vrot.lane.b32.xlu0 %v467, 112
    %v625 = vpop.permute.xlu0 %624
    %v626 = vsel %vm536, %v462, 0
    %v628 = vsel %vm536, %v467, 0
    %v630 = vsel %vm536, %v623, 0
    %v632 = vsel %vm536, %v625, 0
    %634 = vmatprep.subr.mxu0 0.0
    %635 = vmatpush1.xpose.msra.mxu0 %v630
    %636 = vmatprep.subr.mxu0 0.0
    %637 = vmatpush1.xpose.msra.mxu0 %v632
    %638 = vmatprep.subr.mxu0 0.0
    %639 = vmatpush1.xpose.msra.mxu0 0.0
    %640 = vmatprep.subr.mxu0 0.0
    %641 = vmatpush1.xpose.msra.mxu0 0.0
    %642 = vmatprep.subr.mxu0 0.0
    %643 = vmatpush1.xpose.msra.mxu0 0.0
    %644 = vmatprep.subr.mxu0 0.0
    %645 = vmatpush1.xpose.msra.mxu0 0.0
    %646 = vmatprep.subr.mxu0 0.0
    %647 = vmatpush1.xpose.msra.mxu0 0.0
    %648 = vmatprep.subr.mxu0 0.0
    %649 = vmatpush1.xpose.msra.mxu0 0.0
    %650 = vmatprep.subr.mxu0 0.0
    %651 = vmatpush1.xpose.msra.mxu0 0.0
    %652 = vmatprep.subr.mxu0 0.0
    %653 = vmatpush1.xpose.msra.mxu0 0.0
    %654 = vmatprep.subr.mxu0 0.0
    %655 = vmatpush1.xpose.msra.mxu0 0.0
    %656 = vmatprep.subr.mxu0 0.0
    %657 = vmatpush1.xpose.msra.mxu0 0.0
    %658 = vmatprep.subr.mxu0 0.0
    %659 = vmatpush1.xpose.msra.mxu0 0.0
    %660 = vmatprep.subr.mxu0 0.0
    %661 = vmatpush1.xpose.msra.mxu0 0.0
    %662 = vmatprep.subr.mxu0 0.0
    %663 = vmatpush1.xpose.msra.mxu0 0.0
    %664 = vmatprep.subr.mxu0 0.0
    %665 = vmatpush1.xpose.msra.mxu0 0.0
    %666 = vmatprep.subr.mxu0 0.0
    %667 = vmatpush1.xpose.msra.mxu0 0.0
    %668 = vmatprep.subr.mxu0 0.0
    %669 = vmatpush1.xpose.msra.mxu0 0.0
    %670 = vmatprep.subr.mxu0 0.0
    %671 = vmatpush1.xpose.msra.mxu0 0.0
    %672 = vmatprep.subr.mxu0 0.0
    %673 = vmatpush1.xpose.msra.mxu0 0.0
    %674 = vmatprep.subr.mxu0 0.0
    %675 = vmatpush1.xpose.msra.mxu0 0.0
    %676 = vmatprep.subr.mxu0 0.0
    %677 = vmatpush1.xpose.msra.mxu0 0.0
    %678 = vmatprep.subr.mxu0 0.0
    %679 = vmatpush1.xpose.msra.mxu0 0.0
    %680 = vmatprep.subr.mxu0 0.0
    %681 = vmatpush1.xpose.msra.mxu0 0.0
    %682 = vmatprep.subr.mxu0 0.0
    %683 = vmatpush1.xpose.msra.mxu0 0.0
    %684 = vmatprep.subr.mxu0 0.0
    %685 = vmatpush1.xpose.msra.mxu0 0.0
    %686 = vmatprep.subr.mxu0 0.0
    %687 = vmatpush1.xpose.msra.mxu0 0.0
    %688 = vmatprep.subr.mxu0 0.0
    %689 = vmatpush1.xpose.msra.mxu0 0.0
    %690 = vmatprep.subr.mxu0 0.0
    %691 = vmatpush1.xpose.msra.mxu0 0.0
    %692 = vmatprep.subr.mxu0 0.0
    %693 = vmatpush1.xpose.msra.mxu0 0.0
    %694 = vmatprep.subr.mxu0 0.0
    %695 = vmatpush1.xpose.msra.mxu0 0.0
    %696 = vmatprep.subr.mxu0 0.0
    %697 = vmatpush1.xpose.msra.mxu0 0.0
    %698 = vmatprep.mubr.f32.mxu0 0.0
    %699 = vmatmul.mubr.f32.gmra.mrb[0].mxu0 %v626
    %v700 = vpop.f32.mrb[0].mxu0
    %v701 = vadd.f32 0.0, %v700
    %v702 = vpop.f32.mrb[0].mxu0
    %703 = vmatprep.mubr.f32.mxu0 0.0
    %704 = vmatmul.mubr.f32.gmra.mrb[0].mxu0 %v628
    %v705 = vpop.f32.mrb[0].mxu0
    %v706 = vadd.f32 0.0, %v705
    %v707 = vpop.f32.mrb[0].mxu0
    %708 = vdwg.mxu0
    %711 = vrot.lane.b32.xlu0 %v472, 112
    %v712 = vpop.permute.xlu0 %711
    %713 = vrot.lane.b32.xlu0 %v477, 112
    %v714 = vpop.permute.xlu0 %713
    %v715 = vsel %vm536, %v472, 0
    %v717 = vsel %vm536, %v477, 0
    %v719 = vsel %vm536, %v712, 0
    %v721 = vsel %vm536, %v714, 0
    %723 = vmatprep.subr.mxu0 0.0
    %724 = vmatpush1.xpose.msra.mxu0 %v719
    %725 = vmatprep.subr.mxu0 0.0
    %726 = vmatpush1.xpose.msra.mxu0 %v721
    %727 = vmatprep.subr.mxu0 0.0
    %728 = vmatpush1.xpose.msra.mxu0 0.0
    %729 = vmatprep.subr.mxu0 0.0
    %730 = vmatpush1.xpose.msra.mxu0 0.0
    %731 = vmatprep.subr.mxu0 0.0
    %732 = vmatpush1.xpose.msra.mxu0 0.0
    %733 = vmatprep.subr.mxu0 0.0
    %734 = vmatpush1.xpose.msra.mxu0 0.0
    %735 = vmatprep.subr.mxu0 0.0
    %736 = vmatpush1.xpose.msra.mxu0 0.0
    %737 = vmatprep.subr.mxu0 0.0
    %738 = vmatpush1.xpose.msra.mxu0 0.0
    %739 = vmatprep.subr.mxu0 0.0
    %740 = vmatpush1.xpose.msra.mxu0 0.0
    %741 = vmatprep.subr.mxu0 0.0
    %742 = vmatpush1.xpose.msra.mxu0 0.0
    %743 = vmatprep.subr.mxu0 0.0
    %744 = vmatpush1.xpose.msra.mxu0 0.0
    %745 = vmatprep.subr.mxu0 0.0
    %746 = vmatpush1.xpose.msra.mxu0 0.0
    %747 = vmatprep.subr.mxu0 0.0
    %748 = vmatpush1.xpose.msra.mxu0 0.0
    %749 = vmatprep.subr.mxu0 0.0
    %750 = vmatpush1.xpose.msra.mxu0 0.0
    %751 = vmatprep.subr.mxu0 0.0
    %752 = vmatpush1.xpose.msra.mxu0 0.0
    %753 = vmatprep.subr.mxu0 0.0
    %754 = vmatpush1.xpose.msra.mxu0 0.0
    %755 = vmatprep.subr.mxu0 0.0
    %756 = vmatpush1.xpose.msra.mxu0 0.0
    %757 = vmatprep.subr.mxu0 0.0
    %758 = vmatpush1.xpose.msra.mxu0 0.0
    %759 = vmatprep.subr.mxu0 0.0
    %760 = vmatpush1.xpose.msra.mxu0 0.0
    %761 = vmatprep.subr.mxu0 0.0
    %762 = vmatpush1.xpose.msra.mxu0 0.0
    %763 = vmatprep.subr.mxu0 0.0
    %764 = vmatpush1.xpose.msra.mxu0 0.0
    %765 = vmatprep.subr.mxu0 0.0
    %766 = vmatpush1.xpose.msra.mxu0 0.0
    %767 = vmatprep.subr.mxu0 0.0
    %768 = vmatpush1.xpose.msra.mxu0 0.0
    %769 = vmatprep.subr.mxu0 0.0
    %770 = vmatpush1.xpose.msra.mxu0 0.0
    %771 = vmatprep.subr.mxu0 0.0
    %772 = vmatpush1.xpose.msra.mxu0 0.0
    %773 = vmatprep.subr.mxu0 0.0
    %774 = vmatpush1.xpose.msra.mxu0 0.0
    %775 = vmatprep.subr.mxu0 0.0
    %776 = vmatpush1.xpose.msra.mxu0 0.0
    %777 = vmatprep.subr.mxu0 0.0
    %778 = vmatpush1.xpose.msra.mxu0 0.0
    %779 = vmatprep.subr.mxu0 0.0
    %780 = vmatpush1.xpose.msra.mxu0 0.0
    %781 = vmatprep.subr.mxu0 0.0
    %782 = vmatpush1.xpose.msra.mxu0 0.0
    %783 = vmatprep.subr.mxu0 0.0
    %784 = vmatpush1.xpose.msra.mxu0 0.0
    %785 = vmatprep.subr.mxu0 0.0
    %786 = vmatpush1.xpose.msra.mxu0 0.0
    %787 = vmatprep.mubr.f32.mxu0 0.0
    %788 = vmatmul.mubr.f32.gmra.mrb[0].mxu0 %v715
    %v789 = vpop.f32.mrb[0].mxu0
    %v790 = vadd.f32 0.0, %v789
    %v791 = vpop.f32.mrb[0].mxu0
    %792 = vmatprep.mubr.f32.mxu0 0.0
    %793 = vmatmul.mubr.f32.gmra.mrb[0].mxu0 %v717
    %v794 = vpop.f32.mrb[0].mxu0
    %v795 = vadd.f32 0.0, %v794
    %v796 = vpop.f32.mrb[0].mxu0
    %797 = vdwg.mxu0
    %800 = vrot.lane.b32.xlu0 %v482, 112
    %v801 = vpop.permute.xlu0 %800
    %802 = vrot.lane.b32.xlu0 %v487, 112
    %v803 = vpop.permute.xlu0 %802
    %v804 = vsel %vm536, %v482, 0
    %v806 = vsel %vm536, %v487, 0
    %v808 = vsel %vm536, %v801, 0
    %v810 = vsel %vm536, %v803, 0
    %812 = vmatprep.subr.mxu0 0.0
    %813 = vmatpush1.xpose.msra.mxu0 %v808
    %814 = vmatprep.subr.mxu0 0.0
    %815 = vmatpush1.xpose.msra.mxu0 %v810
    %816 = vmatprep.subr.mxu0 0.0
    %817 = vmatpush1.xpose.msra.mxu0 0.0
    %818 = vmatprep.subr.mxu0 0.0
    %819 = vmatpush1.xpose.msra.mxu0 0.0
    %820 = vmatprep.subr.mxu0 0.0
    %821 = vmatpush1.xpose.msra.mxu0 0.0
    %822 = vmatprep.subr.mxu0 0.0
    %823 = vmatpush1.xpose.msra.mxu0 0.0
    %824 = vmatprep.subr.mxu0 0.0
    %825 = vmatpush1.xpose.msra.mxu0 0.0
    %826 = vmatprep.subr.mxu0 0.0
    %827 = vmatpush1.xpose.msra.mxu0 0.0
    %828 = vmatprep.subr.mxu0 0.0
    %829 = vmatpush1.xpose.msra.mxu0 0.0
    %830 = vmatprep.subr.mxu0 0.0
    %831 = vmatpush1.xpose.msra.mxu0 0.0
    %832 = vmatprep.subr.mxu0 0.0
    %833 = vmatpush1.xpose.msra.mxu0 0.0
    %834 = vmatprep.subr.mxu0 0.0
    %835 = vmatpush1.xpose.msra.mxu0 0.0
    %836 = vmatprep.subr.mxu0 0.0
    %837 = vmatpush1.xpose.msra.mxu0 0.0
    %838 = vmatprep.subr.mxu0 0.0
    %839 = vmatpush1.xpose.msra.mxu0 0.0
    %840 = vmatprep.subr.mxu0 0.0
    %841 = vmatpush1.xpose.msra.mxu0 0.0
    %842 = vmatprep.subr.mxu0 0.0
    %843 = vmatpush1.xpose.msra.mxu0 0.0
    %844 = vmatprep.subr.mxu0 0.0
    %845 = vmatpush1.xpose.msra.mxu0 0.0
    %846 = vmatprep.subr.mxu0 0.0
    %847 = vmatpush1.xpose.msra.mxu0 0.0
    %848 = vmatprep.subr.mxu0 0.0
    %849 = vmatpush1.xpose.msra.mxu0 0.0
    %850 = vmatprep.subr.mxu0 0.0
    %851 = vmatpush1.xpose.msra.mxu0 0.0
    %852 = vmatprep.subr.mxu0 0.0
    %853 = vmatpush1.xpose.msra.mxu0 0.0
    %854 = vmatprep.subr.mxu0 0.0
    %855 = vmatpush1.xpose.msra.mxu0 0.0
    %856 = vmatprep.subr.mxu0 0.0
    %857 = vmatpush1.xpose.msra.mxu0 0.0
    %858 = vmatprep.subr.mxu0 0.0
    %859 = vmatpush1.xpose.msra.mxu0 0.0
    %860 = vmatprep.subr.mxu0 0.0
    %861 = vmatpush1.xpose.msra.mxu0 0.0
    %862 = vmatprep.subr.mxu0 0.0
    %863 = vmatpush1.xpose.msra.mxu0 0.0
    %864 = vmatprep.subr.mxu0 0.0
    %865 = vmatpush1.xpose.msra.mxu0 0.0
    %866 = vmatprep.subr.mxu0 0.0
    %867 = vmatpush1.xpose.msra.mxu0 0.0
    %868 = vmatprep.subr.mxu0 0.0
    %869 = vmatpush1.xpose.msra.mxu0 0.0
    %870 = vmatprep.subr.mxu0 0.0
    %871 = vmatpush1.xpose.msra.mxu0 0.0
    %872 = vmatprep.subr.mxu0 0.0
    %873 = vmatpush1.xpose.msra.mxu0 0.0
    %874 = vmatprep.subr.mxu0 0.0
    %875 = vmatpush1.xpose.msra.mxu0 0.0
    %876 = vmatprep.mubr.f32.mxu0 0.0
    %877 = vmatmul.mubr.f32.gmra.mrb[0].mxu0 %v804
    %v878 = vpop.f32.mrb[0].mxu0
    %v879 = vadd.f32 0.0, %v878
    %v880 = vpop.f32.mrb[0].mxu0
    %881 = vmatprep.mubr.f32.mxu0 0.0
    %882 = vmatmul.mubr.f32.gmra.mrb[0].mxu0 %v806
    %v883 = vpop.f32.mrb[0].mxu0
    %v884 = vadd.f32 0.0, %v883
    %v885 = vpop.f32.mrb[0].mxu0
    %886 = vdwg.mxu0
    %889 = vrot.lane.b32.xlu0 %v492, 112
    %v890 = vpop.permute.xlu0 %889
    %891 = vrot.lane.b32.xlu0 %v497, 112
    %v892 = vpop.permute.xlu0 %891
    %v893 = vsel %vm536, %v492, 0
    %v895 = vsel %vm536, %v497, 0
    %v897 = vsel %vm536, %v890, 0
    %v899 = vsel %vm536, %v892, 0
    %901 = vmatprep.subr.mxu0 0.0
    %902 = vmatpush1.xpose.msra.mxu0 %v897
    %903 = vmatprep.subr.mxu0 0.0
    %904 = vmatpush1.xpose.msra.mxu0 %v899
    %905 = vmatprep.subr.mxu0 0.0
    %906 = vmatpush1.xpose.msra.mxu0 0.0
    %907 = vmatprep.subr.mxu0 0.0
    %908 = vmatpush1.xpose.msra.mxu0 0.0
    %909 = vmatprep.subr.mxu0 0.0
    %910 = vmatpush1.xpose.msra.mxu0 0.0
    %911 = vmatprep.subr.mxu0 0.0
    %912 = vmatpush1.xpose.msra.mxu0 0.0
    %913 = vmatprep.subr.mxu0 0.0
    %914 = vmatpush1.xpose.msra.mxu0 0.0
    %915 = vmatprep.subr.mxu0 0.0
    %916 = vmatpush1.xpose.msra.mxu0 0.0
    %917 = vmatprep.subr.mxu0 0.0
    %918 = vmatpush1.xpose.msra.mxu0 0.0
    %919 = vmatprep.subr.mxu0 0.0
    %920 = vmatpush1.xpose.msra.mxu0 0.0
    %921 = vmatprep.subr.mxu0 0.0
    %922 = vmatpush1.xpose.msra.mxu0 0.0
    %923 = vmatprep.subr.mxu0 0.0
    %924 = vmatpush1.xpose.msra.mxu0 0.0
    %925 = vmatprep.subr.mxu0 0.0
    %926 = vmatpush1.xpose.msra.mxu0 0.0
    %927 = vmatprep.subr.mxu0 0.0
    %928 = vmatpush1.xpose.msra.mxu0 0.0
    %929 = vmatprep.subr.mxu0 0.0
    %930 = vmatpush1.xpose.msra.mxu0 0.0
    %931 = vmatprep.subr.mxu0 0.0
    %932 = vmatpush1.xpose.msra.mxu0 0.0
    %933 = vmatprep.subr.mxu0 0.0
    %934 = vmatpush1.xpose.msra.mxu0 0.0
    %935 = vmatprep.subr.mxu0 0.0
    %936 = vmatpush1.xpose.msra.mxu0 0.0
    %937 = vmatprep.subr.mxu0 0.0
    %938 = vmatpush1.xpose.msra.mxu0 0.0
    %939 = vmatprep.subr.mxu0 0.0
    %940 = vmatpush1.xpose.msra.mxu0 0.0
    %941 = vmatprep.subr.mxu0 0.0
    %942 = vmatpush1.xpose.msra.mxu0 0.0
    %943 = vmatprep.subr.mxu0 0.0
    %944 = vmatpush1.xpose.msra.mxu0 0.0
    %945 = vmatprep.subr.mxu0 0.0
    %946 = vmatpush1.xpose.msra.mxu0 0.0
    %947 = vmatprep.subr.mxu0 0.0
    %948 = vmatpush1.xpose.msra.mxu0 0.0
    %949 = vmatprep.subr.mxu0 0.0
    %950 = vmatpush1.xpose.msra.mxu0 0.0
    %951 = vmatprep.subr.mxu0 0.0
    %952 = vmatpush1.xpose.msra.mxu0 0.0
    %953 = vmatprep.subr.mxu0 0.0
    %954 = vmatpush1.xpose.msra.mxu0 0.0
    %955 = vmatprep.subr.mxu0 0.0
    %956 = vmatpush1.xpose.msra.mxu0 0.0
    %957 = vmatprep.subr.mxu0 0.0
    %958 = vmatpush1.xpose.msra.mxu0 0.0
    %959 = vmatprep.subr.mxu0 0.0
    %960 = vmatpush1.xpose.msra.mxu0 0.0
    %961 = vmatprep.subr.mxu0 0.0
    %962 = vmatpush1.xpose.msra.mxu0 0.0
    %963 = vmatprep.subr.mxu0 0.0
    %964 = vmatpush1.xpose.msra.mxu0 0.0
    %965 = vmatprep.mubr.f32.mxu0 0.0
    %966 = vmatmul.mubr.f32.gmra.mrb[0].mxu0 %v893
    %v967 = vpop.f32.mrb[0].mxu0
    %v968 = vadd.f32 0.0, %v967
    %v969 = vpop.f32.mrb[0].mxu0
    %970 = vmatprep.mubr.f32.mxu0 0.0
    %971 = vmatmul.mubr.f32.gmra.mrb[0].mxu0 %v895
    %v972 = vpop.f32.mrb[0].mxu0
    %v973 = vadd.f32 0.0, %v972
    %v974 = vpop.f32.mrb[0].mxu0
    %975 = vdwg.mxu0
    %978 = vrot.lane.b32.xlu0 %v502, 112
    %v979 = vpop.permute.xlu0 %978
    %980 = vrot.lane.b32.xlu0 %v507, 112
    %v981 = vpop.permute.xlu0 %980
    %v982 = vsel %vm536, %v502, 0
    %v984 = vsel %vm536, %v507, 0
    %v986 = vsel %vm536, %v979, 0
    %v988 = vsel %vm536, %v981, 0
    %990 = vmatprep.subr.mxu0 0.0
    %991 = vmatpush1.xpose.msra.mxu0 %v986
    %992 = vmatprep.subr.mxu0 0.0
    %993 = vmatpush1.xpose.msra.mxu0 %v988
    %994 = vmatprep.subr.mxu0 0.0
    %995 = vmatpush1.xpose.msra.mxu0 0.0
    %996 = vmatprep.subr.mxu0 0.0
    %997 = vmatpush1.xpose.msra.mxu0 0.0
    %998 = vmatprep.subr.mxu0 0.0
    %999 = vmatpush1.xpose.msra.mxu0 0.0
    %1000 = vmatprep.subr.mxu0 0.0
    %1001 = vmatpush1.xpose.msra.mxu0 0.0
    %1002 = vmatprep.subr.mxu0 0.0
    %1003 = vmatpush1.xpose.msra.mxu0 0.0
    %1004 = vmatprep.subr.mxu0 0.0
    %1005 = vmatpush1.xpose.msra.mxu0 0.0
    %1006 = vmatprep.subr.mxu0 0.0
    %1007 = vmatpush1.xpose.msra.mxu0 0.0
    %1008 = vmatprep.subr.mxu0 0.0
    %1009 = vmatpush1.xpose.msra.mxu0 0.0
    %1010 = vmatprep.subr.mxu0 0.0
    %1011 = vmatpush1.xpose.msra.mxu0 0.0
    %1012 = vmatprep.subr.mxu0 0.0
    %1013 = vmatpush1.xpose.msra.mxu0 0.0
    %1014 = vmatprep.subr.mxu0 0.0
    %1015 = vmatpush1.xpose.msra.mxu0 0.0
    %1016 = vmatprep.subr.mxu0 0.0
    %1017 = vmatpush1.xpose.msra.mxu0 0.0
    %1018 = vmatprep.subr.mxu0 0.0
    %1019 = vmatpush1.xpose.msra.mxu0 0.0
    %1020 = vmatprep.subr.mxu0 0.0
    %1021 = vmatpush1.xpose.msra.mxu0 0.0
    %1022 = vmatprep.subr.mxu0 0.0
    %1023 = vmatpush1.xpose.msra.mxu0 0.0
    %1024 = vmatprep.subr.mxu0 0.0
    %1025 = vmatpush1.xpose.msra.mxu0 0.0
    %1026 = vmatprep.subr.mxu0 0.0
    %1027 = vmatpush1.xpose.msra.mxu0 0.0
    %1028 = vmatprep.subr.mxu0 0.0
    %1029 = vmatpush1.xpose.msra.mxu0 0.0
    %1030 = vmatprep.subr.mxu0 0.0
    %1031 = vmatpush1.xpose.msra.mxu0 0.0
    %1032 = vmatprep.subr.mxu0 0.0
    %1033 = vmatpush1.xpose.msra.mxu0 0.0
    %1034 = vmatprep.subr.mxu0 0.0
    %1035 = vmatpush1.xpose.msra.mxu0 0.0
    %1036 = vmatprep.subr.mxu0 0.0
    %1037 = vmatpush1.xpose.msra.mxu0 0.0
    %1038 = vmatprep.subr.mxu0 0.0
    %1039 = vmatpush1.xpose.msra.mxu0 0.0
    %1040 = vmatprep.subr.mxu0 0.0
    %1041 = vmatpush1.xpose.msra.mxu0 0.0
    %1042 = vmatprep.subr.mxu0 0.0
    %1043 = vmatpush1.xpose.msra.mxu0 0.0
    %1044 = vmatprep.subr.mxu0 0.0
    %1045 = vmatpush1.xpose.msra.mxu0 0.0
    %1046 = vmatprep.subr.mxu0 0.0
    %1047 = vmatpush1.xpose.msra.mxu0 0.0
    %1048 = vmatprep.subr.mxu0 0.0
    %1049 = vmatpush1.xpose.msra.mxu0 0.0
    %1050 = vmatprep.subr.mxu0 0.0
    %1051 = vmatpush1.xpose.msra.mxu0 0.0
    %1052 = vmatprep.subr.mxu0 0.0
    %1053 = vmatpush1.xpose.msra.mxu0 0.0
    %1054 = vmatprep.mubr.f32.mxu0 0.0
    %1055 = vmatmul.mubr.f32.gmra.mrb[0].mxu0 %v982
    %v1056 = vpop.f32.mrb[0].mxu0
    %v1057 = vadd.f32 0.0, %v1056
    %v1058 = vpop.f32.mrb[0].mxu0
    %1059 = vmatprep.mubr.f32.mxu0 0.0
    %1060 = vmatmul.mubr.f32.gmra.mrb[0].mxu0 %v984
    %v1061 = vpop.f32.mrb[0].mxu0
    %v1062 = vadd.f32 0.0, %v1061
    %v1063 = vpop.f32.mrb[0].mxu0
    %1064 = vdwg.mxu0
    %1067 = vrot.lane.b32.xlu0 %v512, 112
    %v1068 = vpop.permute.xlu0 %1067
    %1069 = vrot.lane.b32.xlu0 %v517, 112
    %v1070 = vpop.permute.xlu0 %1069
    %v1071 = vsel %vm536, %v512, 0
    %v1073 = vsel %vm536, %v517, 0
    %v1075 = vsel %vm536, %v1068, 0
    %v1077 = vsel %vm536, %v1070, 0
    %1079 = vmatprep.subr.mxu0 0.0
    %1080 = vmatpush1.xpose.msra.mxu0 %v1075
    %1081 = vmatprep.subr.mxu0 0.0
    %1082 = vmatpush1.xpose.msra.mxu0 %v1077
    %1083 = vmatprep.subr.mxu0 0.0
    %1084 = vmatpush1.xpose.msra.mxu0 0.0
    %1085 = vmatprep.subr.mxu0 0.0
    %1086 = vmatpush1.xpose.msra.mxu0 0.0
    %1087 = vmatprep.subr.mxu0 0.0
    %1088 = vmatpush1.xpose.msra.mxu0 0.0
    %1089 = vmatprep.subr.mxu0 0.0
    %1090 = vmatpush1.xpose.msra.mxu0 0.0
    %1091 = vmatprep.subr.mxu0 0.0
    %1092 = vmatpush1.xpose.msra.mxu0 0.0
    %1093 = vmatprep.subr.mxu0 0.0
    %1094 = vmatpush1.xpose.msra.mxu0 0.0
    %1095 = vmatprep.subr.mxu0 0.0
    %1096 = vmatpush1.xpose.msra.mxu0 0.0
    %1097 = vmatprep.subr.mxu0 0.0
    %1098 = vmatpush1.xpose.msra.mxu0 0.0
    %1099 = vmatprep.subr.mxu0 0.0
    %1100 = vmatpush1.xpose.msra.mxu0 0.0
    %1101 = vmatprep.subr.mxu0 0.0
    %1102 = vmatpush1.xpose.msra.mxu0 0.0
    %1103 = vmatprep.subr.mxu0 0.0
    %1104 = vmatpush1.xpose.msra.mxu0 0.0
    %1105 = vmatprep.subr.mxu0 0.0
    %1106 = vmatpush1.xpose.msra.mxu0 0.0
    %1107 = vmatprep.subr.mxu0 0.0
    %1108 = vmatpush1.xpose.msra.mxu0 0.0
    %1109 = vmatprep.subr.mxu0 0.0
    %1110 = vmatpush1.xpose.msra.mxu0 0.0
    %1111 = vmatprep.subr.mxu0 0.0
    %1112 = vmatpush1.xpose.msra.mxu0 0.0
    %1113 = vmatprep.subr.mxu0 0.0
    %1114 = vmatpush1.xpose.msra.mxu0 0.0
    %1115 = vmatprep.subr.mxu0 0.0
    %1116 = vmatpush1.xpose.msra.mxu0 0.0
    %1117 = vmatprep.subr.mxu0 0.0
    %1118 = vmatpush1.xpose.msra.mxu0 0.0
    %1119 = vmatprep.subr.mxu0 0.0
    %1120 = vmatpush1.xpose.msra.mxu0 0.0
    %1121 = vmatprep.subr.mxu0 0.0
    %1122 = vmatpush1.xpose.msra.mxu0 0.0
    %1123 = vmatprep.subr.mxu0 0.0
    %1124 = vmatpush1.xpose.msra.mxu0 0.0
    %1125 = vmatprep.subr.mxu0 0.0
    %1126 = vmatpush1.xpose.msra.mxu0 0.0
    %1127 = vmatprep.subr.mxu0 0.0
    %1128 = vmatpush1.xpose.msra.mxu0 0.0
    %1129 = vmatprep.subr.mxu0 0.0
    %1130 = vmatpush1.xpose.msra.mxu0 0.0
    %1131 = vmatprep.subr.mxu0 0.0
    %1132 = vmatpush1.xpose.msra.mxu0 0.0
    %1133 = vmatprep.subr.mxu0 0.0
    %1134 = vmatpush1.xpose.msra.mxu0 0.0
    %1135 = vmatprep.subr.mxu0 0.0
    %1136 = vmatpush1.xpose.msra.mxu0 0.0
    %1137 = vmatprep.subr.mxu0 0.0
    %1138 = vmatpush1.xpose.msra.mxu0 0.0
    %1139 = vmatprep.subr.mxu0 0.0
    %1140 = vmatpush1.xpose.msra.mxu0 0.0
    %1141 = vmatprep.subr.mxu0 0.0
    %1142 = vmatpush1.xpose.msra.mxu0 0.0
    %1143 = vmatprep.mubr.f32.mxu0 0.0
    %1144 = vmatmul.mubr.f32.gmra.mrb[0].mxu0 %v1071
    %v1145 = vpop.f32.mrb[0].mxu0
    %v1146 = vadd.f32 0.0, %v1145
    %v1147 = vpop.f32.mrb[0].mxu0
    %1148 = vmatprep.mubr.f32.mxu0 0.0
    %1149 = vmatmul.mubr.f32.gmra.mrb[0].mxu0 %v1073
    %v1150 = vpop.f32.mrb[0].mxu0
    %v1151 = vadd.f32 0.0, %v1150
    %v1152 = vpop.f32.mrb[0].mxu0
    %1153 = vdwg.mxu0
    %1156 = vrot.lane.b32.xlu0 %v522, 112
    %v1157 = vpop.permute.xlu0 %1156
    %1158 = vrot.lane.b32.xlu0 %v527, 112
    %v1159 = vpop.permute.xlu0 %1158
    %v1160 = vsel %vm536, %v522, 0
    %v1162 = vsel %vm536, %v527, 0
    %v1164 = vsel %vm536, %v1157, 0
    %v1166 = vsel %vm536, %v1159, 0
    %1168 = vmatprep.subr.mxu0 0.0
    %1169 = vmatpush1.xpose.msra.mxu0 %v1164
    %1170 = vmatprep.subr.mxu0 0.0
    %1171 = vmatpush1.xpose.msra.mxu0 %v1166
    %1172 = vmatprep.subr.mxu0 0.0
    %1173 = vmatpush1.xpose.msra.mxu0 0.0
    %1174 = vmatprep.subr.mxu0 0.0
    %1175 = vmatpush1.xpose.msra.mxu0 0.0
    %1176 = vmatprep.subr.mxu0 0.0
    %1177 = vmatpush1.xpose.msra.mxu0 0.0
    %1178 = vmatprep.subr.mxu0 0.0
    %1179 = vmatpush1.xpose.msra.mxu0 0.0
    %1180 = vmatprep.subr.mxu0 0.0
    %1181 = vmatpush1.xpose.msra.mxu0 0.0
    %1182 = vmatprep.subr.mxu0 0.0
    %1183 = vmatpush1.xpose.msra.mxu0 0.0
    %1184 = vmatprep.subr.mxu0 0.0
    %1185 = vmatpush1.xpose.msra.mxu0 0.0
    %1186 = vmatprep.subr.mxu0 0.0
    %1187 = vmatpush1.xpose.msra.mxu0 0.0
    %1188 = vmatprep.subr.mxu0 0.0
    %1189 = vmatpush1.xpose.msra.mxu0 0.0
    %1190 = vmatprep.subr.mxu0 0.0
    %1191 = vmatpush1.xpose.msra.mxu0 0.0
    %1192 = vmatprep.subr.mxu0 0.0
    %1193 = vmatpush1.xpose.msra.mxu0 0.0
    %1194 = vmatprep.subr.mxu0 0.0
    %1195 = vmatpush1.xpose.msra.mxu0 0.0
    %1196 = vmatprep.subr.mxu0 0.0
    %1197 = vmatpush1.xpose.msra.mxu0 0.0
    %1198 = vmatprep.subr.mxu0 0.0
    %1199 = vmatpush1.xpose.msra.mxu0 0.0
    %1200 = vmatprep.subr.mxu0 0.0
    %1201 = vmatpush1.xpose.msra.mxu0 0.0
    %1202 = vmatprep.subr.mxu0 0.0
    %1203 = vmatpush1.xpose.msra.mxu0 0.0
    %1204 = vmatprep.subr.mxu0 0.0
    %1205 = vmatpush1.xpose.msra.mxu0 0.0
    %1206 = vmatprep.subr.mxu0 0.0
    %1207 = vmatpush1.xpose.msra.mxu0 0.0
    %1208 = vmatprep.subr.mxu0 0.0
    %1209 = vmatpush1.xpose.msra.mxu0 0.0
    %1210 = vmatprep.subr.mxu0 0.0
    %1211 = vmatpush1.xpose.msra.mxu0 0.0
    %1212 = vmatprep.subr.mxu0 0.0
    %1213 = vmatpush1.xpose.msra.mxu0 0.0
    %1214 = vmatprep.subr.mxu0 0.0
    %1215 = vmatpush1.xpose.msra.mxu0 0.0
    %1216 = vmatprep.subr.mxu0 0.0
    %1217 = vmatpush1.xpose.msra.mxu0 0.0
    %1218 = vmatprep.subr.mxu0 0.0
    %1219 = vmatpush1.xpose.msra.mxu0 0.0
    %1220 = vmatprep.subr.mxu0 0.0
    %1221 = vmatpush1.xpose.msra.mxu0 0.0
    %1222 = vmatprep.subr.mxu0 0.0
    %1223 = vmatpush1.xpose.msra.mxu0 0.0
    %1224 = vmatprep.subr.mxu0 0.0
    %1225 = vmatpush1.xpose.msra.mxu0 0.0
    %1226 = vmatprep.subr.mxu0 0.0
    %1227 = vmatpush1.xpose.msra.mxu0 0.0
    %1228 = vmatprep.subr.mxu0 0.0
    %1229 = vmatpush1.xpose.msra.mxu0 0.0
    %1230 = vmatprep.subr.mxu0 0.0
    %1231 = vmatpush1.xpose.msra.mxu0 0.0
    %1232 = vmatprep.mubr.f32.mxu0 0.0
    %1233 = vmatmul.mubr.f32.gmra.mrb[0].mxu0 %v1160
    %v1234 = vpop.f32.mrb[0].mxu0
    %v1235 = vadd.f32 0.0, %v1234
    %v1236 = vpop.f32.mrb[0].mxu0
    %1237 = vmatprep.mubr.f32.mxu0 0.0
    %1238 = vmatmul.mubr.f32.gmra.mrb[0].mxu0 %v1162
    %v1239 = vpop.f32.mrb[0].mxu0
    %v1240 = vadd.f32 0.0, %v1239
    %v1241 = vpop.f32.mrb[0].mxu0
    %1242 = vdwg.mxu0
    %v1243 = vsel %vm336, %v612, -inf
    %1244 = vmax.xlane.f32.xlu0 %v1243
    %v1245 = vpop.xlane.xlu0 %1244
    %v1246 = vsel %vm336, %v617, -inf
    %1247 = vmax.xlane.f32.xlu0 %v1246
    %v1248 = vpop.xlane.xlu0 %1247
    %v1249 = vsel %vm336, %v701, -inf
    %1250 = vmax.xlane.f32.xlu0 %v1249
    %v1251 = vpop.xlane.xlu0 %1250
    %v1252 = vsel %vm336, %v706, -inf
    %1253 = vmax.xlane.f32.xlu0 %v1252
    %v1254 = vpop.xlane.xlu0 %1253
    %v1255 = vsel %vm336, %v790, -inf
    %1256 = vmax.xlane.f32.xlu0 %v1255
    %v1257 = vpop.xlane.xlu0 %1256
    %v1258 = vsel %vm336, %v795, -inf
    %1259 = vmax.xlane.f32.xlu0 %v1258
    %v1260 = vpop.xlane.xlu0 %1259
    %v1261 = vsel %vm336, %v879, -inf
    %1262 = vmax.xlane.f32.xlu0 %v1261
    %v1263 = vpop.xlane.xlu0 %1262
    %v1264 = vsel %vm336, %v884, -inf
    %1265 = vmax.xlane.f32.xlu0 %v1264
    %v1266 = vpop.xlane.xlu0 %1265
    %v1267 = vsel %vm336, %v968, -inf
    %1268 = vmax.xlane.f32.xlu0 %v1267
    %v1269 = vpop.xlane.xlu0 %1268
    %v1270 = vsel %vm336, %v973, -inf
    %1271 = vmax.xlane.f32.xlu0 %v1270
    %v1272 = vpop.xlane.xlu0 %1271
    %v1273 = vsel %vm336, %v1057, -inf
    %1274 = vmax.xlane.f32.xlu0 %v1273
    %v1275 = vpop.xlane.xlu0 %1274
    %v1276 = vsel %vm336, %v1062, -inf
    %1277 = vmax.xlane.f32.xlu0 %v1276
    %v1278 = vpop.xlane.xlu0 %1277
    %v1279 = vsel %vm336, %v1146, -inf
    %1280 = vmax.xlane.f32.xlu0 %v1279
    %v1281 = vpop.xlane.xlu0 %1280
    %v1282 = vsel %vm336, %v1151, -inf
    %1283 = vmax.xlane.f32.xlu0 %v1282
    %v1284 = vpop.xlane.xlu0 %1283
    %v1285 = vsel %vm336, %v1235, -inf
    %1286 = vmax.xlane.f32.xlu0 %v1285
    %v1287 = vpop.xlane.xlu0 %1286
    %v1288 = vsel %vm336, %v1240, -inf
    %1289 = vmax.xlane.f32.xlu0 %v1288
    %v1290 = vpop.xlane.xlu0 %1289
    %v1291 = vsub.f32 %v612, %v1245
    %v1292 = vsub.f32 %v617, %v1248
    %v1293 = vsub.f32 %v701, %v1251
    %v1294 = vsub.f32 %v706, %v1254
    %v1295 = vsub.f32 %v790, %v1257
    %v1296 = vsub.f32 %v795, %v1260
    %v1297 = vsub.f32 %v879, %v1263
    %v1298 = vsub.f32 %v884, %v1266
    %v1299 = vsub.f32 %v968, %v1269
    %v1300 = vsub.f32 %v973, %v1272
    %v1301 = vsub.f32 %v1057, %v1275
    %v1302 = vsub.f32 %v1062, %v1278
    %v1303 = vsub.f32 %v1146, %v1281
    %v1304 = vsub.f32 %v1151, %v1284
    %v1305 = vsub.f32 %v1235, %v1287
    %v1306 = vsub.f32 %v1240, %v1290
    %v1307 = vmul.f32 %v1291, 1.442695
    %v1308 = vpow.pop %v1307
    %v1309 = vmul.f32 %v1292, 1.442695
    %v1310 = vpow.pop %v1309
    %v1311 = vmul.f32 %v1293, 1.442695
    %v1312 = vpow.pop %v1311
    %v1313 = vmul.f32 %v1294, 1.442695
    %v1314 = vpow.pop %v1313
    %v1315 = vmul.f32 %v1295, 1.442695
    %v1316 = vpow.pop %v1315
    %v1317 = vmul.f32 %v1296, 1.442695
    %v1318 = vpow.pop %v1317
    %v1319 = vmul.f32 %v1297, 1.442695
    %v1320 = vpow.pop %v1319
    %v1321 = vmul.f32 %v1298, 1.442695
    %v1322 = vpow.pop %v1321
    %v1323 = vmul.f32 %v1299, 1.442695
    %v1324 = vpow.pop %v1323
    %v1325 = vmul.f32 %v1300, 1.442695
    %v1326 = vpow.pop %v1325
    %v1327 = vmul.f32 %v1301, 1.442695
    %v1328 = vpow.pop %v1327
    %v1329 = vmul.f32 %v1302, 1.442695
    %v1330 = vpow.pop %v1329
    %v1331 = vmul.f32 %v1303, 1.442695
    %v1332 = vpow.pop %v1331
    %v1333 = vmul.f32 %v1304, 1.442695
    %v1334 = vpow.pop %v1333
    %v1335 = vmul.f32 %v1305, 1.442695
    %v1336 = vpow.pop %v1335
    %v1337 = vmul.f32 %v1306, 1.442695
    %v1338 = vpow.pop %v1337
    %v1339 = vsel %vm336, %v1308, 0.0
    %1340 = vadd.xlane.f32.xlu0 %v1339
    %v1341 = vpop.xlane.xlu0 %1340
    %v1342 = vsel %vm336, %v1310, 0.0
    %1343 = vadd.xlane.f32.xlu0 %v1342
    %v1344 = vpop.xlane.xlu0 %1343
    %v1345 = vsel %vm336, %v1312, 0.0
    %1346 = vadd.xlane.f32.xlu0 %v1345
    %v1347 = vpop.xlane.xlu0 %1346
    %v1348 = vsel %vm336, %v1314, 0.0
    %1349 = vadd.xlane.f32.xlu0 %v1348
    %v1350 = vpop.xlane.xlu0 %1349
    %v1351 = vsel %vm336, %v1316, 0.0
    %1352 = vadd.xlane.f32.xlu0 %v1351
    %v1353 = vpop.xlane.xlu0 %1352
    %v1354 = vsel %vm336, %v1318, 0.0
    %1355 = vadd.xlane.f32.xlu0 %v1354
    %v1356 = vpop.xlane.xlu0 %1355
    %v1357 = vsel %vm336, %v1320, 0.0
    %1358 = vadd.xlane.f32.xlu0 %v1357
    %v1359 = vpop.xlane.xlu0 %1358
    %v1360 = vsel %vm336, %v1322, 0.0
    %1361 = vadd.xlane.f32.xlu0 %v1360
    %v1362 = vpop.xlane.xlu0 %1361
    %v1363 = vsel %vm336, %v1324, 0.0
    %1364 = vadd.xlane.f32.xlu0 %v1363
    %v1365 = vpop.xlane.xlu0 %1364
    %v1366 = vsel %vm336, %v1326, 0.0
    %1367 = vadd.xlane.f32.xlu0 %v1366
    %v1368 = vpop.xlane.xlu0 %1367
    %v1369 = vsel %vm336, %v1328, 0.0
    %1370 = vadd.xlane.f32.xlu0 %v1369
    %v1371 = vpop.xlane.xlu0 %1370
    %v1372 = vsel %vm336, %v1330, 0.0
    %1373 = vadd.xlane.f32.xlu0 %v1372
    %v1374 = vpop.xlane.xlu0 %1373
    %v1375 = vsel %vm336, %v1332, 0.0
    %1376 = vadd.xlane.f32.xlu0 %v1375
    %v1377 = vpop.xlane.xlu0 %1376
    %v1378 = vsel %vm336, %v1334, 0.0
    %1379 = vadd.xlane.f32.xlu0 %v1378
    %v1380 = vpop.xlane.xlu0 %1379
    %v1381 = vsel %vm336, %v1336, 0.0
    %1382 = vadd.xlane.f32.xlu0 %v1381
    %v1383 = vpop.xlane.xlu0 %1382
    %v1384 = vsel %vm336, %v1338, 0.0
    %1385 = vadd.xlane.f32.xlu0 %v1384
    %v1386 = vpop.xlane.xlu0 %1385
    %v1387 = vrcp.pop %v1341
    %v1388 = vmul.f32 %v1308, %v1387
    %v1389 = vrcp.pop %v1344
    %v1390 = vmul.f32 %v1310, %v1389
    %v1391 = vrcp.pop %v1347
    %v1392 = vmul.f32 %v1312, %v1391
    %v1393 = vrcp.pop %v1350
    %v1394 = vmul.f32 %v1314, %v1393
    %v1395 = vrcp.pop %v1353
    %v1396 = vmul.f32 %v1316, %v1395
    %v1397 = vrcp.pop %v1356
    %v1398 = vmul.f32 %v1318, %v1397
    %v1399 = vrcp.pop %v1359
    %v1400 = vmul.f32 %v1320, %v1399
    %v1401 = vrcp.pop %v1362
    %v1402 = vmul.f32 %v1322, %v1401
    %v1403 = vrcp.pop %v1365
    %v1404 = vmul.f32 %v1324, %v1403
    %v1405 = vrcp.pop %v1368
    %v1406 = vmul.f32 %v1326, %v1405
    %v1407 = vrcp.pop %v1371
    %v1408 = vmul.f32 %v1328, %v1407
    %v1409 = vrcp.pop %v1374
    %v1410 = vmul.f32 %v1330, %v1409
    %v1411 = vrcp.pop %v1377
    %v1412 = vmul.f32 %v1332, %v1411
    %v1413 = vrcp.pop %v1380
    %v1414 = vmul.f32 %v1334, %v1413
    %v1415 = vrcp.pop %v1383
    %v1416 = vmul.f32 %v1336, %v1415
    %v1417 = vrcp.pop %v1386
    %v1418 = vmul.f32 %v1338, %v1417
    %1419 = vrot.lane.b32.xlu0 %v452, 96
    %v1420 = vpop.permute.xlu0 %1419
    %1421 = vrot.lane.b32.xlu0 %v457, 96
    %v1422 = vpop.permute.xlu0 %1421
    %v1426 = vsel %vm336, %v1388, 0
    %v1429 = vsel %vm336, %v1390, 0
    %1431 = vmatprep.subr.mxu0 0.0
    %1432 = vmatpush1.msra.mxu0 %v1420
    %1433 = vmatprep.subr.mxu0 0.0
    %1434 = vmatpush1.msra.mxu0 %v1422
    %1435 = vmatprep.subr.mxu0 0.0
    %1436 = vmatpush1.msra.mxu0 0.0
    %1437 = vmatprep.subr.mxu0 0.0
    %1438 = vmatpush1.msra.mxu0 0.0
    %1439 = vmatprep.subr.mxu0 0.0
    %1440 = vmatpush1.msra.mxu0 0.0
    %1441 = vmatprep.subr.mxu0 0.0
    %1442 = vmatpush1.msra.mxu0 0.0
    %1443 = vmatprep.subr.mxu0 0.0
    %1444 = vmatpush1.msra.mxu0 0.0
    %1445 = vmatprep.subr.mxu0 0.0
    %1446 = vmatpush1.msra.mxu0 0.0
    %1447 = vmatprep.subr.mxu0 0.0
    %1448 = vmatpush1.msra.mxu0 0.0
    %1449 = vmatprep.subr.mxu0 0.0
    %1450 = vmatpush1.msra.mxu0 0.0
    %1451 = vmatprep.subr.mxu0 0.0
    %1452 = vmatpush1.msra.mxu0 0.0
    %1453 = vmatprep.subr.mxu0 0.0
    %1454 = vmatpush1.msra.mxu0 0.0
    %1455 = vmatprep.subr.mxu0 0.0
    %1456 = vmatpush1.msra.mxu0 0.0
    %1457 = vmatprep.subr.mxu0 0.0
    %1458 = vmatpush1.msra.mxu0 0.0
    %1459 = vmatprep.subr.mxu0 0.0
    %1460 = vmatpush1.msra.mxu0 0.0
    %1461 = vmatprep.subr.mxu0 0.0
    %1462 = vmatpush1.msra.mxu0 0.0
    %1463 = vmatprep.subr.mxu0 0.0
    %1464 = vmatpush1.msra.mxu0 0.0
    %1465 = vmatprep.subr.mxu0 0.0
    %1466 = vmatpush1.msra.mxu0 0.0
    %1467 = vmatprep.subr.mxu0 0.0
    %1468 = vmatpush1.msra.mxu0 0.0
    %1469 = vmatprep.subr.mxu0 0.0
    %1470 = vmatpush1.msra.mxu0 0.0
    %1471 = vmatprep.subr.mxu0 0.0
    %1472 = vmatpush1.msra.mxu0 0.0
    %1473 = vmatprep.subr.mxu0 0.0
    %1474 = vmatpush1.msra.mxu0 0.0
    %1475 = vmatprep.subr.mxu0 0.0
    %1476 = vmatpush1.msra.mxu0 0.0
    %1477 = vmatprep.subr.mxu0 0.0
    %1478 = vmatpush1.msra.mxu0 0.0
    %1479 = vmatprep.subr.mxu0 0.0
    %1480 = vmatpush1.msra.mxu0 0.0
    %1481 = vmatprep.subr.mxu0 0.0
    %1482 = vmatpush1.msra.mxu0 0.0
    %1483 = vmatprep.subr.mxu0 0.0
    %1484 = vmatpush1.msra.mxu0 0.0
    %1485 = vmatprep.subr.mxu0 0.0
    %1486 = vmatpush1.msra.mxu0 0.0
    %1487 = vmatprep.subr.mxu0 0.0
    %1488 = vmatpush1.msra.mxu0 0.0
    %1489 = vmatprep.subr.mxu0 0.0
    %1490 = vmatpush1.msra.mxu0 0.0
    %1491 = vmatprep.subr.mxu0 0.0
    %1492 = vmatpush1.msra.mxu0 0.0
    %1493 = vmatprep.subr.mxu0 0.0
    %1494 = vmatpush1.msra.mxu0 0.0
    %1495 = vmatprep.mubr.f32.mxu0 0.0
    %1496 = vmatmul.mubr.f32.gmra.mrb[0].mxu0 %v1426
    %v1497 = vpop.f32.mrb[0].mxu0
    %v1498 = vadd.f32 0.0, %v1497
    %v1499 = vpop.f32.mrb[0].mxu0
    %1500 = vmatprep.mubr.f32.mxu0 0.0
    %1501 = vmatmul.mubr.f32.gmra.mrb[0].mxu0 %v1429
    %v1502 = vpop.f32.mrb[0].mxu0
    %v1503 = vadd.f32 0.0, %v1502
    %v1504 = vpop.f32.mrb[0].mxu0
    %1505 = vdwg.mxu0
    %1506 = vrot.lane.b32.xlu0 %v462, 96
    %v1507 = vpop.permute.xlu0 %1506
    %1508 = vrot.lane.b32.xlu0 %v467, 96
    %v1509 = vpop.permute.xlu0 %1508
    %v1513 = vsel %vm336, %v1392, 0
    %v1516 = vsel %vm336, %v1394, 0
    %1518 = vmatprep.subr.mxu0 0.0
    %1519 = vmatpush1.msra.mxu0 %v1507
    %1520 = vmatprep.subr.mxu0 0.0
    %1521 = vmatpush1.msra.mxu0 %v1509
    %1522 = vmatprep.subr.mxu0 0.0
    %1523 = vmatpush1.msra.mxu0 0.0
    %1524 = vmatprep.subr.mxu0 0.0
    %1525 = vmatpush1.msra.mxu0 0.0
    %1526 = vmatprep.subr.mxu0 0.0
    %1527 = vmatpush1.msra.mxu0 0.0
    %1528 = vmatprep.subr.mxu0 0.0
    %1529 = vmatpush1.msra.mxu0 0.0
    %1530 = vmatprep.subr.mxu0 0.0
    %1531 = vmatpush1.msra.mxu0 0.0
    %1532 = vmatprep.subr.mxu0 0.0
    %1533 = vmatpush1.msra.mxu0 0.0
    %1534 = vmatprep.subr.mxu0 0.0
    %1535 = vmatpush1.msra.mxu0 0.0
    %1536 = vmatprep.subr.mxu0 0.0
    %1537 = vmatpush1.msra.mxu0 0.0
    %1538 = vmatprep.subr.mxu0 0.0
    %1539 = vmatpush1.msra.mxu0 0.0
    %1540 = vmatprep.subr.mxu0 0.0
    %1541 = vmatpush1.msra.mxu0 0.0
    %1542 = vmatprep.subr.mxu0 0.0
    %1543 = vmatpush1.msra.mxu0 0.0
    %1544 = vmatprep.subr.mxu0 0.0
    %1545 = vmatpush1.msra.mxu0 0.0
    %1546 = vmatprep.subr.mxu0 0.0
    %1547 = vmatpush1.msra.mxu0 0.0
    %1548 = vmatprep.subr.mxu0 0.0
    %1549 = vmatpush1.msra.mxu0 0.0
    %1550 = vmatprep.subr.mxu0 0.0
    %1551 = vmatpush1.msra.mxu0 0.0
    %1552 = vmatprep.subr.mxu0 0.0
    %1553 = vmatpush1.msra.mxu0 0.0
    %1554 = vmatprep.subr.mxu0 0.0
    %1555 = vmatpush1.msra.mxu0 0.0
    %1556 = vmatprep.subr.mxu0 0.0
    %1557 = vmatpush1.msra.mxu0 0.0
    %1558 = vmatprep.subr.mxu0 0.0
    %1559 = vmatpush1.msra.mxu0 0.0
    %1560 = vmatprep.subr.mxu0 0.0
    %1561 = vmatpush1.msra.mxu0 0.0
    %1562 = vmatprep.subr.mxu0 0.0
    %1563 = vmatpush1.msra.mxu0 0.0
    %1564 = vmatprep.subr.mxu0 0.0
    %1565 = vmatpush1.msra.mxu0 0.0
    %1566 = vmatprep.subr.mxu0 0.0
    %1567 = vmatpush1.msra.mxu0 0.0
    %1568 = vmatprep.subr.mxu0 0.0
    %1569 = vmatpush1.msra.mxu0 0.0
    %1570 = vmatprep.subr.mxu0 0.0
    %1571 = vmatpush1.msra.mxu0 0.0
    %1572 = vmatprep.subr.mxu0 0.0
    %1573 = vmatpush1.msra.mxu0 0.0
    %1574 = vmatprep.subr.mxu0 0.0
    %1575 = vmatpush1.msra.mxu0 0.0
    %1576 = vmatprep.subr.mxu0 0.0
    %1577 = vmatpush1.msra.mxu0 0.0
    %1578 = vmatprep.subr.mxu0 0.0
    %1579 = vmatpush1.msra.mxu0 0.0
    %1580 = vmatprep.subr.mxu0 0.0
    %1581 = vmatpush1.msra.mxu0 0.0
    %1582 = vmatprep.mubr.f32.mxu0 0.0
    %1583 = vmatmul.mubr.f32.gmra.mrb[0].mxu0 %v1513
    %v1584 = vpop.f32.mrb[0].mxu0
    %v1585 = vadd.f32 0.0, %v1584
    %v1586 = vpop.f32.mrb[0].mxu0
    %1587 = vmatprep.mubr.f32.mxu0 0.0
    %1588 = vmatmul.mubr.f32.gmra.mrb[0].mxu0 %v1516
    %v1589 = vpop.f32.mrb[0].mxu0
    %v1590 = vadd.f32 0.0, %v1589
    %v1591 = vpop.f32.mrb[0].mxu0
    %1592 = vdwg.mxu0
    %1593 = vrot.lane.b32.xlu0 %v472, 96
    %v1594 = vpop.permute.xlu0 %1593
    %1595 = vrot.lane.b32.xlu0 %v477, 96
    %v1596 = vpop.permute.xlu0 %1595
    %v1600 = vsel %vm336, %v1396, 0
    %v1603 = vsel %vm336, %v1398, 0
    %1605 = vmatprep.subr.mxu0 0.0
    %1606 = vmatpush1.msra.mxu0 %v1594
    %1607 = vmatprep.subr.mxu0 0.0
    %1608 = vmatpush1.msra.mxu0 %v1596
    %1609 = vmatprep.subr.mxu0 0.0
    %1610 = vmatpush1.msra.mxu0 0.0
    %1611 = vmatprep.subr.mxu0 0.0
    %1612 = vmatpush1.msra.mxu0 0.0
    %1613 = vmatprep.subr.mxu0 0.0
    %1614 = vmatpush1.msra.mxu0 0.0
    %1615 = vmatprep.subr.mxu0 0.0
    %1616 = vmatpush1.msra.mxu0 0.0
    %1617 = vmatprep.subr.mxu0 0.0
    %1618 = vmatpush1.msra.mxu0 0.0
    %1619 = vmatprep.subr.mxu0 0.0
    %1620 = vmatpush1.msra.mxu0 0.0
    %1621 = vmatprep.subr.mxu0 0.0
    %1622 = vmatpush1.msra.mxu0 0.0
    %1623 = vmatprep.subr.mxu0 0.0
    %1624 = vmatpush1.msra.mxu0 0.0
    %1625 = vmatprep.subr.mxu0 0.0
    %1626 = vmatpush1.msra.mxu0 0.0
    %1627 = vmatprep.subr.mxu0 0.0
    %1628 = vmatpush1.msra.mxu0 0.0
    %1629 = vmatprep.subr.mxu0 0.0
    %1630 = vmatpush1.msra.mxu0 0.0
    %1631 = vmatprep.subr.mxu0 0.0
    %1632 = vmatpush1.msra.mxu0 0.0
    %1633 = vmatprep.subr.mxu0 0.0
    %1634 = vmatpush1.msra.mxu0 0.0
    %1635 = vmatprep.subr.mxu0 0.0
    %1636 = vmatpush1.msra.mxu0 0.0
    %1637 = vmatprep.subr.mxu0 0.0
    %1638 = vmatpush1.msra.mxu0 0.0
    %1639 = vmatprep.subr.mxu0 0.0
    %1640 = vmatpush1.msra.mxu0 0.0
    %1641 = vmatprep.subr.mxu0 0.0
    %1642 = vmatpush1.msra.mxu0 0.0
    %1643 = vmatprep.subr.mxu0 0.0
    %1644 = vmatpush1.msra.mxu0 0.0
    %1645 = vmatprep.subr.mxu0 0.0
    %1646 = vmatpush1.msra.mxu0 0.0
    %1647 = vmatprep.subr.mxu0 0.0
    %1648 = vmatpush1.msra.mxu0 0.0
    %1649 = vmatprep.subr.mxu0 0.0
    %1650 = vmatpush1.msra.mxu0 0.0
    %1651 = vmatprep.subr.mxu0 0.0
    %1652 = vmatpush1.msra.mxu0 0.0
    %1653 = vmatprep.subr.mxu0 0.0
    %1654 = vmatpush1.msra.mxu0 0.0
    %1655 = vmatprep.subr.mxu0 0.0
    %1656 = vmatpush1.msra.mxu0 0.0
    %1657 = vmatprep.subr.mxu0 0.0
    %1658 = vmatpush1.msra.mxu0 0.0
    %1659 = vmatprep.subr.mxu0 0.0
    %1660 = vmatpush1.msra.mxu0 0.0
    %1661 = vmatprep.subr.mxu0 0.0
    %1662 = vmatpush1.msra.mxu0 0.0
    %1663 = vmatprep.subr.mxu0 0.0
    %1664 = vmatpush1.msra.mxu0 0.0
    %1665 = vmatprep.subr.mxu0 0.0
    %1666 = vmatpush1.msra.mxu0 0.0
    %1667 = vmatprep.subr.mxu0 0.0
    %1668 = vmatpush1.msra.mxu0 0.0
    %1669 = vmatprep.mubr.f32.mxu0 0.0
    %1670 = vmatmul.mubr.f32.gmra.mrb[0].mxu0 %v1600
    %v1671 = vpop.f32.mrb[0].mxu0
    %v1672 = vadd.f32 0.0, %v1671
    %v1673 = vpop.f32.mrb[0].mxu0
    %1674 = vmatprep.mubr.f32.mxu0 0.0
    %1675 = vmatmul.mubr.f32.gmra.mrb[0].mxu0 %v1603
    %v1676 = vpop.f32.mrb[0].mxu0
    %v1677 = vadd.f32 0.0, %v1676
    %v1678 = vpop.f32.mrb[0].mxu0
    %1679 = vdwg.mxu0
    %1680 = vrot.lane.b32.xlu0 %v482, 96
    %v1681 = vpop.permute.xlu0 %1680
    %1682 = vrot.lane.b32.xlu0 %v487, 96
    %v1683 = vpop.permute.xlu0 %1682
    %v1687 = vsel %vm336, %v1400, 0
    %v1690 = vsel %vm336, %v1402, 0
    %1692 = vmatprep.subr.mxu0 0.0
    %1693 = vmatpush1.msra.mxu0 %v1681
    %1694 = vmatprep.subr.mxu0 0.0
    %1695 = vmatpush1.msra.mxu0 %v1683
    %1696 = vmatprep.subr.mxu0 0.0
    %1697 = vmatpush1.msra.mxu0 0.0
    %1698 = vmatprep.subr.mxu0 0.0
    %1699 = vmatpush1.msra.mxu0 0.0
    %1700 = vmatprep.subr.mxu0 0.0
    %1701 = vmatpush1.msra.mxu0 0.0
    %1702 = vmatprep.subr.mxu0 0.0
    %1703 = vmatpush1.msra.mxu0 0.0
    %1704 = vmatprep.subr.mxu0 0.0
    %1705 = vmatpush1.msra.mxu0 0.0
    %1706 = vmatprep.subr.mxu0 0.0
    %1707 = vmatpush1.msra.mxu0 0.0
    %1708 = vmatprep.subr.mxu0 0.0
    %1709 = vmatpush1.msra.mxu0 0.0
    %1710 = vmatprep.subr.mxu0 0.0
    %1711 = vmatpush1.msra.mxu0 0.0
    %1712 = vmatprep.subr.mxu0 0.0
    %1713 = vmatpush1.msra.mxu0 0.0
    %1714 = vmatprep.subr.mxu0 0.0
    %1715 = vmatpush1.msra.mxu0 0.0
    %1716 = vmatprep.subr.mxu0 0.0
    %1717 = vmatpush1.msra.mxu0 0.0
    %1718 = vmatprep.subr.mxu0 0.0
    %1719 = vmatpush1.msra.mxu0 0.0
    %1720 = vmatprep.subr.mxu0 0.0
    %1721 = vmatpush1.msra.mxu0 0.0
    %1722 = vmatprep.subr.mxu0 0.0
    %1723 = vmatpush1.msra.mxu0 0.0
    %1724 = vmatprep.subr.mxu0 0.0
    %1725 = vmatpush1.msra.mxu0 0.0
    %1726 = vmatprep.subr.mxu0 0.0
    %1727 = vmatpush1.msra.mxu0 0.0
    %1728 = vmatprep.subr.mxu0 0.0
    %1729 = vmatpush1.msra.mxu0 0.0
    %1730 = vmatprep.subr.mxu0 0.0
    %1731 = vmatpush1.msra.mxu0 0.0
    %1732 = vmatprep.subr.mxu0 0.0
    %1733 = vmatpush1.msra.mxu0 0.0
    %1734 = vmatprep.subr.mxu0 0.0
    %1735 = vmatpush1.msra.mxu0 0.0
    %1736 = vmatprep.subr.mxu0 0.0
    %1737 = vmatpush1.msra.mxu0 0.0
    %1738 = vmatprep.subr.mxu0 0.0
    %1739 = vmatpush1.msra.mxu0 0.0
    %1740 = vmatprep.subr.mxu0 0.0
    %1741 = vmatpush1.msra.mxu0 0.0
    %1742 = vmatprep.subr.mxu0 0.0
    %1743 = vmatpush1.msra.mxu0 0.0
    %1744 = vmatprep.subr.mxu0 0.0
    %1745 = vmatpush1.msra.mxu0 0.0
    %1746 = vmatprep.subr.mxu0 0.0
    %1747 = vmatpush1.msra.mxu0 0.0
    %1748 = vmatprep.subr.mxu0 0.0
    %1749 = vmatpush1.msra.mxu0 0.0
    %1750 = vmatprep.subr.mxu0 0.0
    %1751 = vmatpush1.msra.mxu0 0.0
    %1752 = vmatprep.subr.mxu0 0.0
    %1753 = vmatpush1.msra.mxu0 0.0
    %1754 = vmatprep.subr.mxu0 0.0
    %1755 = vmatpush1.msra.mxu0 0.0
    %1756 = vmatprep.mubr.f32.mxu0 0.0
    %1757 = vmatmul.mubr.f32.gmra.mrb[0].mxu0 %v1687
    %v1758 = vpop.f32.mrb[0].mxu0
    %v1759 = vadd.f32 0.0, %v1758
    %v1760 = vpop.f32.mrb[0].mxu0
    %1761 = vmatprep.mubr.f32.mxu0 0.0
    %1762 = vmatmul.mubr.f32.gmra.mrb[0].mxu0 %v1690
    %v1763 = vpop.f32.mrb[0].mxu0
    %v1764 = vadd.f32 0.0, %v1763
    %v1765 = vpop.f32.mrb[0].mxu0
    %1766 = vdwg.mxu0
    %1767 = vrot.lane.b32.xlu0 %v492, 96
    %v1768 = vpop.permute.xlu0 %1767
    %1769 = vrot.lane.b32.xlu0 %v497, 96
    %v1770 = vpop.permute.xlu0 %1769
    %v1774 = vsel %vm336, %v1404, 0
    %v1777 = vsel %vm336, %v1406, 0
    %1779 = vmatprep.subr.mxu0 0.0
    %1780 = vmatpush1.msra.mxu0 %v1768
    %1781 = vmatprep.subr.mxu0 0.0
    %1782 = vmatpush1.msra.mxu0 %v1770
    %1783 = vmatprep.subr.mxu0 0.0
    %1784 = vmatpush1.msra.mxu0 0.0
    %1785 = vmatprep.subr.mxu0 0.0
    %1786 = vmatpush1.msra.mxu0 0.0
    %1787 = vmatprep.subr.mxu0 0.0
    %1788 = vmatpush1.msra.mxu0 0.0
    %1789 = vmatprep.subr.mxu0 0.0
    %1790 = vmatpush1.msra.mxu0 0.0
    %1791 = vmatprep.subr.mxu0 0.0
    %1792 = vmatpush1.msra.mxu0 0.0
    %1793 = vmatprep.subr.mxu0 0.0
    %1794 = vmatpush1.msra.mxu0 0.0
    %1795 = vmatprep.subr.mxu0 0.0
    %1796 = vmatpush1.msra.mxu0 0.0
    %1797 = vmatprep.subr.mxu0 0.0
    %1798 = vmatpush1.msra.mxu0 0.0
    %1799 = vmatprep.subr.mxu0 0.0
    %1800 = vmatpush1.msra.mxu0 0.0
    %1801 = vmatprep.subr.mxu0 0.0
    %1802 = vmatpush1.msra.mxu0 0.0
    %1803 = vmatprep.subr.mxu0 0.0
    %1804 = vmatpush1.msra.mxu0 0.0
    %1805 = vmatprep.subr.mxu0 0.0
    %1806 = vmatpush1.msra.mxu0 0.0
    %1807 = vmatprep.subr.mxu0 0.0
    %1808 = vmatpush1.msra.mxu0 0.0
    %1809 = vmatprep.subr.mxu0 0.0
    %1810 = vmatpush1.msra.mxu0 0.0
    %1811 = vmatprep.subr.mxu0 0.0
    %1812 = vmatpush1.msra.mxu0 0.0
    %1813 = vmatprep.subr.mxu0 0.0
    %1814 = vmatpush1.msra.mxu0 0.0
    %1815 = vmatprep.subr.mxu0 0.0
    %1816 = vmatpush1.msra.mxu0 0.0
    %1817 = vmatprep.subr.mxu0 0.0
    %1818 = vmatpush1.msra.mxu0 0.0
    %1819 = vmatprep.subr.mxu0 0.0
    %1820 = vmatpush1.msra.mxu0 0.0
    %1821 = vmatprep.subr.mxu0 0.0
    %1822 = vmatpush1.msra.mxu0 0.0
    %1823 = vmatprep.subr.mxu0 0.0
    %1824 = vmatpush1.msra.mxu0 0.0
    %1825 = vmatprep.subr.mxu0 0.0
    %1826 = vmatpush1.msra.mxu0 0.0
    %1827 = vmatprep.subr.mxu0 0.0
    %1828 = vmatpush1.msra.mxu0 0.0
    %1829 = vmatprep.subr.mxu0 0.0
    %1830 = vmatpush1.msra.mxu0 0.0
    %1831 = vmatprep.subr.mxu0 0.0
    %1832 = vmatpush1.msra.mxu0 0.0
    %1833 = vmatprep.subr.mxu0 0.0
    %1834 = vmatpush1.msra.mxu0 0.0
    %1835 = vmatprep.subr.mxu0 0.0
    %1836 = vmatpush1.msra.mxu0 0.0
    %1837 = vmatprep.subr.mxu0 0.0
    %1838 = vmatpush1.msra.mxu0 0.0
    %1839 = vmatprep.subr.mxu0 0.0
    %1840 = vmatpush1.msra.mxu0 0.0
    %1841 = vmatprep.subr.mxu0 0.0
    %1842 = vmatpush1.msra.mxu0 0.0
    %1843 = vmatprep.mubr.f32.mxu0 0.0
    %1844 = vmatmul.mubr.f32.gmra.mrb[0].mxu0 %v1774
    %v1845 = vpop.f32.mrb[0].mxu0
    %v1846 = vadd.f32 0.0, %v1845
    %v1847 = vpop.f32.mrb[0].mxu0
    %1848 = vmatprep.mubr.f32.mxu0 0.0
    %1849 = vmatmul.mubr.f32.gmra.mrb[0].mxu0 %v1777
    %v1850 = vpop.f32.mrb[0].mxu0
    %v1851 = vadd.f32 0.0, %v1850
    %v1852 = vpop.f32.mrb[0].mxu0
    %1853 = vdwg.mxu0
    %1854 = vrot.lane.b32.xlu0 %v502, 96
    %v1855 = vpop.permute.xlu0 %1854
    %1856 = vrot.lane.b32.xlu0 %v507, 96
    %v1857 = vpop.permute.xlu0 %1856
    %v1861 = vsel %vm336, %v1408, 0
    %v1864 = vsel %vm336, %v1410, 0
    %1866 = vmatprep.subr.mxu0 0.0
    %1867 = vmatpush1.msra.mxu0 %v1855
    %1868 = vmatprep.subr.mxu0 0.0
    %1869 = vmatpush1.msra.mxu0 %v1857
    %1870 = vmatprep.subr.mxu0 0.0
    %1871 = vmatpush1.msra.mxu0 0.0
    %1872 = vmatprep.subr.mxu0 0.0
    %1873 = vmatpush1.msra.mxu0 0.0
    %1874 = vmatprep.subr.mxu0 0.0
    %1875 = vmatpush1.msra.mxu0 0.0
    %1876 = vmatprep.subr.mxu0 0.0
    %1877 = vmatpush1.msra.mxu0 0.0
    %1878 = vmatprep.subr.mxu0 0.0
    %1879 = vmatpush1.msra.mxu0 0.0
    %1880 = vmatprep.subr.mxu0 0.0
    %1881 = vmatpush1.msra.mxu0 0.0
    %1882 = vmatprep.subr.mxu0 0.0
    %1883 = vmatpush1.msra.mxu0 0.0
    %1884 = vmatprep.subr.mxu0 0.0
    %1885 = vmatpush1.msra.mxu0 0.0
    %1886 = vmatprep.subr.mxu0 0.0
    %1887 = vmatpush1.msra.mxu0 0.0
    %1888 = vmatprep.subr.mxu0 0.0
    %1889 = vmatpush1.msra.mxu0 0.0
    %1890 = vmatprep.subr.mxu0 0.0
    %1891 = vmatpush1.msra.mxu0 0.0
    %1892 = vmatprep.subr.mxu0 0.0
    %1893 = vmatpush1.msra.mxu0 0.0
    %1894 = vmatprep.subr.mxu0 0.0
    %1895 = vmatpush1.msra.mxu0 0.0
    %1896 = vmatprep.subr.mxu0 0.0
    %1897 = vmatpush1.msra.mxu0 0.0
    %1898 = vmatprep.subr.mxu0 0.0
    %1899 = vmatpush1.msra.mxu0 0.0
    %1900 = vmatprep.subr.mxu0 0.0
    %1901 = vmatpush1.msra.mxu0 0.0
    %1902 = vmatprep.subr.mxu0 0.0
    %1903 = vmatpush1.msra.mxu0 0.0
    %1904 = vmatprep.subr.mxu0 0.0
    %1905 = vmatpush1.msra.mxu0 0.0
    %1906 = vmatprep.subr.mxu0 0.0
    %1907 = vmatpush1.msra.mxu0 0.0
    %1908 = vmatprep.subr.mxu0 0.0
    %1909 = vmatpush1.msra.mxu0 0.0
    %1910 = vmatprep.subr.mxu0 0.0
    %1911 = vmatpush1.msra.mxu0 0.0
    %1912 = vmatprep.subr.mxu0 0.0
    %1913 = vmatpush1.msra.mxu0 0.0
    %1914 = vmatprep.subr.mxu0 0.0
    %1915 = vmatpush1.msra.mxu0 0.0
    %1916 = vmatprep.subr.mxu0 0.0
    %1917 = vmatpush1.msra.mxu0 0.0
    %1918 = vmatprep.subr.mxu0 0.0
    %1919 = vmatpush1.msra.mxu0 0.0
    %1920 = vmatprep.subr.mxu0 0.0
    %1921 = vmatpush1.msra.mxu0 0.0
    %1922 = vmatprep.subr.mxu0 0.0
    %1923 = vmatpush1.msra.mxu0 0.0
    %1924 = vmatprep.subr.mxu0 0.0
    %1925 = vmatpush1.msra.mxu0 0.0
    %1926 = vmatprep.subr.mxu0 0.0
    %1927 = vmatpush1.msra.mxu0 0.0
    %1928 = vmatprep.subr.mxu0 0.0
    %1929 = vmatpush1.msra.mxu0 0.0
    %1930 = vmatprep.mubr.f32.mxu0 0.0
    %1931 = vmatmul.mubr.f32.gmra.mrb[0].mxu0 %v1861
    %v1932 = vpop.f32.mrb[0].mxu0
    %v1933 = vadd.f32 0.0, %v1932
    %v1934 = vpop.f32.mrb[0].mxu0
    %1935 = vmatprep.mubr.f32.mxu0 0.0
    %1936 = vmatmul.mubr.f32.gmra.mrb[0].mxu0 %v1864
    %v1937 = vpop.f32.mrb[0].mxu0
    %v1938 = vadd.f32 0.0, %v1937
    %v1939 = vpop.f32.mrb[0].mxu0
    %1940 = vdwg.mxu0
    %1941 = vrot.lane.b32.xlu0 %v512, 96
    %v1942 = vpop.permute.xlu0 %1941
    %1943 = vrot.lane.b32.xlu0 %v517, 96
    %v1944 = vpop.permute.xlu0 %1943
    %v1948 = vsel %vm336, %v1412, 0
    %v1951 = vsel %vm336, %v1414, 0
    %1953 = vmatprep.subr.mxu0 0.0
    %1954 = vmatpush1.msra.mxu0 %v1942
    %1955 = vmatprep.subr.mxu0 0.0
    %1956 = vmatpush1.msra.mxu0 %v1944
    %1957 = vmatprep.subr.mxu0 0.0
    %1958 = vmatpush1.msra.mxu0 0.0
    %1959 = vmatprep.subr.mxu0 0.0
    %1960 = vmatpush1.msra.mxu0 0.0
    %1961 = vmatprep.subr.mxu0 0.0
    %1962 = vmatpush1.msra.mxu0 0.0
    %1963 = vmatprep.subr.mxu0 0.0
    %1964 = vmatpush1.msra.mxu0 0.0
    %1965 = vmatprep.subr.mxu0 0.0
    %1966 = vmatpush1.msra.mxu0 0.0
    %1967 = vmatprep.subr.mxu0 0.0
    %1968 = vmatpush1.msra.mxu0 0.0
    %1969 = vmatprep.subr.mxu0 0.0
    %1970 = vmatpush1.msra.mxu0 0.0
    %1971 = vmatprep.subr.mxu0 0.0
    %1972 = vmatpush1.msra.mxu0 0.0
    %1973 = vmatprep.subr.mxu0 0.0
    %1974 = vmatpush1.msra.mxu0 0.0
    %1975 = vmatprep.subr.mxu0 0.0
    %1976 = vmatpush1.msra.mxu0 0.0
    %1977 = vmatprep.subr.mxu0 0.0
    %1978 = vmatpush1.msra.mxu0 0.0
    %1979 = vmatprep.subr.mxu0 0.0
    %1980 = vmatpush1.msra.mxu0 0.0
    %1981 = vmatprep.subr.mxu0 0.0
    %1982 = vmatpush1.msra.mxu0 0.0
    %1983 = vmatprep.subr.mxu0 0.0
    %1984 = vmatpush1.msra.mxu0 0.0
    %1985 = vmatprep.subr.mxu0 0.0
    %1986 = vmatpush1.msra.mxu0 0.0
    %1987 = vmatprep.subr.mxu0 0.0
    %1988 = vmatpush1.msra.mxu0 0.0
    %1989 = vmatprep.subr.mxu0 0.0
    %1990 = vmatpush1.msra.mxu0 0.0
    %1991 = vmatprep.subr.mxu0 0.0
    %1992 = vmatpush1.msra.mxu0 0.0
    %1993 = vmatprep.subr.mxu0 0.0
    %1994 = vmatpush1.msra.mxu0 0.0
    %1995 = vmatprep.subr.mxu0 0.0
    %1996 = vmatpush1.msra.mxu0 0.0
    %1997 = vmatprep.subr.mxu0 0.0
    %1998 = vmatpush1.msra.mxu0 0.0
    %1999 = vmatprep.subr.mxu0 0.0
    %2000 = vmatpush1.msra.mxu0 0.0
    %2001 = vmatprep.subr.mxu0 0.0
    %2002 = vmatpush1.msra.mxu0 0.0
    %2003 = vmatprep.subr.mxu0 0.0
    %2004 = vmatpush1.msra.mxu0 0.0
    %2005 = vmatprep.subr.mxu0 0.0
    %2006 = vmatpush1.msra.mxu0 0.0
    %2007 = vmatprep.subr.mxu0 0.0
    %2008 = vmatpush1.msra.mxu0 0.0
    %2009 = vmatprep.subr.mxu0 0.0
    %2010 = vmatpush1.msra.mxu0 0.0
    %2011 = vmatprep.subr.mxu0 0.0
    %2012 = vmatpush1.msra.mxu0 0.0
    %2013 = vmatprep.subr.mxu0 0.0
    %2014 = vmatpush1.msra.mxu0 0.0
    %2015 = vmatprep.subr.mxu0 0.0
    %2016 = vmatpush1.msra.mxu0 0.0
    %2017 = vmatprep.mubr.f32.mxu0 0.0
    %2018 = vmatmul.mubr.f32.gmra.mrb[0].mxu0 %v1948
    %v2019 = vpop.f32.mrb[0].mxu0
    %v2020 = vadd.f32 0.0, %v2019
    %v2021 = vpop.f32.mrb[0].mxu0
    %2022 = vmatprep.mubr.f32.mxu0 0.0
    %2023 = vmatmul.mubr.f32.gmra.mrb[0].mxu0 %v1951
    %v2024 = vpop.f32.mrb[0].mxu0
    %v2025 = vadd.f32 0.0, %v2024
    %v2026 = vpop.f32.mrb[0].mxu0
    %2027 = vdwg.mxu0
    %2028 = vrot.lane.b32.xlu0 %v522, 96
    %v2029 = vpop.permute.xlu0 %2028
    %2030 = vrot.lane.b32.xlu0 %v527, 96
    %v2031 = vpop.permute.xlu0 %2030
    %v2035 = vsel %vm336, %v1416, 0
    %v2038 = vsel %vm336, %v1418, 0
    %2040 = vmatprep.subr.mxu0 0.0
    %2041 = vmatpush1.msra.mxu0 %v2029
    %2042 = vmatprep.subr.mxu0 0.0
    %2043 = vmatpush1.msra.mxu0 %v2031
    %2044 = vmatprep.subr.mxu0 0.0
    %2045 = vmatpush1.msra.mxu0 0.0
    %2046 = vmatprep.subr.mxu0 0.0
    %2047 = vmatpush1.msra.mxu0 0.0
    %2048 = vmatprep.subr.mxu0 0.0
    %2049 = vmatpush1.msra.mxu0 0.0
    %2050 = vmatprep.subr.mxu0 0.0
    %2051 = vmatpush1.msra.mxu0 0.0
    %2052 = vmatprep.subr.mxu0 0.0
    %2053 = vmatpush1.msra.mxu0 0.0
    %2054 = vmatprep.subr.mxu0 0.0
    %2055 = vmatpush1.msra.mxu0 0.0
    %2056 = vmatprep.subr.mxu0 0.0
    %2057 = vmatpush1.msra.mxu0 0.0
    %2058 = vmatprep.subr.mxu0 0.0
    %2059 = vmatpush1.msra.mxu0 0.0
    %2060 = vmatprep.subr.mxu0 0.0
    %2061 = vmatpush1.msra.mxu0 0.0
    %2062 = vmatprep.subr.mxu0 0.0
    %2063 = vmatpush1.msra.mxu0 0.0
    %2064 = vmatprep.subr.mxu0 0.0
    %2065 = vmatpush1.msra.mxu0 0.0
    %2066 = vmatprep.subr.mxu0 0.0
    %2067 = vmatpush1.msra.mxu0 0.0
    %2068 = vmatprep.subr.mxu0 0.0
    %2069 = vmatpush1.msra.mxu0 0.0
    %2070 = vmatprep.subr.mxu0 0.0
    %2071 = vmatpush1.msra.mxu0 0.0
    %2072 = vmatprep.subr.mxu0 0.0
    %2073 = vmatpush1.msra.mxu0 0.0
    %2074 = vmatprep.subr.mxu0 0.0
    %2075 = vmatpush1.msra.mxu0 0.0
    %2076 = vmatprep.subr.mxu0 0.0
    %2077 = vmatpush1.msra.mxu0 0.0
    %2078 = vmatprep.subr.mxu0 0.0
    %2079 = vmatpush1.msra.mxu0 0.0
    %2080 = vmatprep.subr.mxu0 0.0
    %2081 = vmatpush1.msra.mxu0 0.0
    %2082 = vmatprep.subr.mxu0 0.0
    %2083 = vmatpush1.msra.mxu0 0.0
    %2084 = vmatprep.subr.mxu0 0.0
    %2085 = vmatpush1.msra.mxu0 0.0
    %2086 = vmatprep.subr.mxu0 0.0
    %2087 = vmatpush1.msra.mxu0 0.0
    %2088 = vmatprep.subr.mxu0 0.0
    %2089 = vmatpush1.msra.mxu0 0.0
    %2090 = vmatprep.subr.mxu0 0.0
    %2091 = vmatpush1.msra.mxu0 0.0
    %2092 = vmatprep.subr.mxu0 0.0
    %2093 = vmatpush1.msra.mxu0 0.0
    %2094 = vmatprep.subr.mxu0 0.0
    %2095 = vmatpush1.msra.mxu0 0.0
    %2096 = vmatprep.subr.mxu0 0.0
    %2097 = vmatpush1.msra.mxu0 0.0
    %2098 = vmatprep.subr.mxu0 0.0
    %2099 = vmatpush1.msra.mxu0 0.0
    %2100 = vmatprep.subr.mxu0 0.0
    %2101 = vmatpush1.msra.mxu0 0.0
    %2102 = vmatprep.subr.mxu0 0.0
    %2103 = vmatpush1.msra.mxu0 0.0
    %2104 = vmatprep.mubr.f32.mxu0 0.0
    %2105 = vmatmul.mubr.f32.gmra.mrb[0].mxu0 %v2035
    %v2106 = vpop.f32.mrb[0].mxu0
    %v2107 = vadd.f32 0.0, %v2106
    %v2108 = vpop.f32.mrb[0].mxu0
    %2109 = vmatprep.mubr.f32.mxu0 0.0
    %2110 = vmatmul.mubr.f32.gmra.mrb[0].mxu0 %v2038
    %v2111 = vpop.f32.mrb[0].mxu0
    %v2112 = vadd.f32 0.0, %v2111
    %v2113 = vpop.f32.mrb[0].mxu0
    %2114 = vdwg.mxu0
    %2115 = vrot.lane.b32.xlu0 %v452, 120
    %v2116 = vpop.permute.xlu0 %2115
    %2117 = vrot.lane.b32.xlu0 %v457, 120
    %v2118 = vpop.permute.xlu0 %2117
    %2119 = vrot.lane.b32.xlu0 %v452, 104
    %v2120 = vpop.permute.xlu0 %2119
    %2121 = vrot.lane.b32.xlu0 %v457, 104
    %v2122 = vpop.permute.xlu0 %2121
    %v2123 = vsel %vm536, %v2116, 0
    %v2125 = vsel %vm536, %v2118, 0
    %v2127 = vsel %vm536, %v2120, 0
    %v2129 = vsel %vm536, %v2122, 0
    %2131 = vmatprep.subr.mxu0 0.0
    %2132 = vmatpush1.xpose.msra.mxu0 %v2127
    %2133 = vmatprep.subr.mxu0 0.0
    %2134 = vmatpush1.xpose.msra.mxu0 %v2129
    %2135 = vmatprep.subr.mxu0 0.0
    %2136 = vmatpush1.xpose.msra.mxu0 0.0
    %2137 = vmatprep.subr.mxu0 0.0
    %2138 = vmatpush1.xpose.msra.mxu0 0.0
    %2139 = vmatprep.subr.mxu0 0.0
    %2140 = vmatpush1.xpose.msra.mxu0 0.0
    %2141 = vmatprep.subr.mxu0 0.0
    %2142 = vmatpush1.xpose.msra.mxu0 0.0
    %2143 = vmatprep.subr.mxu0 0.0
    %2144 = vmatpush1.xpose.msra.mxu0 0.0
    %2145 = vmatprep.subr.mxu0 0.0
    %2146 = vmatpush1.xpose.msra.mxu0 0.0
    %2147 = vmatprep.subr.mxu0 0.0
    %2148 = vmatpush1.xpose.msra.mxu0 0.0
    %2149 = vmatprep.subr.mxu0 0.0
    %2150 = vmatpush1.xpose.msra.mxu0 0.0
    %2151 = vmatprep.subr.mxu0 0.0
    %2152 = vmatpush1.xpose.msra.mxu0 0.0
    %2153 = vmatprep.subr.mxu0 0.0
    %2154 = vmatpush1.xpose.msra.mxu0 0.0
    %2155 = vmatprep.subr.mxu0 0.0
    %2156 = vmatpush1.xpose.msra.mxu0 0.0
    %2157 = vmatprep.subr.mxu0 0.0
    %2158 = vmatpush1.xpose.msra.mxu0 0.0
    %2159 = vmatprep.subr.mxu0 0.0
    %2160 = vmatpush1.xpose.msra.mxu0 0.0
    %2161 = vmatprep.subr.mxu0 0.0
    %2162 = vmatpush1.xpose.msra.mxu0 0.0
    %2163 = vmatprep.subr.mxu0 0.0
    %2164 = vmatpush1.xpose.msra.mxu0 0.0
    %2165 = vmatprep.subr.mxu0 0.0
    %2166 = vmatpush1.xpose.msra.mxu0 0.0
    %2167 = vmatprep.subr.mxu0 0.0
    %2168 = vmatpush1.xpose.msra.mxu0 0.0
    %2169 = vmatprep.subr.mxu0 0.0
    %2170 = vmatpush1.xpose.msra.mxu0 0.0
    %2171 = vmatprep.subr.mxu0 0.0
    %2172 = vmatpush1.xpose.msra.mxu0 0.0
    %2173 = vmatprep.subr.mxu0 0.0
    %2174 = vmatpush1.xpose.msra.mxu0 0.0
    %2175 = vmatprep.subr.mxu0 0.0
    %2176 = vmatpush1.xpose.msra.mxu0 0.0
    %2177 = vmatprep.subr.mxu0 0.0
    %2178 = vmatpush1.xpose.msra.mxu0 0.0
    %2179 = vmatprep.subr.mxu0 0.0
    %2180 = vmatpush1.xpose.msra.mxu0 0.0
    %2181 = vmatprep.subr.mxu0 0.0
    %2182 = vmatpush1.xpose.msra.mxu0 0.0
    %2183 = vmatprep.subr.mxu0 0.0
    %2184 = vmatpush1.xpose.msra.mxu0 0.0
    %2185 = vmatprep.subr.mxu0 0.0
    %2186 = vmatpush1.xpose.msra.mxu0 0.0
    %2187 = vmatprep.subr.mxu0 0.0
    %2188 = vmatpush1.xpose.msra.mxu0 0.0
    %2189 = vmatprep.subr.mxu0 0.0
    %2190 = vmatpush1.xpose.msra.mxu0 0.0
    %2191 = vmatprep.subr.mxu0 0.0
    %2192 = vmatpush1.xpose.msra.mxu0 0.0
    %2193 = vmatprep.subr.mxu0 0.0
    %2194 = vmatpush1.xpose.msra.mxu0 0.0
    %2195 = vmatprep.mubr.f32.mxu0 0.0
    %2196 = vmatmul.mubr.f32.gmra.mrb[0].mxu0 %v2123
    %v2197 = vpop.f32.mrb[0].mxu0
    %v2198 = vadd.f32 0.0, %v2197
    %v2199 = vpop.f32.mrb[0].mxu0
    %2200 = vmatprep.mubr.f32.mxu0 0.0
    %2201 = vmatmul.mubr.f32.gmra.mrb[0].mxu0 %v2125
    %v2202 = vpop.f32.mrb[0].mxu0
    %v2203 = vadd.f32 0.0, %v2202
    %v2204 = vpop.f32.mrb[0].mxu0
    %2205 = vdwg.mxu0
    %2206 = vrot.lane.b32.xlu0 %v462, 120
    %v2207 = vpop.permute.xlu0 %2206
    %2208 = vrot.lane.b32.xlu0 %v467, 120
    %v2209 = vpop.permute.xlu0 %2208
    %2210 = vrot.lane.b32.xlu0 %v462, 104
    %v2211 = vpop.permute.xlu0 %2210
    %2212 = vrot.lane.b32.xlu0 %v467, 104
    %v2213 = vpop.permute.xlu0 %2212
    %v2214 = vsel %vm536, %v2207, 0
    %v2216 = vsel %vm536, %v2209, 0
    %v2218 = vsel %vm536, %v2211, 0
    %v2220 = vsel %vm536, %v2213, 0
    %2222 = vmatprep.subr.mxu0 0.0
    %2223 = vmatpush1.xpose.msra.mxu0 %v2218
    %2224 = vmatprep.subr.mxu0 0.0
    %2225 = vmatpush1.xpose.msra.mxu0 %v2220
    %2226 = vmatprep.subr.mxu0 0.0
    %2227 = vmatpush1.xpose.msra.mxu0 0.0
    %2228 = vmatprep.subr.mxu0 0.0
    %2229 = vmatpush1.xpose.msra.mxu0 0.0
    %2230 = vmatprep.subr.mxu0 0.0
    %2231 = vmatpush1.xpose.msra.mxu0 0.0
    %2232 = vmatprep.subr.mxu0 0.0
    %2233 = vmatpush1.xpose.msra.mxu0 0.0
    %2234 = vmatprep.subr.mxu0 0.0
    %2235 = vmatpush1.xpose.msra.mxu0 0.0
    %2236 = vmatprep.subr.mxu0 0.0
    %2237 = vmatpush1.xpose.msra.mxu0 0.0
    %2238 = vmatprep.subr.mxu0 0.0
    %2239 = vmatpush1.xpose.msra.mxu0 0.0
    %2240 = vmatprep.subr.mxu0 0.0
    %2241 = vmatpush1.xpose.msra.mxu0 0.0
    %2242 = vmatprep.subr.mxu0 0.0
    %2243 = vmatpush1.xpose.msra.mxu0 0.0
    %2244 = vmatprep.subr.mxu0 0.0
    %2245 = vmatpush1.xpose.msra.mxu0 0.0
    %2246 = vmatprep.subr.mxu0 0.0
    %2247 = vmatpush1.xpose.msra.mxu0 0.0
    %2248 = vmatprep.subr.mxu0 0.0
    %2249 = vmatpush1.xpose.msra.mxu0 0.0
    %2250 = vmatprep.subr.mxu0 0.0
    %2251 = vmatpush1.xpose.msra.mxu0 0.0
    %2252 = vmatprep.subr.mxu0 0.0
    %2253 = vmatpush1.xpose.msra.mxu0 0.0
    %2254 = vmatprep.subr.mxu0 0.0
    %2255 = vmatpush1.xpose.msra.mxu0 0.0
    %2256 = vmatprep.subr.mxu0 0.0
    %2257 = vmatpush1.xpose.msra.mxu0 0.0
    %2258 = vmatprep.subr.mxu0 0.0
    %2259 = vmatpush1.xpose.msra.mxu0 0.0
    %2260 = vmatprep.subr.mxu0 0.0
    %2261 = vmatpush1.xpose.msra.mxu0 0.0
    %2262 = vmatprep.subr.mxu0 0.0
    %2263 = vmatpush1.xpose.msra.mxu0 0.0
    %2264 = vmatprep.subr.mxu0 0.0
    %2265 = vmatpush1.xpose.msra.mxu0 0.0
    %2266 = vmatprep.subr.mxu0 0.0
    %2267 = vmatpush1.xpose.msra.mxu0 0.0
    %2268 = vmatprep.subr.mxu0 0.0
    %2269 = vmatpush1.xpose.msra.mxu0 0.0
    %2270 = vmatprep.subr.mxu0 0.0
    %2271 = vmatpush1.xpose.msra.mxu0 0.0
    %2272 = vmatprep.subr.mxu0 0.0
    %2273 = vmatpush1.xpose.msra.mxu0 0.0
    %2274 = vmatprep.subr.mxu0 0.0
    %2275 = vmatpush1.xpose.msra.mxu0 0.0
    %2276 = vmatprep.subr.mxu0 0.0
    %2277 = vmatpush1.xpose.msra.mxu0 0.0
    %2278 = vmatprep.subr.mxu0 0.0
    %2279 = vmatpush1.xpose.msra.mxu0 0.0
    %2280 = vmatprep.subr.mxu0 0.0
    %2281 = vmatpush1.xpose.msra.mxu0 0.0
    %2282 = vmatprep.subr.mxu0 0.0
    %2283 = vmatpush1.xpose.msra.mxu0 0.0
    %2284 = vmatprep.subr.mxu0 0.0
    %2285 = vmatpush1.xpose.msra.mxu0 0.0
    %2286 = vmatprep.mubr.f32.mxu0 0.0
    %2287 = vmatmul.mubr.f32.gmra.mrb[0].mxu0 %v2214
    %v2288 = vpop.f32.mrb[0].mxu0
    %v2289 = vadd.f32 0.0, %v2288
    %v2290 = vpop.f32.mrb[0].mxu0
    %2291 = vmatprep.mubr.f32.mxu0 0.0
    %2292 = vmatmul.mubr.f32.gmra.mrb[0].mxu0 %v2216
    %v2293 = vpop.f32.mrb[0].mxu0
    %v2294 = vadd.f32 0.0, %v2293
    %v2295 = vpop.f32.mrb[0].mxu0
    %2296 = vdwg.mxu0
    %2297 = vrot.lane.b32.xlu0 %v472, 120
    %v2298 = vpop.permute.xlu0 %2297
    %2299 = vrot.lane.b32.xlu0 %v477, 120
    %v2300 = vpop.permute.xlu0 %2299
    %2301 = vrot.lane.b32.xlu0 %v472, 104
    %v2302 = vpop.permute.xlu0 %2301
    %2303 = vrot.lane.b32.xlu0 %v477, 104
    %v2304 = vpop.permute.xlu0 %2303
    %v2305 = vsel %vm536, %v2298, 0
    %v2307 = vsel %vm536, %v2300, 0
    %v2309 = vsel %vm536, %v2302, 0
    %v2311 = vsel %vm536, %v2304, 0
    %2313 = vmatprep.subr.mxu0 0.0
    %2314 = vmatpush1.xpose.msra.mxu0 %v2309
    %2315 = vmatprep.subr.mxu0 0.0
    %2316 = vmatpush1.xpose.msra.mxu0 %v2311
    %2317 = vmatprep.subr.mxu0 0.0
    %2318 = vmatpush1.xpose.msra.mxu0 0.0
    %2319 = vmatprep.subr.mxu0 0.0
    %2320 = vmatpush1.xpose.msra.mxu0 0.0
    %2321 = vmatprep.subr.mxu0 0.0
    %2322 = vmatpush1.xpose.msra.mxu0 0.0
    %2323 = vmatprep.subr.mxu0 0.0
    %2324 = vmatpush1.xpose.msra.mxu0 0.0
    %2325 = vmatprep.subr.mxu0 0.0
    %2326 = vmatpush1.xpose.msra.mxu0 0.0
    %2327 = vmatprep.subr.mxu0 0.0
    %2328 = vmatpush1.xpose.msra.mxu0 0.0
    %2329 = vmatprep.subr.mxu0 0.0
    %2330 = vmatpush1.xpose.msra.mxu0 0.0
    %2331 = vmatprep.subr.mxu0 0.0
    %2332 = vmatpush1.xpose.msra.mxu0 0.0
    %2333 = vmatprep.subr.mxu0 0.0
    %2334 = vmatpush1.xpose.msra.mxu0 0.0
    %2335 = vmatprep.subr.mxu0 0.0
    %2336 = vmatpush1.xpose.msra.mxu0 0.0
    %2337 = vmatprep.subr.mxu0 0.0
    %2338 = vmatpush1.xpose.msra.mxu0 0.0
    %2339 = vmatprep.subr.mxu0 0.0
    %2340 = vmatpush1.xpose.msra.mxu0 0.0
    %2341 = vmatprep.subr.mxu0 0.0
    %2342 = vmatpush1.xpose.msra.mxu0 0.0
    %2343 = vmatprep.subr.mxu0 0.0
    %2344 = vmatpush1.xpose.msra.mxu0 0.0
    %2345 = vmatprep.subr.mxu0 0.0
    %2346 = vmatpush1.xpose.msra.mxu0 0.0
    %2347 = vmatprep.subr.mxu0 0.0
    %2348 = vmatpush1.xpose.msra.mxu0 0.0
    %2349 = vmatprep.subr.mxu0 0.0
    %2350 = vmatpush1.xpose.msra.mxu0 0.0
    %2351 = vmatprep.subr.mxu0 0.0
    %2352 = vmatpush1.xpose.msra.mxu0 0.0
    %2353 = vmatprep.subr.mxu0 0.0
    %2354 = vmatpush1.xpose.msra.mxu0 0.0
    %2355 = vmatprep.subr.mxu0 0.0
    %2356 = vmatpush1.xpose.msra.mxu0 0.0
    %2357 = vmatprep.subr.mxu0 0.0
    %2358 = vmatpush1.xpose.msra.mxu0 0.0
    %2359 = vmatprep.subr.mxu0 0.0
    %2360 = vmatpush1.xpose.msra.mxu0 0.0
    %2361 = vmatprep.subr.mxu0 0.0
    %2362 = vmatpush1.xpose.msra.mxu0 0.0
    %2363 = vmatprep.subr.mxu0 0.0
    %2364 = vmatpush1.xpose.msra.mxu0 0.0
    %2365 = vmatprep.subr.mxu0 0.0
    %2366 = vmatpush1.xpose.msra.mxu0 0.0
    %2367 = vmatprep.subr.mxu0 0.0
    %2368 = vmatpush1.xpose.msra.mxu0 0.0
    %2369 = vmatprep.subr.mxu0 0.0
    %2370 = vmatpush1.xpose.msra.mxu0 0.0
    %2371 = vmatprep.subr.mxu0 0.0
    %2372 = vmatpush1.xpose.msra.mxu0 0.0
    %2373 = vmatprep.subr.mxu0 0.0
    %2374 = vmatpush1.xpose.msra.mxu0 0.0
    %2375 = vmatprep.subr.mxu0 0.0
    %2376 = vmatpush1.xpose.msra.mxu0 0.0
    %2377 = vmatprep.mubr.f32.mxu0 0.0
    %2378 = vmatmul.mubr.f32.gmra.mrb[0].mxu0 %v2305
    %v2379 = vpop.f32.mrb[0].mxu0
    %v2380 = vadd.f32 0.0, %v2379
    %v2381 = vpop.f32.mrb[0].mxu0
    %2382 = vmatprep.mubr.f32.mxu0 0.0
    %2383 = vmatmul.mubr.f32.gmra.mrb[0].mxu0 %v2307
    %v2384 = vpop.f32.mrb[0].mxu0
    %v2385 = vadd.f32 0.0, %v2384
    %v2386 = vpop.f32.mrb[0].mxu0
    %2387 = vdwg.mxu0
    %2388 = vrot.lane.b32.xlu0 %v482, 120
    %v2389 = vpop.permute.xlu0 %2388
    %2390 = vrot.lane.b32.xlu0 %v487, 120
    %v2391 = vpop.permute.xlu0 %2390
    %2392 = vrot.lane.b32.xlu0 %v482, 104
    %v2393 = vpop.permute.xlu0 %2392
    %2394 = vrot.lane.b32.xlu0 %v487, 104
    %v2395 = vpop.permute.xlu0 %2394
    %v2396 = vsel %vm536, %v2389, 0
    %v2398 = vsel %vm536, %v2391, 0
    %v2400 = vsel %vm536, %v2393, 0
    %v2402 = vsel %vm536, %v2395, 0
    %2404 = vmatprep.subr.mxu0 0.0
    %2405 = vmatpush1.xpose.msra.mxu0 %v2400
    %2406 = vmatprep.subr.mxu0 0.0
    %2407 = vmatpush1.xpose.msra.mxu0 %v2402
    %2408 = vmatprep.subr.mxu0 0.0
    %2409 = vmatpush1.xpose.msra.mxu0 0.0
    %2410 = vmatprep.subr.mxu0 0.0
    %2411 = vmatpush1.xpose.msra.mxu0 0.0
    %2412 = vmatprep.subr.mxu0 0.0
    %2413 = vmatpush1.xpose.msra.mxu0 0.0
    %2414 = vmatprep.subr.mxu0 0.0
    %2415 = vmatpush1.xpose.msra.mxu0 0.0
    %2416 = vmatprep.subr.mxu0 0.0
    %2417 = vmatpush1.xpose.msra.mxu0 0.0
    %2418 = vmatprep.subr.mxu0 0.0
    %2419 = vmatpush1.xpose.msra.mxu0 0.0
    %2420 = vmatprep.subr.mxu0 0.0
    %2421 = vmatpush1.xpose.msra.mxu0 0.0
    %2422 = vmatprep.subr.mxu0 0.0
    %2423 = vmatpush1.xpose.msra.mxu0 0.0
    %2424 = vmatprep.subr.mxu0 0.0
    %2425 = vmatpush1.xpose.msra.mxu0 0.0
    %2426 = vmatprep.subr.mxu0 0.0
    %2427 = vmatpush1.xpose.msra.mxu0 0.0
    %2428 = vmatprep.subr.mxu0 0.0
    %2429 = vmatpush1.xpose.msra.mxu0 0.0
    %2430 = vmatprep.subr.mxu0 0.0
    %2431 = vmatpush1.xpose.msra.mxu0 0.0
    %2432 = vmatprep.subr.mxu0 0.0
    %2433 = vmatpush1.xpose.msra.mxu0 0.0
    %2434 = vmatprep.subr.mxu0 0.0
    %2435 = vmatpush1.xpose.msra.mxu0 0.0
    %2436 = vmatprep.subr.mxu0 0.0
    %2437 = vmatpush1.xpose.msra.mxu0 0.0
    %2438 = vmatprep.subr.mxu0 0.0
    %2439 = vmatpush1.xpose.msra.mxu0 0.0
    %2440 = vmatprep.subr.mxu0 0.0
    %2441 = vmatpush1.xpose.msra.mxu0 0.0
    %2442 = vmatprep.subr.mxu0 0.0
    %2443 = vmatpush1.xpose.msra.mxu0 0.0
    %2444 = vmatprep.subr.mxu0 0.0
    %2445 = vmatpush1.xpose.msra.mxu0 0.0
    %2446 = vmatprep.subr.mxu0 0.0
    %2447 = vmatpush1.xpose.msra.mxu0 0.0
    %2448 = vmatprep.subr.mxu0 0.0
    %2449 = vmatpush1.xpose.msra.mxu0 0.0
    %2450 = vmatprep.subr.mxu0 0.0
    %2451 = vmatpush1.xpose.msra.mxu0 0.0
    %2452 = vmatprep.subr.mxu0 0.0
    %2453 = vmatpush1.xpose.msra.mxu0 0.0
    %2454 = vmatprep.subr.mxu0 0.0
    %2455 = vmatpush1.xpose.msra.mxu0 0.0
    %2456 = vmatprep.subr.mxu0 0.0
    %2457 = vmatpush1.xpose.msra.mxu0 0.0
    %2458 = vmatprep.subr.mxu0 0.0
    %2459 = vmatpush1.xpose.msra.mxu0 0.0
    %2460 = vmatprep.subr.mxu0 0.0
    %2461 = vmatpush1.xpose.msra.mxu0 0.0
    %2462 = vmatprep.subr.mxu0 0.0
    %2463 = vmatpush1.xpose.msra.mxu0 0.0
    %2464 = vmatprep.subr.mxu0 0.0
    %2465 = vmatpush1.xpose.msra.mxu0 0.0
    %2466 = vmatprep.subr.mxu0 0.0
    %2467 = vmatpush1.xpose.msra.mxu0 0.0
    %2468 = vmatprep.mubr.f32.mxu0 0.0
    %2469 = vmatmul.mubr.f32.gmra.mrb[0].mxu0 %v2396
    %v2470 = vpop.f32.mrb[0].mxu0
    %v2471 = vadd.f32 0.0, %v2470
    %v2472 = vpop.f32.mrb[0].mxu0
    %2473 = vmatprep.mubr.f32.mxu0 0.0
    %2474 = vmatmul.mubr.f32.gmra.mrb[0].mxu0 %v2398
    %v2475 = vpop.f32.mrb[0].mxu0
    %v2476 = vadd.f32 0.0, %v2475
    %v2477 = vpop.f32.mrb[0].mxu0
    %2478 = vdwg.mxu0
    %2479 = vrot.lane.b32.xlu0 %v492, 120
    %v2480 = vpop.permute.xlu0 %2479
    %2481 = vrot.lane.b32.xlu0 %v497, 120
    %v2482 = vpop.permute.xlu0 %2481
    %2483 = vrot.lane.b32.xlu0 %v492, 104
    %v2484 = vpop.permute.xlu0 %2483
    %2485 = vrot.lane.b32.xlu0 %v497, 104
    %v2486 = vpop.permute.xlu0 %2485
    %v2487 = vsel %vm536, %v2480, 0
    %v2489 = vsel %vm536, %v2482, 0
    %v2491 = vsel %vm536, %v2484, 0
    %v2493 = vsel %vm536, %v2486, 0
    %2495 = vmatprep.subr.mxu0 0.0
    %2496 = vmatpush1.xpose.msra.mxu0 %v2491
    %2497 = vmatprep.subr.mxu0 0.0
    %2498 = vmatpush1.xpose.msra.mxu0 %v2493
    %2499 = vmatprep.subr.mxu0 0.0
    %2500 = vmatpush1.xpose.msra.mxu0 0.0
    %2501 = vmatprep.subr.mxu0 0.0
    %2502 = vmatpush1.xpose.msra.mxu0 0.0
    %2503 = vmatprep.subr.mxu0 0.0
    %2504 = vmatpush1.xpose.msra.mxu0 0.0
    %2505 = vmatprep.subr.mxu0 0.0
    %2506 = vmatpush1.xpose.msra.mxu0 0.0
    %2507 = vmatprep.subr.mxu0 0.0
    %2508 = vmatpush1.xpose.msra.mxu0 0.0
    %2509 = vmatprep.subr.mxu0 0.0
    %2510 = vmatpush1.xpose.msra.mxu0 0.0
    %2511 = vmatprep.subr.mxu0 0.0
    %2512 = vmatpush1.xpose.msra.mxu0 0.0
    %2513 = vmatprep.subr.mxu0 0.0
    %2514 = vmatpush1.xpose.msra.mxu0 0.0
    %2515 = vmatprep.subr.mxu0 0.0
    %2516 = vmatpush1.xpose.msra.mxu0 0.0
    %2517 = vmatprep.subr.mxu0 0.0
    %2518 = vmatpush1.xpose.msra.mxu0 0.0
    %2519 = vmatprep.subr.mxu0 0.0
    %2520 = vmatpush1.xpose.msra.mxu0 0.0
    %2521 = vmatprep.subr.mxu0 0.0
    %2522 = vmatpush1.xpose.msra.mxu0 0.0
    %2523 = vmatprep.subr.mxu0 0.0
    %2524 = vmatpush1.xpose.msra.mxu0 0.0
    %2525 = vmatprep.subr.mxu0 0.0
    %2526 = vmatpush1.xpose.msra.mxu0 0.0
    %2527 = vmatprep.subr.mxu0 0.0
    %2528 = vmatpush1.xpose.msra.mxu0 0.0
    %2529 = vmatprep.subr.mxu0 0.0
    %2530 = vmatpush1.xpose.msra.mxu0 0.0
    %2531 = vmatprep.subr.mxu0 0.0
    %2532 = vmatpush1.xpose.msra.mxu0 0.0
    %2533 = vmatprep.subr.mxu0 0.0
    %2534 = vmatpush1.xpose.msra.mxu0 0.0
    %2535 = vmatprep.subr.mxu0 0.0
    %2536 = vmatpush1.xpose.msra.mxu0 0.0
    %2537 = vmatprep.subr.mxu0 0.0
    %2538 = vmatpush1.xpose.msra.mxu0 0.0
    %2539 = vmatprep.subr.mxu0 0.0
    %2540 = vmatpush1.xpose.msra.mxu0 0.0
    %2541 = vmatprep.subr.mxu0 0.0
    %2542 = vmatpush1.xpose.msra.mxu0 0.0
    %2543 = vmatprep.subr.mxu0 0.0
    %2544 = vmatpush1.xpose.msra.mxu0 0.0
    %2545 = vmatprep.subr.mxu0 0.0
    %2546 = vmatpush1.xpose.msra.mxu0 0.0
    %2547 = vmatprep.subr.mxu0 0.0
    %2548 = vmatpush1.xpose.msra.mxu0 0.0
    %2549 = vmatprep.subr.mxu0 0.0
    %2550 = vmatpush1.xpose.msra.mxu0 0.0
    %2551 = vmatprep.subr.mxu0 0.0
    %2552 = vmatpush1.xpose.msra.mxu0 0.0
    %2553 = vmatprep.subr.mxu0 0.0
    %2554 = vmatpush1.xpose.msra.mxu0 0.0
    %2555 = vmatprep.subr.mxu0 0.0
    %2556 = vmatpush1.xpose.msra.mxu0 0.0
    %2557 = vmatprep.subr.mxu0 0.0
    %2558 = vmatpush1.xpose.msra.mxu0 0.0
    %2559 = vmatprep.mubr.f32.mxu0 0.0
    %2560 = vmatmul.mubr.f32.gmra.mrb[0].mxu0 %v2487
    %v2561 = vpop.f32.mrb[0].mxu0
    %v2562 = vadd.f32 0.0, %v2561
    %v2563 = vpop.f32.mrb[0].mxu0
    %2564 = vmatprep.mubr.f32.mxu0 0.0
    %2565 = vmatmul.mubr.f32.gmra.mrb[0].mxu0 %v2489
    %v2566 = vpop.f32.mrb[0].mxu0
    %v2567 = vadd.f32 0.0, %v2566
    %v2568 = vpop.f32.mrb[0].mxu0
    %2569 = vdwg.mxu0
    %2570 = vrot.lane.b32.xlu0 %v502, 120
    %v2571 = vpop.permute.xlu0 %2570
    %2572 = vrot.lane.b32.xlu0 %v507, 120
    %v2573 = vpop.permute.xlu0 %2572
    %2574 = vrot.lane.b32.xlu0 %v502, 104
    %v2575 = vpop.permute.xlu0 %2574
    %2576 = vrot.lane.b32.xlu0 %v507, 104
    %v2577 = vpop.permute.xlu0 %2576
    %v2578 = vsel %vm536, %v2571, 0
    %v2580 = vsel %vm536, %v2573, 0
    %v2582 = vsel %vm536, %v2575, 0
    %v2584 = vsel %vm536, %v2577, 0
    %2586 = vmatprep.subr.mxu0 0.0
    %2587 = vmatpush1.xpose.msra.mxu0 %v2582
    %2588 = vmatprep.subr.mxu0 0.0
    %2589 = vmatpush1.xpose.msra.mxu0 %v2584
    %2590 = vmatprep.subr.mxu0 0.0
    %2591 = vmatpush1.xpose.msra.mxu0 0.0
    %2592 = vmatprep.subr.mxu0 0.0
    %2593 = vmatpush1.xpose.msra.mxu0 0.0
    %2594 = vmatprep.subr.mxu0 0.0
    %2595 = vmatpush1.xpose.msra.mxu0 0.0
    %2596 = vmatprep.subr.mxu0 0.0
    %2597 = vmatpush1.xpose.msra.mxu0 0.0
    %2598 = vmatprep.subr.mxu0 0.0
    %2599 = vmatpush1.xpose.msra.mxu0 0.0
    %2600 = vmatprep.subr.mxu0 0.0
    %2601 = vmatpush1.xpose.msra.mxu0 0.0
    %2602 = vmatprep.subr.mxu0 0.0
    %2603 = vmatpush1.xpose.msra.mxu0 0.0
    %2604 = vmatprep.subr.mxu0 0.0
    %2605 = vmatpush1.xpose.msra.mxu0 0.0
    %2606 = vmatprep.subr.mxu0 0.0
    %2607 = vmatpush1.xpose.msra.mxu0 0.0
    %2608 = vmatprep.subr.mxu0 0.0
    %2609 = vmatpush1.xpose.msra.mxu0 0.0
    %2610 = vmatprep.subr.mxu0 0.0
    %2611 = vmatpush1.xpose.msra.mxu0 0.0
    %2612 = vmatprep.subr.mxu0 0.0
    %2613 = vmatpush1.xpose.msra.mxu0 0.0
    %2614 = vmatprep.subr.mxu0 0.0
    %2615 = vmatpush1.xpose.msra.mxu0 0.0
    %2616 = vmatprep.subr.mxu0 0.0
    %2617 = vmatpush1.xpose.msra.mxu0 0.0
    %2618 = vmatprep.subr.mxu0 0.0
    %2619 = vmatpush1.xpose.msra.mxu0 0.0
    %2620 = vmatprep.subr.mxu0 0.0
    %2621 = vmatpush1.xpose.msra.mxu0 0.0
    %2622 = vmatprep.subr.mxu0 0.0
    %2623 = vmatpush1.xpose.msra.mxu0 0.0
    %2624 = vmatprep.subr.mxu0 0.0
    %2625 = vmatpush1.xpose.msra.mxu0 0.0
    %2626 = vmatprep.subr.mxu0 0.0
    %2627 = vmatpush1.xpose.msra.mxu0 0.0
    %2628 = vmatprep.subr.mxu0 0.0
    %2629 = vmatpush1.xpose.msra.mxu0 0.0
    %2630 = vmatprep.subr.mxu0 0.0
    %2631 = vmatpush1.xpose.msra.mxu0 0.0
    %2632 = vmatprep.subr.mxu0 0.0
    %2633 = vmatpush1.xpose.msra.mxu0 0.0
    %2634 = vmatprep.subr.mxu0 0.0
    %2635 = vmatpush1.xpose.msra.mxu0 0.0
    %2636 = vmatprep.subr.mxu0 0.0
    %2637 = vmatpush1.xpose.msra.mxu0 0.0
    %2638 = vmatprep.subr.mxu0 0.0
    %2639 = vmatpush1.xpose.msra.mxu0 0.0
    %2640 = vmatprep.subr.mxu0 0.0
    %2641 = vmatpush1.xpose.msra.mxu0 0.0
    %2642 = vmatprep.subr.mxu0 0.0
    %2643 = vmatpush1.xpose.msra.mxu0 0.0
    %2644 = vmatprep.subr.mxu0 0.0
    %2645 = vmatpush1.xpose.msra.mxu0 0.0
    %2646 = vmatprep.subr.mxu0 0.0
    %2647 = vmatpush1.xpose.msra.mxu0 0.0
    %2648 = vmatprep.subr.mxu0 0.0
    %2649 = vmatpush1.xpose.msra.mxu0 0.0
    %2650 = vmatprep.mubr.f32.mxu0 0.0
    %2651 = vmatmul.mubr.f32.gmra.mrb[0].mxu0 %v2578
    %v2652 = vpop.f32.mrb[0].mxu0
    %v2653 = vadd.f32 0.0, %v2652
    %v2654 = vpop.f32.mrb[0].mxu0
    %2655 = vmatprep.mubr.f32.mxu0 0.0
    %2656 = vmatmul.mubr.f32.gmra.mrb[0].mxu0 %v2580
    %v2657 = vpop.f32.mrb[0].mxu0
    %v2658 = vadd.f32 0.0, %v2657
    %v2659 = vpop.f32.mrb[0].mxu0
    %2660 = vdwg.mxu0
    %2661 = vrot.lane.b32.xlu0 %v512, 120
    %v2662 = vpop.permute.xlu0 %2661
    %2663 = vrot.lane.b32.xlu0 %v517, 120
    %v2664 = vpop.permute.xlu0 %2663
    %2665 = vrot.lane.b32.xlu0 %v512, 104
    %v2666 = vpop.permute.xlu0 %2665
    %2667 = vrot.lane.b32.xlu0 %v517, 104
    %v2668 = vpop.permute.xlu0 %2667
    %v2669 = vsel %vm536, %v2662, 0
    %v2671 = vsel %vm536, %v2664, 0
    %v2673 = vsel %vm536, %v2666, 0
    %v2675 = vsel %vm536, %v2668, 0
    %2677 = vmatprep.subr.mxu0 0.0
    %2678 = vmatpush1.xpose.msra.mxu0 %v2673
    %2679 = vmatprep.subr.mxu0 0.0
    %2680 = vmatpush1.xpose.msra.mxu0 %v2675
    %2681 = vmatprep.subr.mxu0 0.0
    %2682 = vmatpush1.xpose.msra.mxu0 0.0
    %2683 = vmatprep.subr.mxu0 0.0
    %2684 = vmatpush1.xpose.msra.mxu0 0.0
    %2685 = vmatprep.subr.mxu0 0.0
    %2686 = vmatpush1.xpose.msra.mxu0 0.0
    %2687 = vmatprep.subr.mxu0 0.0
    %2688 = vmatpush1.xpose.msra.mxu0 0.0
    %2689 = vmatprep.subr.mxu0 0.0
    %2690 = vmatpush1.xpose.msra.mxu0 0.0
    %2691 = vmatprep.subr.mxu0 0.0
    %2692 = vmatpush1.xpose.msra.mxu0 0.0
    %2693 = vmatprep.subr.mxu0 0.0
    %2694 = vmatpush1.xpose.msra.mxu0 0.0
    %2695 = vmatprep.subr.mxu0 0.0
    %2696 = vmatpush1.xpose.msra.mxu0 0.0
    %2697 = vmatprep.subr.mxu0 0.0
    %2698 = vmatpush1.xpose.msra.mxu0 0.0
    %2699 = vmatprep.subr.mxu0 0.0
    %2700 = vmatpush1.xpose.msra.mxu0 0.0
    %2701 = vmatprep.subr.mxu0 0.0
    %2702 = vmatpush1.xpose.msra.mxu0 0.0
    %2703 = vmatprep.subr.mxu0 0.0
    %2704 = vmatpush1.xpose.msra.mxu0 0.0
    %2705 = vmatprep.subr.mxu0 0.0
    %2706 = vmatpush1.xpose.msra.mxu0 0.0
    %2707 = vmatprep.subr.mxu0 0.0
    %2708 = vmatpush1.xpose.msra.mxu0 0.0
    %2709 = vmatprep.subr.mxu0 0.0
    %2710 = vmatpush1.xpose.msra.mxu0 0.0
    %2711 = vmatprep.subr.mxu0 0.0
    %2712 = vmatpush1.xpose.msra.mxu0 0.0
    %2713 = vmatprep.subr.mxu0 0.0
    %2714 = vmatpush1.xpose.msra.mxu0 0.0
    %2715 = vmatprep.subr.mxu0 0.0
    %2716 = vmatpush1.xpose.msra.mxu0 0.0
    %2717 = vmatprep.subr.mxu0 0.0
    %2718 = vmatpush1.xpose.msra.mxu0 0.0
    %2719 = vmatprep.subr.mxu0 0.0
    %2720 = vmatpush1.xpose.msra.mxu0 0.0
    %2721 = vmatprep.subr.mxu0 0.0
    %2722 = vmatpush1.xpose.msra.mxu0 0.0
    %2723 = vmatprep.subr.mxu0 0.0
    %2724 = vmatpush1.xpose.msra.mxu0 0.0
    %2725 = vmatprep.subr.mxu0 0.0
    %2726 = vmatpush1.xpose.msra.mxu0 0.0
    %2727 = vmatprep.subr.mxu0 0.0
    %2728 = vmatpush1.xpose.msra.mxu0 0.0
    %2729 = vmatprep.subr.mxu0 0.0
    %2730 = vmatpush1.xpose.msra.mxu0 0.0
    %2731 = vmatprep.subr.mxu0 0.0
    %2732 = vmatpush1.xpose.msra.mxu0 0.0
    %2733 = vmatprep.subr.mxu0 0.0
    %2734 = vmatpush1.xpose.msra.mxu0 0.0
    %2735 = vmatprep.subr.mxu0 0.0
    %2736 = vmatpush1.xpose.msra.mxu0 0.0
    %2737 = vmatprep.subr.mxu0 0.0
    %2738 = vmatpush1.xpose.msra.mxu0 0.0
    %2739 = vmatprep.subr.mxu0 0.0
    %2740 = vmatpush1.xpose.msra.mxu0 0.0
    %2741 = vmatprep.mubr.f32.mxu0 0.0
    %2742 = vmatmul.mubr.f32.gmra.mrb[0].mxu0 %v2669
    %v2743 = vpop.f32.mrb[0].mxu0
    %v2744 = vadd.f32 0.0, %v2743
    %v2745 = vpop.f32.mrb[0].mxu0
    %2746 = vmatprep.mubr.f32.mxu0 0.0
    %2747 = vmatmul.mubr.f32.gmra.mrb[0].mxu0 %v2671
    %v2748 = vpop.f32.mrb[0].mxu0
    %v2749 = vadd.f32 0.0, %v2748
    %v2750 = vpop.f32.mrb[0].mxu0
    %2751 = vdwg.mxu0
    %2752 = vrot.lane.b32.xlu0 %v522, 120
    %v2753 = vpop.permute.xlu0 %2752
    %2754 = vrot.lane.b32.xlu0 %v527, 120
    %v2755 = vpop.permute.xlu0 %2754
    %2756 = vrot.lane.b32.xlu0 %v522, 104
    %v2757 = vpop.permute.xlu0 %2756
    %2758 = vrot.lane.b32.xlu0 %v527, 104
    %v2759 = vpop.permute.xlu0 %2758
    %v2760 = vsel %vm536, %v2753, 0
    %v2762 = vsel %vm536, %v2755, 0
    %v2764 = vsel %vm536, %v2757, 0
    %v2766 = vsel %vm536, %v2759, 0
    %2768 = vmatprep.subr.mxu0 0.0
    %2769 = vmatpush1.xpose.msra.mxu0 %v2764
    %2770 = vmatprep.subr.mxu0 0.0
    %2771 = vmatpush1.xpose.msra.mxu0 %v2766
    %2772 = vmatprep.subr.mxu0 0.0
    %2773 = vmatpush1.xpose.msra.mxu0 0.0
    %2774 = vmatprep.subr.mxu0 0.0
    %2775 = vmatpush1.xpose.msra.mxu0 0.0
    %2776 = vmatprep.subr.mxu0 0.0
    %2777 = vmatpush1.xpose.msra.mxu0 0.0
    %2778 = vmatprep.subr.mxu0 0.0
    %2779 = vmatpush1.xpose.msra.mxu0 0.0
    %2780 = vmatprep.subr.mxu0 0.0
    %2781 = vmatpush1.xpose.msra.mxu0 0.0
    %2782 = vmatprep.subr.mxu0 0.0
    %2783 = vmatpush1.xpose.msra.mxu0 0.0
    %2784 = vmatprep.subr.mxu0 0.0
    %2785 = vmatpush1.xpose.msra.mxu0 0.0
    %2786 = vmatprep.subr.mxu0 0.0
    %2787 = vmatpush1.xpose.msra.mxu0 0.0
    %2788 = vmatprep.subr.mxu0 0.0
    %2789 = vmatpush1.xpose.msra.mxu0 0.0
    %2790 = vmatprep.subr.mxu0 0.0
    %2791 = vmatpush1.xpose.msra.mxu0 0.0
    %2792 = vmatprep.subr.mxu0 0.0
    %2793 = vmatpush1.xpose.msra.mxu0 0.0
    %2794 = vmatprep.subr.mxu0 0.0
    %2795 = vmatpush1.xpose.msra.mxu0 0.0
    %2796 = vmatprep.subr.mxu0 0.0
    %2797 = vmatpush1.xpose.msra.mxu0 0.0
    %2798 = vmatprep.subr.mxu0 0.0
    %2799 = vmatpush1.xpose.msra.mxu0 0.0
    %2800 = vmatprep.subr.mxu0 0.0
    %2801 = vmatpush1.xpose.msra.mxu0 0.0
    %2802 = vmatprep.subr.mxu0 0.0
    %2803 = vmatpush1.xpose.msra.mxu0 0.0
    %2804 = vmatprep.subr.mxu0 0.0
    %2805 = vmatpush1.xpose.msra.mxu0 0.0
    %2806 = vmatprep.subr.mxu0 0.0
    %2807 = vmatpush1.xpose.msra.mxu0 0.0
    %2808 = vmatprep.subr.mxu0 0.0
    %2809 = vmatpush1.xpose.msra.mxu0 0.0
    %2810 = vmatprep.subr.mxu0 0.0
    %2811 = vmatpush1.xpose.msra.mxu0 0.0
    %2812 = vmatprep.subr.mxu0 0.0
    %2813 = vmatpush1.xpose.msra.mxu0 0.0
    %2814 = vmatprep.subr.mxu0 0.0
    %2815 = vmatpush1.xpose.msra.mxu0 0.0
    %2816 = vmatprep.subr.mxu0 0.0
    %2817 = vmatpush1.xpose.msra.mxu0 0.0
    %2818 = vmatprep.subr.mxu0 0.0
    %2819 = vmatpush1.xpose.msra.mxu0 0.0
    %2820 = vmatprep.subr.mxu0 0.0
    %2821 = vmatpush1.xpose.msra.mxu0 0.0
    %2822 = vmatprep.subr.mxu0 0.0
    %2823 = vmatpush1.xpose.msra.mxu0 0.0
    %2824 = vmatprep.subr.mxu0 0.0
    %2825 = vmatpush1.xpose.msra.mxu0 0.0
    %2826 = vmatprep.subr.mxu0 0.0
    %2827 = vmatpush1.xpose.msra.mxu0 0.0
    %2828 = vmatprep.subr.mxu0 0.0
    %2829 = vmatpush1.xpose.msra.mxu0 0.0
    %2830 = vmatprep.subr.mxu0 0.0
    %2831 = vmatpush1.xpose.msra.mxu0 0.0
    %2832 = vmatprep.mubr.f32.mxu0 0.0
    %2833 = vmatmul.mubr.f32.gmra.mrb[0].mxu0 %v2760
    %v2834 = vpop.f32.mrb[0].mxu0
    %v2835 = vadd.f32 0.0, %v2834
    %v2836 = vpop.f32.mrb[0].mxu0
    %2837 = vmatprep.mubr.f32.mxu0 0.0
    %2838 = vmatmul.mubr.f32.gmra.mrb[0].mxu0 %v2762
    %v2839 = vpop.f32.mrb[0].mxu0
    %v2840 = vadd.f32 0.0, %v2839
    %v2841 = vpop.f32.mrb[0].mxu0
    %2842 = vdwg.mxu0
    %v2843 = vsel %vm336, %v2198, -inf
    %2844 = vmax.xlane.f32.xlu0 %v2843
    %v2845 = vpop.xlane.xlu0 %2844
    %v2846 = vsel %vm336, %v2203, -inf
    %2847 = vmax.xlane.f32.xlu0 %v2846
    %v2848 = vpop.xlane.xlu0 %2847
    %v2849 = vsel %vm336, %v2289, -inf
    %2850 = vmax.xlane.f32.xlu0 %v2849
    %v2851 = vpop.xlane.xlu0 %2850
    %v2852 = vsel %vm336, %v2294, -inf
    %2853 = vmax.xlane.f32.xlu0 %v2852
    %v2854 = vpop.xlane.xlu0 %2853
    %v2855 = vsel %vm336, %v2380, -inf
    %2856 = vmax.xlane.f32.xlu0 %v2855
    %v2857 = vpop.xlane.xlu0 %2856
    %v2858 = vsel %vm336, %v2385, -inf
    %2859 = vmax.xlane.f32.xlu0 %v2858
    %v2860 = vpop.xlane.xlu0 %2859
    %v2861 = vsel %vm336, %v2471, -inf
    %2862 = vmax.xlane.f32.xlu0 %v2861
    %v2863 = vpop.xlane.xlu0 %2862
    %v2864 = vsel %vm336, %v2476, -inf
    %2865 = vmax.xlane.f32.xlu0 %v2864
    %v2866 = vpop.xlane.xlu0 %2865
    %v2867 = vsel %vm336, %v2562, -inf
    %2868 = vmax.xlane.f32.xlu0 %v2867
    %v2869 = vpop.xlane.xlu0 %2868
    %v2870 = vsel %vm336, %v2567, -inf
    %2871 = vmax.xlane.f32.xlu0 %v2870
    %v2872 = vpop.xlane.xlu0 %2871
    %v2873 = vsel %vm336, %v2653, -inf
    %2874 = vmax.xlane.f32.xlu0 %v2873
    %v2875 = vpop.xlane.xlu0 %2874
    %v2876 = vsel %vm336, %v2658, -inf
    %2877 = vmax.xlane.f32.xlu0 %v2876
    %v2878 = vpop.xlane.xlu0 %2877
    %v2879 = vsel %vm336, %v2744, -inf
    %2880 = vmax.xlane.f32.xlu0 %v2879
    %v2881 = vpop.xlane.xlu0 %2880
    %v2882 = vsel %vm336, %v2749, -inf
    %2883 = vmax.xlane.f32.xlu0 %v2882
    %v2884 = vpop.xlane.xlu0 %2883
    %v2885 = vsel %vm336, %v2835, -inf
    %2886 = vmax.xlane.f32.xlu0 %v2885
    %v2887 = vpop.xlane.xlu0 %2886
    %v2888 = vsel %vm336, %v2840, -inf
    %2889 = vmax.xlane.f32.xlu0 %v2888
    %v2890 = vpop.xlane.xlu0 %2889
    %v2891 = vsub.f32 %v2198, %v2845
    %v2892 = vsub.f32 %v2203, %v2848
    %v2893 = vsub.f32 %v2289, %v2851
    %v2894 = vsub.f32 %v2294, %v2854
    %v2895 = vsub.f32 %v2380, %v2857
    %v2896 = vsub.f32 %v2385, %v2860
    %v2897 = vsub.f32 %v2471, %v2863
    %v2898 = vsub.f32 %v2476, %v2866
    %v2899 = vsub.f32 %v2562, %v2869
    %v2900 = vsub.f32 %v2567, %v2872
    %v2901 = vsub.f32 %v2653, %v2875
    %v2902 = vsub.f32 %v2658, %v2878
    %v2903 = vsub.f32 %v2744, %v2881
    %v2904 = vsub.f32 %v2749, %v2884
    %v2905 = vsub.f32 %v2835, %v2887
    %v2906 = vsub.f32 %v2840, %v2890
    %v2907 = vmul.f32 %v2891, 1.442695
    %v2908 = vpow.pop %v2907
    %v2909 = vmul.f32 %v2892, 1.442695
    %v2910 = vpow.pop %v2909
    %v2911 = vmul.f32 %v2893, 1.442695
    %v2912 = vpow.pop %v2911
    %v2913 = vmul.f32 %v2894, 1.442695
    %v2914 = vpow.pop %v2913
    %v2915 = vmul.f32 %v2895, 1.442695
    %v2916 = vpow.pop %v2915
    %v2917 = vmul.f32 %v2896, 1.442695
    %v2918 = vpow.pop %v2917
    %v2919 = vmul.f32 %v2897, 1.442695
    %v2920 = vpow.pop %v2919
    %v2921 = vmul.f32 %v2898, 1.442695
    %v2922 = vpow.pop %v2921
    %v2923 = vmul.f32 %v2899, 1.442695
    %v2924 = vpow.pop %v2923
    %v2925 = vmul.f32 %v2900, 1.442695
    %v2926 = vpow.pop %v2925
    %v2927 = vmul.f32 %v2901, 1.442695
    %v2928 = vpow.pop %v2927
    %v2929 = vmul.f32 %v2902, 1.442695
    %v2930 = vpow.pop %v2929
    %v2931 = vmul.f32 %v2903, 1.442695
    %v2932 = vpow.pop %v2931
    %v2933 = vmul.f32 %v2904, 1.442695
    %v2934 = vpow.pop %v2933
    %v2935 = vmul.f32 %v2905, 1.442695
    %v2936 = vpow.pop %v2935
    %v2937 = vmul.f32 %v2906, 1.442695
    %v2938 = vpow.pop %v2937
    %v2939 = vsel %vm336, %v2908, 0.0
    %2940 = vadd.xlane.f32.xlu0 %v2939
    %v2941 = vpop.xlane.xlu0 %2940
    %v2942 = vsel %vm336, %v2910, 0.0
    %2943 = vadd.xlane.f32.xlu0 %v2942
    %v2944 = vpop.xlane.xlu0 %2943
    %v2945 = vsel %vm336, %v2912, 0.0
    %2946 = vadd.xlane.f32.xlu0 %v2945
    %v2947 = vpop.xlane.xlu0 %2946
    %v2948 = vsel %vm336, %v2914, 0.0
    %2949 = vadd.xlane.f32.xlu0 %v2948
    %v2950 = vpop.xlane.xlu0 %2949
    %v2951 = vsel %vm336, %v2916, 0.0
    %2952 = vadd.xlane.f32.xlu0 %v2951
    %v2953 = vpop.xlane.xlu0 %2952
    %v2954 = vsel %vm336, %v2918, 0.0
    %2955 = vadd.xlane.f32.xlu0 %v2954
    %v2956 = vpop.xlane.xlu0 %2955
    %v2957 = vsel %vm336, %v2920, 0.0
    %2958 = vadd.xlane.f32.xlu0 %v2957
    %v2959 = vpop.xlane.xlu0 %2958
    %v2960 = vsel %vm336, %v2922, 0.0
    %2961 = vadd.xlane.f32.xlu0 %v2960
    %v2962 = vpop.xlane.xlu0 %2961
    %v2963 = vsel %vm336, %v2924, 0.0
    %2964 = vadd.xlane.f32.xlu0 %v2963
    %v2965 = vpop.xlane.xlu0 %2964
    %v2966 = vsel %vm336, %v2926, 0.0
    %2967 = vadd.xlane.f32.xlu0 %v2966
    %v2968 = vpop.xlane.xlu0 %2967
    %v2969 = vsel %vm336, %v2928, 0.0
    %2970 = vadd.xlane.f32.xlu0 %v2969
    %v2971 = vpop.xlane.xlu0 %2970
    %v2972 = vsel %vm336, %v2930, 0.0
    %2973 = vadd.xlane.f32.xlu0 %v2972
    %v2974 = vpop.xlane.xlu0 %2973
    %v2975 = vsel %vm336, %v2932, 0.0
    %2976 = vadd.xlane.f32.xlu0 %v2975
    %v2977 = vpop.xlane.xlu0 %2976
    %v2978 = vsel %vm336, %v2934, 0.0
    %2979 = vadd.xlane.f32.xlu0 %v2978
    %v2980 = vpop.xlane.xlu0 %2979
    %v2981 = vsel %vm336, %v2936, 0.0
    %2982 = vadd.xlane.f32.xlu0 %v2981
    %v2983 = vpop.xlane.xlu0 %2982
    %v2984 = vsel %vm336, %v2938, 0.0
    %2985 = vadd.xlane.f32.xlu0 %v2984
    %v2986 = vpop.xlane.xlu0 %2985
    %v2987 = vrcp.pop %v2941
    %v2988 = vmul.f32 %v2908, %v2987
    %v2989 = vrcp.pop %v2944
    %v2990 = vmul.f32 %v2910, %v2989
    %v2991 = vrcp.pop %v2947
    %v2992 = vmul.f32 %v2912, %v2991
    %v2993 = vrcp.pop %v2950
    %v2994 = vmul.f32 %v2914, %v2993
    %v2995 = vrcp.pop %v2953
    %v2996 = vmul.f32 %v2916, %v2995
    %v2997 = vrcp.pop %v2956
    %v2998 = vmul.f32 %v2918, %v2997
    %v2999 = vrcp.pop %v2959
    %v3000 = vmul.f32 %v2920, %v2999
    %v3001 = vrcp.pop %v2962
    %v3002 = vmul.f32 %v2922, %v3001
    %v3003 = vrcp.pop %v2965
    %v3004 = vmul.f32 %v2924, %v3003
    %v3005 = vrcp.pop %v2968
    %v3006 = vmul.f32 %v2926, %v3005
    %v3007 = vrcp.pop %v2971
    %v3008 = vmul.f32 %v2928, %v3007
    %v3009 = vrcp.pop %v2974
    %v3010 = vmul.f32 %v2930, %v3009
    %v3011 = vrcp.pop %v2977
    %v3012 = vmul.f32 %v2932, %v3011
    %v3013 = vrcp.pop %v2980
    %v3014 = vmul.f32 %v2934, %v3013
    %v3015 = vrcp.pop %v2983
    %v3016 = vmul.f32 %v2936, %v3015
    %v3017 = vrcp.pop %v2986
    %v3018 = vmul.f32 %v2938, %v3017
    %3019 = vrot.lane.b32.xlu0 %v452, 88
    %v3020 = vpop.permute.xlu0 %3019
    %3021 = vrot.lane.b32.xlu0 %v457, 88
    %v3022 = vpop.permute.xlu0 %3021
    %v3026 = vsel %vm336, %v2988, 0
    %v3029 = vsel %vm336, %v2990, 0
    %3031 = vmatprep.subr.mxu0 0.0
    %3032 = vmatpush1.msra.mxu0 %v3020
    %3033 = vmatprep.subr.mxu0 0.0
    %3034 = vmatpush1.msra.mxu0 %v3022
    %3035 = vmatprep.subr.mxu0 0.0
    %3036 = vmatpush1.msra.mxu0 0.0
    %3037 = vmatprep.subr.mxu0 0.0
    %3038 = vmatpush1.msra.mxu0 0.0
    %3039 = vmatprep.subr.mxu0 0.0
    %3040 = vmatpush1.msra.mxu0 0.0
    %3041 = vmatprep.subr.mxu0 0.0
    %3042 = vmatpush1.msra.mxu0 0.0
    %3043 = vmatprep.subr.mxu0 0.0
    %3044 = vmatpush1.msra.mxu0 0.0
    %3045 = vmatprep.subr.mxu0 0.0
    %3046 = vmatpush1.msra.mxu0 0.0
    %3047 = vmatprep.subr.mxu0 0.0
    %3048 = vmatpush1.msra.mxu0 0.0
    %3049 = vmatprep.subr.mxu0 0.0
    %3050 = vmatpush1.msra.mxu0 0.0
    %3051 = vmatprep.subr.mxu0 0.0
    %3052 = vmatpush1.msra.mxu0 0.0
    %3053 = vmatprep.subr.mxu0 0.0
    %3054 = vmatpush1.msra.mxu0 0.0
    %3055 = vmatprep.subr.mxu0 0.0
    %3056 = vmatpush1.msra.mxu0 0.0
    %3057 = vmatprep.subr.mxu0 0.0
    %3058 = vmatpush1.msra.mxu0 0.0
    %3059 = vmatprep.subr.mxu0 0.0
    %3060 = vmatpush1.msra.mxu0 0.0
    %3061 = vmatprep.subr.mxu0 0.0
    %3062 = vmatpush1.msra.mxu0 0.0
    %3063 = vmatprep.subr.mxu0 0.0
    %3064 = vmatpush1.msra.mxu0 0.0
    %3065 = vmatprep.subr.mxu0 0.0
    %3066 = vmatpush1.msra.mxu0 0.0
    %3067 = vmatprep.subr.mxu0 0.0
    %3068 = vmatpush1.msra.mxu0 0.0
    %3069 = vmatprep.subr.mxu0 0.0
    %3070 = vmatpush1.msra.mxu0 0.0
    %3071 = vmatprep.subr.mxu0 0.0
    %3072 = vmatpush1.msra.mxu0 0.0
    %3073 = vmatprep.subr.mxu0 0.0
    %3074 = vmatpush1.msra.mxu0 0.0
    %3075 = vmatprep.subr.mxu0 0.0
    %3076 = vmatpush1.msra.mxu0 0.0
    %3077 = vmatprep.subr.mxu0 0.0
    %3078 = vmatpush1.msra.mxu0 0.0
    %3079 = vmatprep.subr.mxu0 0.0
    %3080 = vmatpush1.msra.mxu0 0.0
    %3081 = vmatprep.subr.mxu0 0.0
    %3082 = vmatpush1.msra.mxu0 0.0
    %3083 = vmatprep.subr.mxu0 0.0
    %3084 = vmatpush1.msra.mxu0 0.0
    %3085 = vmatprep.subr.mxu0 0.0
    %3086 = vmatpush1.msra.mxu0 0.0
    %3087 = vmatprep.subr.mxu0 0.0
    %3088 = vmatpush1.msra.mxu0 0.0
    %3089 = vmatprep.subr.mxu0 0.0
    %3090 = vmatpush1.msra.mxu0 0.0
    %3091 = vmatprep.subr.mxu0 0.0
    %3092 = vmatpush1.msra.mxu0 0.0
    %3093 = vmatprep.subr.mxu0 0.0
    %3094 = vmatpush1.msra.mxu0 0.0
    %3095 = vmatprep.mubr.f32.mxu0 0.0
    %3096 = vmatmul.mubr.f32.gmra.mrb[0].mxu0 %v3026
    %v3097 = vpop.f32.mrb[0].mxu0
    %v3098 = vadd.f32 0.0, %v3097
    %v3099 = vpop.f32.mrb[0].mxu0
    %3100 = vmatprep.mubr.f32.mxu0 0.0
    %3101 = vmatmul.mubr.f32.gmra.mrb[0].mxu0 %v3029
    %v3102 = vpop.f32.mrb[0].mxu0
    %v3103 = vadd.f32 0.0, %v3102
    %v3104 = vpop.f32.mrb[0].mxu0
    %3105 = vdwg.mxu0
    %3106 = vrot.lane.b32.xlu0 %v462, 88
    %v3107 = vpop.permute.xlu0 %3106
    %3108 = vrot.lane.b32.xlu0 %v467, 88
    %v3109 = vpop.permute.xlu0 %3108
    %v3113 = vsel %vm336, %v2992, 0
    %v3116 = vsel %vm336, %v2994, 0
    %3118 = vmatprep.subr.mxu0 0.0
    %3119 = vmatpush1.msra.mxu0 %v3107
    %3120 = vmatprep.subr.mxu0 0.0
    %3121 = vmatpush1.msra.mxu0 %v3109
    %3122 = vmatprep.subr.mxu0 0.0
    %3123 = vmatpush1.msra.mxu0 0.0
    %3124 = vmatprep.subr.mxu0 0.0
    %3125 = vmatpush1.msra.mxu0 0.0
    %3126 = vmatprep.subr.mxu0 0.0
    %3127 = vmatpush1.msra.mxu0 0.0
    %3128 = vmatprep.subr.mxu0 0.0
    %3129 = vmatpush1.msra.mxu0 0.0
    %3130 = vmatprep.subr.mxu0 0.0
    %3131 = vmatpush1.msra.mxu0 0.0
    %3132 = vmatprep.subr.mxu0 0.0
    %3133 = vmatpush1.msra.mxu0 0.0
    %3134 = vmatprep.subr.mxu0 0.0
    %3135 = vmatpush1.msra.mxu0 0.0
    %3136 = vmatprep.subr.mxu0 0.0
    %3137 = vmatpush1.msra.mxu0 0.0
    %3138 = vmatprep.subr.mxu0 0.0
    %3139 = vmatpush1.msra.mxu0 0.0
    %3140 = vmatprep.subr.mxu0 0.0
    %3141 = vmatpush1.msra.mxu0 0.0
    %3142 = vmatprep.subr.mxu0 0.0
    %3143 = vmatpush1.msra.mxu0 0.0
    %3144 = vmatprep.subr.mxu0 0.0
    %3145 = vmatpush1.msra.mxu0 0.0
    %3146 = vmatprep.subr.mxu0 0.0
    %3147 = vmatpush1.msra.mxu0 0.0
    %3148 = vmatprep.subr.mxu0 0.0
    %3149 = vmatpush1.msra.mxu0 0.0
    %3150 = vmatprep.subr.mxu0 0.0
    %3151 = vmatpush1.msra.mxu0 0.0
    %3152 = vmatprep.subr.mxu0 0.0
    %3153 = vmatpush1.msra.mxu0 0.0
    %3154 = vmatprep.subr.mxu0 0.0
    %3155 = vmatpush1.msra.mxu0 0.0
    %3156 = vmatprep.subr.mxu0 0.0
    %3157 = vmatpush1.msra.mxu0 0.0
    %3158 = vmatprep.subr.mxu0 0.0
    %3159 = vmatpush1.msra.mxu0 0.0
    %3160 = vmatprep.subr.mxu0 0.0
    %3161 = vmatpush1.msra.mxu0 0.0
    %3162 = vmatprep.subr.mxu0 0.0
    %3163 = vmatpush1.msra.mxu0 0.0
    %3164 = vmatprep.subr.mxu0 0.0
    %3165 = vmatpush1.msra.mxu0 0.0
    %3166 = vmatprep.subr.mxu0 0.0
    %3167 = vmatpush1.msra.mxu0 0.0
    %3168 = vmatprep.subr.mxu0 0.0
    %3169 = vmatpush1.msra.mxu0 0.0
    %3170 = vmatprep.subr.mxu0 0.0
    %3171 = vmatpush1.msra.mxu0 0.0
    %3172 = vmatprep.subr.mxu0 0.0
    %3173 = vmatpush1.msra.mxu0 0.0
    %3174 = vmatprep.subr.mxu0 0.0
    %3175 = vmatpush1.msra.mxu0 0.0
    %3176 = vmatprep.subr.mxu0 0.0
    %3177 = vmatpush1.msra.mxu0 0.0
    %3178 = vmatprep.subr.mxu0 0.0
    %3179 = vmatpush1.msra.mxu0 0.0
    %3180 = vmatprep.subr.mxu0 0.0
    %3181 = vmatpush1.msra.mxu0 0.0
    %3182 = vmatprep.mubr.f32.mxu0 0.0
    %3183 = vmatmul.mubr.f32.gmra.mrb[0].mxu0 %v3113
    %v3184 = vpop.f32.mrb[0].mxu0
    %v3185 = vadd.f32 0.0, %v3184
    %v3186 = vpop.f32.mrb[0].mxu0
    %3187 = vmatprep.mubr.f32.mxu0 0.0
    %3188 = vmatmul.mubr.f32.gmra.mrb[0].mxu0 %v3116
    %v3189 = vpop.f32.mrb[0].mxu0
    %v3190 = vadd.f32 0.0, %v3189
    %v3191 = vpop.f32.mrb[0].mxu0
    %3192 = vdwg.mxu0
    %3193 = vrot.lane.b32.xlu0 %v472, 88
    %v3194 = vpop.permute.xlu0 %3193
    %3195 = vrot.lane.b32.xlu0 %v477, 88
    %v3196 = vpop.permute.xlu0 %3195
    %v3200 = vsel %vm336, %v2996, 0
    %v3203 = vsel %vm336, %v2998, 0
    %3205 = vmatprep.subr.mxu0 0.0
    %3206 = vmatpush1.msra.mxu0 %v3194
    %3207 = vmatprep.subr.mxu0 0.0
    %3208 = vmatpush1.msra.mxu0 %v3196
    %3209 = vmatprep.subr.mxu0 0.0
    %3210 = vmatpush1.msra.mxu0 0.0
    %3211 = vmatprep.subr.mxu0 0.0
    %3212 = vmatpush1.msra.mxu0 0.0
    %3213 = vmatprep.subr.mxu0 0.0
    %3214 = vmatpush1.msra.mxu0 0.0
    %3215 = vmatprep.subr.mxu0 0.0
    %3216 = vmatpush1.msra.mxu0 0.0
    %3217 = vmatprep.subr.mxu0 0.0
    %3218 = vmatpush1.msra.mxu0 0.0
    %3219 = vmatprep.subr.mxu0 0.0
    %3220 = vmatpush1.msra.mxu0 0.0
    %3221 = vmatprep.subr.mxu0 0.0
    %3222 = vmatpush1.msra.mxu0 0.0
    %3223 = vmatprep.subr.mxu0 0.0
    %3224 = vmatpush1.msra.mxu0 0.0
    %3225 = vmatprep.subr.mxu0 0.0
    %3226 = vmatpush1.msra.mxu0 0.0
    %3227 = vmatprep.subr.mxu0 0.0
    %3228 = vmatpush1.msra.mxu0 0.0
    %3229 = vmatprep.subr.mxu0 0.0
    %3230 = vmatpush1.msra.mxu0 0.0
    %3231 = vmatprep.subr.mxu0 0.0
    %3232 = vmatpush1.msra.mxu0 0.0
    %3233 = vmatprep.subr.mxu0 0.0
    %3234 = vmatpush1.msra.mxu0 0.0
    %3235 = vmatprep.subr.mxu0 0.0
    %3236 = vmatpush1.msra.mxu0 0.0
    %3237 = vmatprep.subr.mxu0 0.0
    %3238 = vmatpush1.msra.mxu0 0.0
    %3239 = vmatprep.subr.mxu0 0.0
    %3240 = vmatpush1.msra.mxu0 0.0
    %3241 = vmatprep.subr.mxu0 0.0
    %3242 = vmatpush1.msra.mxu0 0.0
    %3243 = vmatprep.subr.mxu0 0.0
    %3244 = vmatpush1.msra.mxu0 0.0
    %3245 = vmatprep.subr.mxu0 0.0
    %3246 = vmatpush1.msra.mxu0 0.0
    %3247 = vmatprep.subr.mxu0 0.0
    %3248 = vmatpush1.msra.mxu0 0.0
    %3249 = vmatprep.subr.mxu0 0.0
    %3250 = vmatpush1.msra.mxu0 0.0
    %3251 = vmatprep.subr.mxu0 0.0
    %3252 = vmatpush1.msra.mxu0 0.0
    %3253 = vmatprep.subr.mxu0 0.0
    %3254 = vmatpush1.msra.mxu0 0.0
    %3255 = vmatprep.subr.mxu0 0.0
    %3256 = vmatpush1.msra.mxu0 0.0
    %3257 = vmatprep.subr.mxu0 0.0
    %3258 = vmatpush1.msra.mxu0 0.0
    %3259 = vmatprep.subr.mxu0 0.0
    %3260 = vmatpush1.msra.mxu0 0.0
    %3261 = vmatprep.subr.mxu0 0.0
    %3262 = vmatpush1.msra.mxu0 0.0
    %3263 = vmatprep.subr.mxu0 0.0
    %3264 = vmatpush1.msra.mxu0 0.0
    %3265 = vmatprep.subr.mxu0 0.0
    %3266 = vmatpush1.msra.mxu0 0.0
    %3267 = vmatprep.subr.mxu0 0.0
    %3268 = vmatpush1.msra.mxu0 0.0
    %3269 = vmatprep.mubr.f32.mxu0 0.0
    %3270 = vmatmul.mubr.f32.gmra.mrb[0].mxu0 %v3200
    %v3271 = vpop.f32.mrb[0].mxu0
    %v3272 = vadd.f32 0.0, %v3271
    %v3273 = vpop.f32.mrb[0].mxu0
    %3274 = vmatprep.mubr.f32.mxu0 0.0
    %3275 = vmatmul.mubr.f32.gmra.mrb[0].mxu0 %v3203
    %v3276 = vpop.f32.mrb[0].mxu0
    %v3277 = vadd.f32 0.0, %v3276
    %v3278 = vpop.f32.mrb[0].mxu0
    %3279 = vdwg.mxu0
    %3280 = vrot.lane.b32.xlu0 %v482, 88
    %v3281 = vpop.permute.xlu0 %3280
    %3282 = vrot.lane.b32.xlu0 %v487, 88
    %v3283 = vpop.permute.xlu0 %3282
    %v3287 = vsel %vm336, %v3000, 0
    %v3290 = vsel %vm336, %v3002, 0
    %3292 = vmatprep.subr.mxu0 0.0
    %3293 = vmatpush1.msra.mxu0 %v3281
    %3294 = vmatprep.subr.mxu0 0.0
    %3295 = vmatpush1.msra.mxu0 %v3283
    %3296 = vmatprep.subr.mxu0 0.0
    %3297 = vmatpush1.msra.mxu0 0.0
    %3298 = vmatprep.subr.mxu0 0.0
    %3299 = vmatpush1.msra.mxu0 0.0
    %3300 = vmatprep.subr.mxu0 0.0
    %3301 = vmatpush1.msra.mxu0 0.0
    %3302 = vmatprep.subr.mxu0 0.0
    %3303 = vmatpush1.msra.mxu0 0.0
    %3304 = vmatprep.subr.mxu0 0.0
    %3305 = vmatpush1.msra.mxu0 0.0
    %3306 = vmatprep.subr.mxu0 0.0
    %3307 = vmatpush1.msra.mxu0 0.0
    %3308 = vmatprep.subr.mxu0 0.0
    %3309 = vmatpush1.msra.mxu0 0.0
    %3310 = vmatprep.subr.mxu0 0.0
    %3311 = vmatpush1.msra.mxu0 0.0
    %3312 = vmatprep.subr.mxu0 0.0
    %3313 = vmatpush1.msra.mxu0 0.0
    %3314 = vmatprep.subr.mxu0 0.0
    %3315 = vmatpush1.msra.mxu0 0.0
    %3316 = vmatprep.subr.mxu0 0.0
    %3317 = vmatpush1.msra.mxu0 0.0
    %3318 = vmatprep.subr.mxu0 0.0
    %3319 = vmatpush1.msra.mxu0 0.0
    %3320 = vmatprep.subr.mxu0 0.0
    %3321 = vmatpush1.msra.mxu0 0.0
    %3322 = vmatprep.subr.mxu0 0.0
    %3323 = vmatpush1.msra.mxu0 0.0
    %3324 = vmatprep.subr.mxu0 0.0
    %3325 = vmatpush1.msra.mxu0 0.0
    %3326 = vmatprep.subr.mxu0 0.0
    %3327 = vmatpush1.msra.mxu0 0.0
    %3328 = vmatprep.subr.mxu0 0.0
    %3329 = vmatpush1.msra.mxu0 0.0
    %3330 = vmatprep.subr.mxu0 0.0
    %3331 = vmatpush1.msra.mxu0 0.0
    %3332 = vmatprep.subr.mxu0 0.0
    %3333 = vmatpush1.msra.mxu0 0.0
    %3334 = vmatprep.subr.mxu0 0.0
    %3335 = vmatpush1.msra.mxu0 0.0
    %3336 = vmatprep.subr.mxu0 0.0
    %3337 = vmatpush1.msra.mxu0 0.0
    %3338 = vmatprep.subr.mxu0 0.0
    %3339 = vmatpush1.msra.mxu0 0.0
    %3340 = vmatprep.subr.mxu0 0.0
    %3341 = vmatpush1.msra.mxu0 0.0
    %3342 = vmatprep.subr.mxu0 0.0
    %3343 = vmatpush1.msra.mxu0 0.0
    %3344 = vmatprep.subr.mxu0 0.0
    %3345 = vmatpush1.msra.mxu0 0.0
    %3346 = vmatprep.subr.mxu0 0.0
    %3347 = vmatpush1.msra.mxu0 0.0
    %3348 = vmatprep.subr.mxu0 0.0
    %3349 = vmatpush1.msra.mxu0 0.0
    %3350 = vmatprep.subr.mxu0 0.0
    %3351 = vmatpush1.msra.mxu0 0.0
    %3352 = vmatprep.subr.mxu0 0.0
    %3353 = vmatpush1.msra.mxu0 0.0
    %3354 = vmatprep.subr.mxu0 0.0
    %3355 = vmatpush1.msra.mxu0 0.0
    %3356 = vmatprep.mubr.f32.mxu0 0.0
    %3357 = vmatmul.mubr.f32.gmra.mrb[0].mxu0 %v3287
    %v3358 = vpop.f32.mrb[0].mxu0
    %v3359 = vadd.f32 0.0, %v3358
    %v3360 = vpop.f32.mrb[0].mxu0
    %3361 = vmatprep.mubr.f32.mxu0 0.0
    %3362 = vmatmul.mubr.f32.gmra.mrb[0].mxu0 %v3290
    %v3363 = vpop.f32.mrb[0].mxu0
    %v3364 = vadd.f32 0.0, %v3363
    %v3365 = vpop.f32.mrb[0].mxu0
    %3366 = vdwg.mxu0
    %3367 = vrot.lane.b32.xlu0 %v492, 88
    %v3368 = vpop.permute.xlu0 %3367
    %3369 = vrot.lane.b32.xlu0 %v497, 88
    %v3370 = vpop.permute.xlu0 %3369
    %v3374 = vsel %vm336, %v3004, 0
    %v3377 = vsel %vm336, %v3006, 0
    %3379 = vmatprep.subr.mxu0 0.0
    %3380 = vmatpush1.msra.mxu0 %v3368
    %3381 = vmatprep.subr.mxu0 0.0
    %3382 = vmatpush1.msra.mxu0 %v3370
    %3383 = vmatprep.subr.mxu0 0.0
    %3384 = vmatpush1.msra.mxu0 0.0
    %3385 = vmatprep.subr.mxu0 0.0
    %3386 = vmatpush1.msra.mxu0 0.0
    %3387 = vmatprep.subr.mxu0 0.0
    %3388 = vmatpush1.msra.mxu0 0.0
    %3389 = vmatprep.subr.mxu0 0.0
    %3390 = vmatpush1.msra.mxu0 0.0
    %3391 = vmatprep.subr.mxu0 0.0
    %3392 = vmatpush1.msra.mxu0 0.0
    %3393 = vmatprep.subr.mxu0 0.0
    %3394 = vmatpush1.msra.mxu0 0.0
    %3395 = vmatprep.subr.mxu0 0.0
    %3396 = vmatpush1.msra.mxu0 0.0
    %3397 = vmatprep.subr.mxu0 0.0
    %3398 = vmatpush1.msra.mxu0 0.0
    %3399 = vmatprep.subr.mxu0 0.0
    %3400 = vmatpush1.msra.mxu0 0.0
    %3401 = vmatprep.subr.mxu0 0.0
    %3402 = vmatpush1.msra.mxu0 0.0
    %3403 = vmatprep.subr.mxu0 0.0
    %3404 = vmatpush1.msra.mxu0 0.0
    %3405 = vmatprep.subr.mxu0 0.0
    %3406 = vmatpush1.msra.mxu0 0.0
    %3407 = vmatprep.subr.mxu0 0.0
    %3408 = vmatpush1.msra.mxu0 0.0
    %3409 = vmatprep.subr.mxu0 0.0
    %3410 = vmatpush1.msra.mxu0 0.0
    %3411 = vmatprep.subr.mxu0 0.0
    %3412 = vmatpush1.msra.mxu0 0.0
    %3413 = vmatprep.subr.mxu0 0.0
    %3414 = vmatpush1.msra.mxu0 0.0
    %3415 = vmatprep.subr.mxu0 0.0
    %3416 = vmatpush1.msra.mxu0 0.0
    %3417 = vmatprep.subr.mxu0 0.0
    %3418 = vmatpush1.msra.mxu0 0.0
    %3419 = vmatprep.subr.mxu0 0.0
    %3420 = vmatpush1.msra.mxu0 0.0
    %3421 = vmatprep.subr.mxu0 0.0
    %3422 = vmatpush1.msra.mxu0 0.0
    %3423 = vmatprep.subr.mxu0 0.0
    %3424 = vmatpush1.msra.mxu0 0.0
    %3425 = vmatprep.subr.mxu0 0.0
    %3426 = vmatpush1.msra.mxu0 0.0
    %3427 = vmatprep.subr.mxu0 0.0
    %3428 = vmatpush1.msra.mxu0 0.0
    %3429 = vmatprep.subr.mxu0 0.0
    %3430 = vmatpush1.msra.mxu0 0.0
    %3431 = vmatprep.subr.mxu0 0.0
    %3432 = vmatpush1.msra.mxu0 0.0
    %3433 = vmatprep.subr.mxu0 0.0
    %3434 = vmatpush1.msra.mxu0 0.0
    %3435 = vmatprep.subr.mxu0 0.0
    %3436 = vmatpush1.msra.mxu0 0.0
    %3437 = vmatprep.subr.mxu0 0.0
    %3438 = vmatpush1.msra.mxu0 0.0
    %3439 = vmatprep.subr.mxu0 0.0
    %3440 = vmatpush1.msra.mxu0 0.0
    %3441 = vmatprep.subr.mxu0 0.0
    %3442 = vmatpush1.msra.mxu0 0.0
    %3443 = vmatprep.mubr.f32.mxu0 0.0
    %3444 = vmatmul.mubr.f32.gmra.mrb[0].mxu0 %v3374
    %v3445 = vpop.f32.mrb[0].mxu0
    %v3446 = vadd.f32 0.0, %v3445
    %v3447 = vpop.f32.mrb[0].mxu0
    %3448 = vmatprep.mubr.f32.mxu0 0.0
    %3449 = vmatmul.mubr.f32.gmra.mrb[0].mxu0 %v3377
    %v3450 = vpop.f32.mrb[0].mxu0
    %v3451 = vadd.f32 0.0, %v3450
    %v3452 = vpop.f32.mrb[0].mxu0
    %3453 = vdwg.mxu0
    %3454 = vrot.lane.b32.xlu0 %v502, 88
    %v3455 = vpop.permute.xlu0 %3454
    %3456 = vrot.lane.b32.xlu0 %v507, 88
    %v3457 = vpop.permute.xlu0 %3456
    %v3461 = vsel %vm336, %v3008, 0
    %v3464 = vsel %vm336, %v3010, 0
    %3466 = vmatprep.subr.mxu0 0.0
    %3467 = vmatpush1.msra.mxu0 %v3455
    %3468 = vmatprep.subr.mxu0 0.0
    %3469 = vmatpush1.msra.mxu0 %v3457
    %3470 = vmatprep.subr.mxu0 0.0
    %3471 = vmatpush1.msra.mxu0 0.0
    %3472 = vmatprep.subr.mxu0 0.0
    %3473 = vmatpush1.msra.mxu0 0.0
    %3474 = vmatprep.subr.mxu0 0.0
    %3475 = vmatpush1.msra.mxu0 0.0
    %3476 = vmatprep.subr.mxu0 0.0
    %3477 = vmatpush1.msra.mxu0 0.0
    %3478 = vmatprep.subr.mxu0 0.0
    %3479 = vmatpush1.msra.mxu0 0.0
    %3480 = vmatprep.subr.mxu0 0.0
    %3481 = vmatpush1.msra.mxu0 0.0
    %3482 = vmatprep.subr.mxu0 0.0
    %3483 = vmatpush1.msra.mxu0 0.0
    %3484 = vmatprep.subr.mxu0 0.0
    %3485 = vmatpush1.msra.mxu0 0.0
    %3486 = vmatprep.subr.mxu0 0.0
    %3487 = vmatpush1.msra.mxu0 0.0
    %3488 = vmatprep.subr.mxu0 0.0
    %3489 = vmatpush1.msra.mxu0 0.0
    %3490 = vmatprep.subr.mxu0 0.0
    %3491 = vmatpush1.msra.mxu0 0.0
    %3492 = vmatprep.subr.mxu0 0.0
    %3493 = vmatpush1.msra.mxu0 0.0
    %3494 = vmatprep.subr.mxu0 0.0
    %3495 = vmatpush1.msra.mxu0 0.0
    %3496 = vmatprep.subr.mxu0 0.0
    %3497 = vmatpush1.msra.mxu0 0.0
    %3498 = vmatprep.subr.mxu0 0.0
    %3499 = vmatpush1.msra.mxu0 0.0
    %3500 = vmatprep.subr.mxu0 0.0
    %3501 = vmatpush1.msra.mxu0 0.0
    %3502 = vmatprep.subr.mxu0 0.0
    %3503 = vmatpush1.msra.mxu0 0.0
    %3504 = vmatprep.subr.mxu0 0.0
    %3505 = vmatpush1.msra.mxu0 0.0
    %3506 = vmatprep.subr.mxu0 0.0
    %3507 = vmatpush1.msra.mxu0 0.0
    %3508 = vmatprep.subr.mxu0 0.0
    %3509 = vmatpush1.msra.mxu0 0.0
    %3510 = vmatprep.subr.mxu0 0.0
    %3511 = vmatpush1.msra.mxu0 0.0
    %3512 = vmatprep.subr.mxu0 0.0
    %3513 = vmatpush1.msra.mxu0 0.0
    %3514 = vmatprep.subr.mxu0 0.0
    %3515 = vmatpush1.msra.mxu0 0.0
    %3516 = vmatprep.subr.mxu0 0.0
    %3517 = vmatpush1.msra.mxu0 0.0
    %3518 = vmatprep.subr.mxu0 0.0
    %3519 = vmatpush1.msra.mxu0 0.0
    %3520 = vmatprep.subr.mxu0 0.0
    %3521 = vmatpush1.msra.mxu0 0.0
    %3522 = vmatprep.subr.mxu0 0.0
    %3523 = vmatpush1.msra.mxu0 0.0
    %3524 = vmatprep.subr.mxu0 0.0
    %3525 = vmatpush1.msra.mxu0 0.0
    %3526 = vmatprep.subr.mxu0 0.0
    %3527 = vmatpush1.msra.mxu0 0.0
    %3528 = vmatprep.subr.mxu0 0.0
    %3529 = vmatpush1.msra.mxu0 0.0
    %3530 = vmatprep.mubr.f32.mxu0 0.0
    %3531 = vmatmul.mubr.f32.gmra.mrb[0].mxu0 %v3461
    %v3532 = vpop.f32.mrb[0].mxu0
    %v3533 = vadd.f32 0.0, %v3532
    %v3534 = vpop.f32.mrb[0].mxu0
    %3535 = vmatprep.mubr.f32.mxu0 0.0
    %3536 = vmatmul.mubr.f32.gmra.mrb[0].mxu0 %v3464
    %v3537 = vpop.f32.mrb[0].mxu0
    %v3538 = vadd.f32 0.0, %v3537
    %v3539 = vpop.f32.mrb[0].mxu0
    %3540 = vdwg.mxu0
    %3541 = vrot.lane.b32.xlu0 %v512, 88
    %v3542 = vpop.permute.xlu0 %3541
    %3543 = vrot.lane.b32.xlu0 %v517, 88
    %v3544 = vpop.permute.xlu0 %3543
    %v3548 = vsel %vm336, %v3012, 0
    %v3551 = vsel %vm336, %v3014, 0
    %3553 = vmatprep.subr.mxu0 0.0
    %3554 = vmatpush1.msra.mxu0 %v3542
    %3555 = vmatprep.subr.mxu0 0.0
    %3556 = vmatpush1.msra.mxu0 %v3544
    %3557 = vmatprep.subr.mxu0 0.0
    %3558 = vmatpush1.msra.mxu0 0.0
    %3559 = vmatprep.subr.mxu0 0.0
    %3560 = vmatpush1.msra.mxu0 0.0
    %3561 = vmatprep.subr.mxu0 0.0
    %3562 = vmatpush1.msra.mxu0 0.0
    %3563 = vmatprep.subr.mxu0 0.0
    %3564 = vmatpush1.msra.mxu0 0.0
    %3565 = vmatprep.subr.mxu0 0.0
    %3566 = vmatpush1.msra.mxu0 0.0
    %3567 = vmatprep.subr.mxu0 0.0
    %3568 = vmatpush1.msra.mxu0 0.0
    %3569 = vmatprep.subr.mxu0 0.0
    %3570 = vmatpush1.msra.mxu0 0.0
    %3571 = vmatprep.subr.mxu0 0.0
    %3572 = vmatpush1.msra.mxu0 0.0
    %3573 = vmatprep.subr.mxu0 0.0
    %3574 = vmatpush1.msra.mxu0 0.0
    %3575 = vmatprep.subr.mxu0 0.0
    %3576 = vmatpush1.msra.mxu0 0.0
    %3577 = vmatprep.subr.mxu0 0.0
    %3578 = vmatpush1.msra.mxu0 0.0
    %3579 = vmatprep.subr.mxu0 0.0
    %3580 = vmatpush1.msra.mxu0 0.0
    %3581 = vmatprep.subr.mxu0 0.0
    %3582 = vmatpush1.msra.mxu0 0.0
    %3583 = vmatprep.subr.mxu0 0.0
    %3584 = vmatpush1.msra.mxu0 0.0
    %3585 = vmatprep.subr.mxu0 0.0
    %3586 = vmatpush1.msra.mxu0 0.0
    %3587 = vmatprep.subr.mxu0 0.0
    %3588 = vmatpush1.msra.mxu0 0.0
    %3589 = vmatprep.subr.mxu0 0.0
    %3590 = vmatpush1.msra.mxu0 0.0
    %3591 = vmatprep.subr.mxu0 0.0
    %3592 = vmatpush1.msra.mxu0 0.0
    %3593 = vmatprep.subr.mxu0 0.0
    %3594 = vmatpush1.msra.mxu0 0.0
    %3595 = vmatprep.subr.mxu0 0.0
    %3596 = vmatpush1.msra.mxu0 0.0
    %3597 = vmatprep.subr.mxu0 0.0
    %3598 = vmatpush1.msra.mxu0 0.0
    %3599 = vmatprep.subr.mxu0 0.0
    %3600 = vmatpush1.msra.mxu0 0.0
    %3601 = vmatprep.subr.mxu0 0.0
    %3602 = vmatpush1.msra.mxu0 0.0
    %3603 = vmatprep.subr.mxu0 0.0
    %3604 = vmatpush1.msra.mxu0 0.0
    %3605 = vmatprep.subr.mxu0 0.0
    %3606 = vmatpush1.msra.mxu0 0.0
    %3607 = vmatprep.subr.mxu0 0.0
    %3608 = vmatpush1.msra.mxu0 0.0
    %3609 = vmatprep.subr.mxu0 0.0
    %3610 = vmatpush1.msra.mxu0 0.0
    %3611 = vmatprep.subr.mxu0 0.0
    %3612 = vmatpush1.msra.mxu0 0.0
    %3613 = vmatprep.subr.mxu0 0.0
    %3614 = vmatpush1.msra.mxu0 0.0
    %3615 = vmatprep.subr.mxu0 0.0
    %3616 = vmatpush1.msra.mxu0 0.0
    %3617 = vmatprep.mubr.f32.mxu0 0.0
    %3618 = vmatmul.mubr.f32.gmra.mrb[0].mxu0 %v3548
    %v3619 = vpop.f32.mrb[0].mxu0
    %v3620 = vadd.f32 0.0, %v3619
    %v3621 = vpop.f32.mrb[0].mxu0
    %3622 = vmatprep.mubr.f32.mxu0 0.0
    %3623 = vmatmul.mubr.f32.gmra.mrb[0].mxu0 %v3551
    %v3624 = vpop.f32.mrb[0].mxu0
    %v3625 = vadd.f32 0.0, %v3624
    %v3626 = vpop.f32.mrb[0].mxu0
    %3627 = vdwg.mxu0
    %3628 = vrot.lane.b32.xlu0 %v522, 88
    %v3629 = vpop.permute.xlu0 %3628
    %3630 = vrot.lane.b32.xlu0 %v527, 88
    %v3631 = vpop.permute.xlu0 %3630
    %v3635 = vsel %vm336, %v3016, 0
    %v3638 = vsel %vm336, %v3018, 0
    %3640 = vmatprep.subr.mxu0 0.0
    %3641 = vmatpush1.msra.mxu0 %v3629
    %3642 = vmatprep.subr.mxu0 0.0
    %3643 = vmatpush1.msra.mxu0 %v3631
    %3644 = vmatprep.subr.mxu0 0.0
    %3645 = vmatpush1.msra.mxu0 0.0
    %3646 = vmatprep.subr.mxu0 0.0
    %3647 = vmatpush1.msra.mxu0 0.0
    %3648 = vmatprep.subr.mxu0 0.0
    %3649 = vmatpush1.msra.mxu0 0.0
    %3650 = vmatprep.subr.mxu0 0.0
    %3651 = vmatpush1.msra.mxu0 0.0
    %3652 = vmatprep.subr.mxu0 0.0
    %3653 = vmatpush1.msra.mxu0 0.0
    %3654 = vmatprep.subr.mxu0 0.0
    %3655 = vmatpush1.msra.mxu0 0.0
    %3656 = vmatprep.subr.mxu0 0.0
    %3657 = vmatpush1.msra.mxu0 0.0
    %3658 = vmatprep.subr.mxu0 0.0
    %3659 = vmatpush1.msra.mxu0 0.0
    %3660 = vmatprep.subr.mxu0 0.0
    %3661 = vmatpush1.msra.mxu0 0.0
    %3662 = vmatprep.subr.mxu0 0.0
    %3663 = vmatpush1.msra.mxu0 0.0
    %3664 = vmatprep.subr.mxu0 0.0
    %3665 = vmatpush1.msra.mxu0 0.0
    %3666 = vmatprep.subr.mxu0 0.0
    %3667 = vmatpush1.msra.mxu0 0.0
    %3668 = vmatprep.subr.mxu0 0.0
    %3669 = vmatpush1.msra.mxu0 0.0
    %3670 = vmatprep.subr.mxu0 0.0
    %3671 = vmatpush1.msra.mxu0 0.0
    %3672 = vmatprep.subr.mxu0 0.0
    %3673 = vmatpush1.msra.mxu0 0.0
    %3674 = vmatprep.subr.mxu0 0.0
    %3675 = vmatpush1.msra.mxu0 0.0
    %3676 = vmatprep.subr.mxu0 0.0
    %3677 = vmatpush1.msra.mxu0 0.0
    %3678 = vmatprep.subr.mxu0 0.0
    %3679 = vmatpush1.msra.mxu0 0.0
    %3680 = vmatprep.subr.mxu0 0.0
    %3681 = vmatpush1.msra.mxu0 0.0
    %3682 = vmatprep.subr.mxu0 0.0
    %3683 = vmatpush1.msra.mxu0 0.0
    %3684 = vmatprep.subr.mxu0 0.0
    %3685 = vmatpush1.msra.mxu0 0.0
    %3686 = vmatprep.subr.mxu0 0.0
    %3687 = vmatpush1.msra.mxu0 0.0
    %3688 = vmatprep.subr.mxu0 0.0
    %3689 = vmatpush1.msra.mxu0 0.0
    %3690 = vmatprep.subr.mxu0 0.0
    %3691 = vmatpush1.msra.mxu0 0.0
    %3692 = vmatprep.subr.mxu0 0.0
    %3693 = vmatpush1.msra.mxu0 0.0
    %3694 = vmatprep.subr.mxu0 0.0
    %3695 = vmatpush1.msra.mxu0 0.0
    %3696 = vmatprep.subr.mxu0 0.0
    %3697 = vmatpush1.msra.mxu0 0.0
    %3698 = vmatprep.subr.mxu0 0.0
    %3699 = vmatpush1.msra.mxu0 0.0
    %3700 = vmatprep.subr.mxu0 0.0
    %3701 = vmatpush1.msra.mxu0 0.0
    %3702 = vmatprep.subr.mxu0 0.0
    %3703 = vmatpush1.msra.mxu0 0.0
    %3704 = vmatprep.mubr.f32.mxu0 0.0
    %3705 = vmatmul.mubr.f32.gmra.mrb[0].mxu0 %v3635
    %v3706 = vpop.f32.mrb[0].mxu0
    %v3707 = vadd.f32 0.0, %v3706
    %v3708 = vpop.f32.mrb[0].mxu0
    %3709 = vmatprep.mubr.f32.mxu0 0.0
    %3710 = vmatmul.mubr.f32.gmra.mrb[0].mxu0 %v3638
    %v3711 = vpop.f32.mrb[0].mxu0
    %v3712 = vadd.f32 0.0, %v3711
    %v3713 = vpop.f32.mrb[0].mxu0
    %3714 = vdwg.mxu0
    %3731 = vrot.lane.b32.xlu0 %v3098, 8
    %v3732 = vpop.permute.xlu0 %3731
    %3733 = vrot.lane.b32.xlu0 %v3103, 8
    %v3734 = vpop.permute.xlu0 %3733
    %3735 = vrot.lane.b32.xlu0 %v3185, 8
    %v3736 = vpop.permute.xlu0 %3735
    %3737 = vrot.lane.b32.xlu0 %v3190, 8
    %v3738 = vpop.permute.xlu0 %3737
    %3739 = vrot.lane.b32.xlu0 %v3272, 8
    %v3740 = vpop.permute.xlu0 %3739
    %3741 = vrot.lane.b32.xlu0 %v3277, 8
    %v3742 = vpop.permute.xlu0 %3741
    %3743 = vrot.lane.b32.xlu0 %v3359, 8
    %v3744 = vpop.permute.xlu0 %3743
    %3745 = vrot.lane.b32.xlu0 %v3364, 8
    %v3746 = vpop.permute.xlu0 %3745
    %3747 = vrot.lane.b32.xlu0 %v3446, 8
    %v3748 = vpop.permute.xlu0 %3747
    %3749 = vrot.lane.b32.xlu0 %v3451, 8
    %v3750 = vpop.permute.xlu0 %3749
    %3751 = vrot.lane.b32.xlu0 %v3533, 8
    %v3752 = vpop.permute.xlu0 %3751
    %3753 = vrot.lane.b32.xlu0 %v3538, 8
    %v3754 = vpop.permute.xlu0 %3753
    %3755 = vrot.lane.b32.xlu0 %v3620, 8
    %v3756 = vpop.permute.xlu0 %3755
    %3757 = vrot.lane.b32.xlu0 %v3625, 8
    %v3758 = vpop.permute.xlu0 %3757
    %3759 = vrot.lane.b32.xlu0 %v3707, 8
    %v3760 = vpop.permute.xlu0 %3759
    %3761 = vrot.lane.b32.xlu0 %v3712, 8
    %v3762 = vpop.permute.xlu0 %3761
    %v3779 = vsel %vm536, %v1498, %v3732
    %v3780 = vsel %vm536, %v1503, %v3734
    %v3781 = vsel %vm536, %v1585, %v3736
    %v3782 = vsel %vm536, %v1590, %v3738
    %v3783 = vsel %vm536, %v1672, %v3740
    %v3784 = vsel %vm536, %v1677, %v3742
    %v3785 = vsel %vm536, %v1759, %v3744
    %v3786 = vsel %vm536, %v1764, %v3746
    %v3787 = vsel %vm536, %v1846, %v3748
    %v3788 = vsel %vm536, %v1851, %v3750
    %v3789 = vsel %vm536, %v1933, %v3752
    %v3790 = vsel %vm536, %v1938, %v3754
    %v3791 = vsel %vm536, %v2020, %v3756
    %v3792 = vsel %vm536, %v2025, %v3758
    %v3793 = vsel %vm536, %v2107, %v3760
    %v3794 = vsel %vm536, %v2112, %v3762
    %v3795 = vld [vmem:[%s3] sm:$0xff]
    %v3796 = vld [vmem:[%s3 + $0x8] sm:$0xff]
    %v3797 = vld [vmem:[%s4] sm:$0x1]
    %v3799 = vlaneseq
    %v3800 = vshrl.u32 %v3799, 7
    %v3801 = vsub.s32 0, %v3800
    %v3802 = vrot.slane %v3797, %v3801
    %v3805 = vsel %vm336, %v3779, 0
    %v3808 = vsel %vm336, %v3780, 0
    %v3811 = vsel %vm336, %v3781, 0
    %v3814 = vsel %vm336, %v3782, 0
    %v3817 = vsel %vm336, %v3783, 0
    %v3820 = vsel %vm336, %v3784, 0
    %v3823 = vsel %vm336, %v3785, 0
    %v3826 = vsel %vm336, %v3786, 0
    %v3829 = vsel %vm336, %v3787, 0
    %v3832 = vsel %vm336, %v3788, 0
    %v3835 = vsel %vm336, %v3789, 0
    %v3838 = vsel %vm336, %v3790, 0
    %v3841 = vsel %vm336, %v3791, 0
    %v3844 = vsel %vm336, %v3792, 0
    %v3847 = vsel %vm336, %v3793, 0
    %v3850 = vsel %vm336, %v3794, 0
    %3852 = vmatprep.subr.mxu0 0.0
    %3853 = vmatpush1.msra.mxu0 %v3795
    %3854 = vmatprep.subr.mxu0 0.0
    %3855 = vmatpush1.msra.mxu0 %v3796
    %3856 = vmatprep.subr.mxu0 0.0
    %3857 = vmatpush1.msra.mxu0 0.0
    %3858 = vmatprep.subr.mxu0 0.0
    %3859 = vmatpush1.msra.mxu0 0.0
    %3860 = vmatprep.subr.mxu0 0.0
    %3861 = vmatpush1.msra.mxu0 0.0
    %3862 = vmatprep.subr.mxu0 0.0
    %3863 = vmatpush1.msra.mxu0 0.0
    %3864 = vmatprep.subr.mxu0 0.0
    %3865 = vmatpush1.msra.mxu0 0.0
    %3866 = vmatprep.subr.mxu0 0.0
    %3867 = vmatpush1.msra.mxu0 0.0
    %3868 = vmatprep.subr.mxu0 0.0
    %3869 = vmatpush1.msra.mxu0 0.0
    %3870 = vmatprep.subr.mxu0 0.0
    %3871 = vmatpush1.msra.mxu0 0.0
    %3872 = vmatprep.subr.mxu0 0.0
    %3873 = vmatpush1.msra.mxu0 0.0
    %3874 = vmatprep.subr.mxu0 0.0
    %3875 = vmatpush1.msra.mxu0 0.0
    %3876 = vmatprep.subr.mxu0 0.0
    %3877 = vmatpush1.msra.mxu0 0.0
    %3878 = vmatprep.subr.mxu0 0.0
    %3879 = vmatpush1.msra.mxu0 0.0
    %3880 = vmatprep.subr.mxu0 0.0
    %3881 = vmatpush1.msra.mxu0 0.0
    %3882 = vmatprep.subr.mxu0 0.0
    %3883 = vmatpush1.msra.mxu0 0.0
    %3884 = vmatprep.subr.mxu0 0.0
    %3885 = vmatpush1.msra.mxu0 0.0
    %3886 = vmatprep.subr.mxu0 0.0
    %3887 = vmatpush1.msra.mxu0 0.0
    %3888 = vmatprep.subr.mxu0 0.0
    %3889 = vmatpush1.msra.mxu0 0.0
    %3890 = vmatprep.subr.mxu0 0.0
    %3891 = vmatpush1.msra.mxu0 0.0
    %3892 = vmatprep.subr.mxu0 0.0
    %3893 = vmatpush1.msra.mxu0 0.0
    %3894 = vmatprep.subr.mxu0 0.0
    %3895 = vmatpush1.msra.mxu0 0.0
    %3896 = vmatprep.subr.mxu0 0.0
    %3897 = vmatpush1.msra.mxu0 0.0
    %3898 = vmatprep.subr.mxu0 0.0
    %3899 = vmatpush1.msra.mxu0 0.0
    %3900 = vmatprep.subr.mxu0 0.0
    %3901 = vmatpush1.msra.mxu0 0.0
    %3902 = vmatprep.subr.mxu0 0.0
    %3903 = vmatpush1.msra.mxu0 0.0
    %3904 = vmatprep.subr.mxu0 0.0
    %3905 = vmatpush1.msra.mxu0 0.0
    %3906 = vmatprep.subr.mxu0 0.0
    %3907 = vmatpush1.msra.mxu0 0.0
    %3908 = vmatprep.subr.mxu0 0.0
    %3909 = vmatpush1.msra.mxu0 0.0
    %3910 = vmatprep.subr.mxu0 0.0
    %3911 = vmatpush1.msra.mxu0 0.0
    %3912 = vmatprep.subr.mxu0 0.0
    %3913 = vmatpush1.msra.mxu0 0.0
    %3914 = vmatprep.subr.mxu0 0.0
    %3915 = vmatpush1.msra.mxu0 0.0
    %3916 = vmatprep.mubr.f32.mxu0 0.0
    %3917 = vmatmul.mubr.f32.gmra.mrb[0].mxu0 %v3805
    %v3918 = vpop.f32.mrb[0].mxu0
    %v3919 = vadd.f32 %v3802, %v3918
    %v3920 = vpop.f32.mrb[0].mxu0
    %3921 = vmatprep.mubr.f32.mxu0 0.0
    %3922 = vmatmul.mubr.f32.gmra.mrb[0].mxu0 %v3808
    %v3923 = vpop.f32.mrb[0].mxu0
    %v3924 = vadd.f32 %v3802, %v3923
    %v3925 = vpop.f32.mrb[0].mxu0
    %3926 = vmatprep.mubr.f32.mxu0 0.0
    %3927 = vmatmul.mubr.f32.gmra.mrb[0].mxu0 %v3811
    %v3928 = vpop.f32.mrb[0].mxu0
    %v3929 = vadd.f32 %v3802, %v3928
    %v3930 = vpop.f32.mrb[0].mxu0
    %3931 = vmatprep.mubr.f32.mxu0 0.0
    %3932 = vmatmul.mubr.f32.gmra.mrb[0].mxu0 %v3814
    %v3933 = vpop.f32.mrb[0].mxu0
    %v3934 = vadd.f32 %v3802, %v3933
    %v3935 = vpop.f32.mrb[0].mxu0
    %3936 = vmatprep.mubr.f32.mxu0 0.0
    %3937 = vmatmul.mubr.f32.gmra.mrb[0].mxu0 %v3817
    %v3938 = vpop.f32.mrb[0].mxu0
    %v3939 = vadd.f32 %v3802, %v3938
    %v3940 = vpop.f32.mrb[0].mxu0
    %3941 = vmatprep.mubr.f32.mxu0 0.0
    %3942 = vmatmul.mubr.f32.gmra.mrb[0].mxu0 %v3820
    %v3943 = vpop.f32.mrb[0].mxu0
    %v3944 = vadd.f32 %v3802, %v3943
    %v3945 = vpop.f32.mrb[0].mxu0
    %3946 = vmatprep.mubr.f32.mxu0 0.0
    %3947 = vmatmul.mubr.f32.gmra.mrb[0].mxu0 %v3823
    %v3948 = vpop.f32.mrb[0].mxu0
    %v3949 = vadd.f32 %v3802, %v3948
    %v3950 = vpop.f32.mrb[0].mxu0
    %3951 = vmatprep.mubr.f32.mxu0 0.0
    %3952 = vmatmul.mubr.f32.gmra.mrb[0].mxu0 %v3826
    %v3953 = vpop.f32.mrb[0].mxu0
    %v3954 = vadd.f32 %v3802, %v3953
    %v3955 = vpop.f32.mrb[0].mxu0
    %3956 = vmatprep.mubr.f32.mxu0 0.0
    %3957 = vmatmul.mubr.f32.gmra.mrb[0].mxu0 %v3829
    %v3958 = vpop.f32.mrb[0].mxu0
    %v3959 = vadd.f32 %v3802, %v3958
    %v3960 = vpop.f32.mrb[0].mxu0
    %3961 = vmatprep.mubr.f32.mxu0 0.0
    %3962 = vmatmul.mubr.f32.gmra.mrb[0].mxu0 %v3832
    %v3963 = vpop.f32.mrb[0].mxu0
    %v3964 = vadd.f32 %v3802, %v3963
    %v3965 = vpop.f32.mrb[0].mxu0
    %3966 = vmatprep.mubr.f32.mxu0 0.0
    %3967 = vmatmul.mubr.f32.gmra.mrb[0].mxu0 %v3835
    %v3968 = vpop.f32.mrb[0].mxu0
    %v3969 = vadd.f32 %v3802, %v3968
    %v3970 = vpop.f32.mrb[0].mxu0
    %3971 = vmatprep.mubr.f32.mxu0 0.0
    %3972 = vmatmul.mubr.f32.gmra.mrb[0].mxu0 %v3838
    %v3973 = vpop.f32.mrb[0].mxu0
    %v3974 = vadd.f32 %v3802, %v3973
    %v3975 = vpop.f32.mrb[0].mxu0
    %3976 = vmatprep.mubr.f32.mxu0 0.0
    %3977 = vmatmul.mubr.f32.gmra.mrb[0].mxu0 %v3841
    %v3978 = vpop.f32.mrb[0].mxu0
    %v3979 = vadd.f32 %v3802, %v3978
    %v3980 = vpop.f32.mrb[0].mxu0
    %3981 = vmatprep.mubr.f32.mxu0 0.0
    %3982 = vmatmul.mubr.f32.gmra.mrb[0].mxu0 %v3844
    %v3983 = vpop.f32.mrb[0].mxu0
    %v3984 = vadd.f32 %v3802, %v3983
    %v3985 = vpop.f32.mrb[0].mxu0
    %3986 = vmatprep.mubr.f32.mxu0 0.0
    %3987 = vmatmul.mubr.f32.gmra.mrb[0].mxu0 %v3847
    %v3988 = vpop.f32.mrb[0].mxu0
    %v3989 = vadd.f32 %v3802, %v3988
    %v3990 = vpop.f32.mrb[0].mxu0
    %3991 = vmatprep.mubr.f32.mxu0 0.0
    %3992 = vmatmul.mubr.f32.gmra.mrb[0].mxu0 %v3850
    %v3993 = vpop.f32.mrb[0].mxu0
    %v3994 = vadd.f32 %v3802, %v3993
    %v3995 = vpop.f32.mrb[0].mxu0
    %3996 = vdwg.mxu0
    %v3997 = vadd.f32 %v3919, %v87
    %v3998 = vadd.f32 %v3924, %v88
    %v3999 = vadd.f32 %v3929, %v119
    %v4000 = vadd.f32 %v3934, %v120
    %v4001 = vadd.f32 %v3939, %v151
    %v4002 = vadd.f32 %v3944, %v152
    %v4003 = vadd.f32 %v3949, %v183
    %v4004 = vadd.f32 %v3954, %v184
    %v4005 = vadd.f32 %v3959, %v215
    %v4006 = vadd.f32 %v3964, %v216
    %v4007 = vadd.f32 %v3969, %v247
    %v4008 = vadd.f32 %v3974, %v248
    %v4009 = vadd.f32 %v3979, %v279
    %v4010 = vadd.f32 %v3984, %v280
    %v4011 = vadd.f32 %v3989, %v311
    %v4012 = vadd.f32 %v3994, %v312
    %v4013 = vsel %vm336, %v3997, 0.0
    %4014 = vadd.xlane.f32.xlu0 %v4013
    %v4015 = vpop.xlane.xlu0 %4014
    %v4016 = vsel %vm336, %v3998, 0.0
    %4017 = vadd.xlane.f32.xlu0 %v4016
    %v4018 = vpop.xlane.xlu0 %4017
    %v4019 = vsel %vm336, %v3999, 0.0
    %4020 = vadd.xlane.f32.xlu0 %v4019
    %v4021 = vpop.xlane.xlu0 %4020
    %v4022 = vsel %vm336, %v4000, 0.0
    %4023 = vadd.xlane.f32.xlu0 %v4022
    %v4024 = vpop.xlane.xlu0 %4023
    %v4025 = vsel %vm336, %v4001, 0.0
    %4026 = vadd.xlane.f32.xlu0 %v4025
    %v4027 = vpop.xlane.xlu0 %4026
    %v4028 = vsel %vm336, %v4002, 0.0
    %4029 = vadd.xlane.f32.xlu0 %v4028
    %v4030 = vpop.xlane.xlu0 %4029
    %v4031 = vsel %vm336, %v4003, 0.0
    %4032 = vadd.xlane.f32.xlu0 %v4031
    %v4033 = vpop.xlane.xlu0 %4032
    %v4034 = vsel %vm336, %v4004, 0.0
    %4035 = vadd.xlane.f32.xlu0 %v4034
    %v4036 = vpop.xlane.xlu0 %4035
    %v4037 = vsel %vm336, %v4005, 0.0
    %4038 = vadd.xlane.f32.xlu0 %v4037
    %v4039 = vpop.xlane.xlu0 %4038
    %v4040 = vsel %vm336, %v4006, 0.0
    %4041 = vadd.xlane.f32.xlu0 %v4040
    %v4042 = vpop.xlane.xlu0 %4041
    %v4043 = vsel %vm336, %v4007, 0.0
    %4044 = vadd.xlane.f32.xlu0 %v4043
    %v4045 = vpop.xlane.xlu0 %4044
    %v4046 = vsel %vm336, %v4008, 0.0
    %4047 = vadd.xlane.f32.xlu0 %v4046
    %v4048 = vpop.xlane.xlu0 %4047
    %v4049 = vsel %vm336, %v4009, 0.0
    %4050 = vadd.xlane.f32.xlu0 %v4049
    %v4051 = vpop.xlane.xlu0 %4050
    %v4052 = vsel %vm336, %v4010, 0.0
    %4053 = vadd.xlane.f32.xlu0 %v4052
    %v4054 = vpop.xlane.xlu0 %4053
    %v4055 = vsel %vm336, %v4011, 0.0
    %4056 = vadd.xlane.f32.xlu0 %v4055
    %v4057 = vpop.xlane.xlu0 %4056
    %v4058 = vsel %vm336, %v4012, 0.0
    %4059 = vadd.xlane.f32.xlu0 %v4058
    %v4060 = vpop.xlane.xlu0 %4059
    %v4061 = vadd.f32 %v4015, %v4018
    %v4062 = vrot.slane %v4061, 4
    %v4063 = vadd.f32 %v4061, %v4062
    %v4064 = vrot.slane %v4063, 2
    %v4065 = vadd.f32 %v4063, %v4064
    %v4066 = vrot.slane %v4065, 1
    %v4067 = vadd.f32 %v4065, %v4066
    %v4068 = vadd.f32 %v4021, %v4024
    %v4069 = vrot.slane %v4068, 4
    %v4070 = vadd.f32 %v4068, %v4069
    %v4071 = vrot.slane %v4070, 2
    %v4072 = vadd.f32 %v4070, %v4071
    %v4073 = vrot.slane %v4072, 1
    %v4074 = vadd.f32 %v4072, %v4073
    %v4075 = vadd.f32 %v4027, %v4030
    %v4076 = vrot.slane %v4075, 4
    %v4077 = vadd.f32 %v4075, %v4076
    %v4078 = vrot.slane %v4077, 2
    %v4079 = vadd.f32 %v4077, %v4078
    %v4080 = vrot.slane %v4079, 1
    %v4081 = vadd.f32 %v4079, %v4080
    %v4082 = vadd.f32 %v4033, %v4036
    %v4083 = vrot.slane %v4082, 4
    %v4084 = vadd.f32 %v4082, %v4083
    %v4085 = vrot.slane %v4084, 2
    %v4086 = vadd.f32 %v4084, %v4085
    %v4087 = vrot.slane %v4086, 1
    %v4088 = vadd.f32 %v4086, %v4087
    %v4089 = vadd.f32 %v4039, %v4042
    %v4090 = vrot.slane %v4089, 4
    %v4091 = vadd.f32 %v4089, %v4090
    %v4092 = vrot.slane %v4091, 2
    %v4093 = vadd.f32 %v4091, %v4092
    %v4094 = vrot.slane %v4093, 1
    %v4095 = vadd.f32 %v4093, %v4094
    %v4096 = vadd.f32 %v4045, %v4048
    %v4097 = vrot.slane %v4096, 4
    %v4098 = vadd.f32 %v4096, %v4097
    %v4099 = vrot.slane %v4098, 2
    %v4100 = vadd.f32 %v4098, %v4099
    %v4101 = vrot.slane %v4100, 1
    %v4102 = vadd.f32 %v4100, %v4101
    %v4103 = vadd.f32 %v4051, %v4054
    %v4104 = vrot.slane %v4103, 4
    %v4105 = vadd.f32 %v4103, %v4104
    %v4106 = vrot.slane %v4105, 2
    %v4107 = vadd.f32 %v4105, %v4106
    %v4108 = vrot.slane %v4107, 1
    %v4109 = vadd.f32 %v4107, %v4108
    %v4110 = vadd.f32 %v4057, %v4060
    %v4111 = vrot.slane %v4110, 4
    %v4112 = vadd.f32 %v4110, %v4111
    %v4113 = vrot.slane %v4112, 2
    %v4114 = vadd.f32 %v4112, %v4113
    %v4115 = vrot.slane %v4114, 1
    %v4116 = vadd.f32 %v4114, %v4115
    %v4117 = vadd.f32 %v4067, %v4095
    %v4118 = vadd.f32 %v4074, %v4102
    %v4119 = vadd.f32 %v4081, %v4109
    %v4120 = vadd.f32 %v4088, %v4116
    %v4121 = vmul.f32 %v4117, 0.001953125
    %v4122 = vmul.f32 %v4118, 0.001953125
    %v4123 = vmul.f32 %v4119, 0.001953125
    %v4124 = vmul.f32 %v4120, 0.001953125
    %v4125 = vsub.f32 %v3997, %v4121
    %v4126 = vsub.f32 %v3998, %v4121
    %v4127 = vsub.f32 %v3999, %v4122
    %v4128 = vsub.f32 %v4000, %v4122
    %v4129 = vsub.f32 %v4001, %v4123
    %v4130 = vsub.f32 %v4002, %v4123
    %v4131 = vsub.f32 %v4003, %v4124
    %v4132 = vsub.f32 %v4004, %v4124
    %v4133 = vsub.f32 %v4005, %v4121
    %v4134 = vsub.f32 %v4006, %v4121
    %v4135 = vsub.f32 %v4007, %v4122
    %v4136 = vsub.f32 %v4008, %v4122
    %v4137 = vsub.f32 %v4009, %v4123
    %v4138 = vsub.f32 %v4010, %v4123
    %v4139 = vsub.f32 %v4011, %v4124
    %v4140 = vsub.f32 %v4012, %v4124
    %v4141 = vmul.f32 %v4125, %v4125
    %v4142 = vmul.f32 %v4126, %v4126
    %v4143 = vmul.f32 %v4127, %v4127
    %v4144 = vmul.f32 %v4128, %v4128
    %v4145 = vmul.f32 %v4129, %v4129
    %v4146 = vmul.f32 %v4130, %v4130
    %v4147 = vmul.f32 %v4131, %v4131
    %v4148 = vmul.f32 %v4132, %v4132
    %v4149 = vmul.f32 %v4133, %v4133
    %v4150 = vmul.f32 %v4134, %v4134
    %v4151 = vmul.f32 %v4135, %v4135
    %v4152 = vmul.f32 %v4136, %v4136
    %v4153 = vmul.f32 %v4137, %v4137
    %v4154 = vmul.f32 %v4138, %v4138
    %v4155 = vmul.f32 %v4139, %v4139
    %v4156 = vmul.f32 %v4140, %v4140
    %v4157 = vsel %vm336, %v4141, 0.0
    %4158 = vadd.xlane.f32.xlu0 %v4157
    %v4159 = vpop.xlane.xlu0 %4158
    %v4160 = vsel %vm336, %v4142, 0.0
    %4161 = vadd.xlane.f32.xlu0 %v4160
    %v4162 = vpop.xlane.xlu0 %4161
    %v4163 = vsel %vm336, %v4143, 0.0
    %4164 = vadd.xlane.f32.xlu0 %v4163
    %v4165 = vpop.xlane.xlu0 %4164
    %v4166 = vsel %vm336, %v4144, 0.0
    %4167 = vadd.xlane.f32.xlu0 %v4166
    %v4168 = vpop.xlane.xlu0 %4167
    %v4169 = vsel %vm336, %v4145, 0.0
    %4170 = vadd.xlane.f32.xlu0 %v4169
    %v4171 = vpop.xlane.xlu0 %4170
    %v4172 = vsel %vm336, %v4146, 0.0
    %4173 = vadd.xlane.f32.xlu0 %v4172
    %v4174 = vpop.xlane.xlu0 %4173
    %v4175 = vsel %vm336, %v4147, 0.0
    %4176 = vadd.xlane.f32.xlu0 %v4175
    %v4177 = vpop.xlane.xlu0 %4176
    %v4178 = vsel %vm336, %v4148, 0.0
    %4179 = vadd.xlane.f32.xlu0 %v4178
    %v4180 = vpop.xlane.xlu0 %4179
    %v4181 = vsel %vm336, %v4149, 0.0
    %4182 = vadd.xlane.f32.xlu0 %v4181
    %v4183 = vpop.xlane.xlu0 %4182
    %v4184 = vsel %vm336, %v4150, 0.0
    %4185 = vadd.xlane.f32.xlu0 %v4184
    %v4186 = vpop.xlane.xlu0 %4185
    %v4187 = vsel %vm336, %v4151, 0.0
    %4188 = vadd.xlane.f32.xlu0 %v4187
    %v4189 = vpop.xlane.xlu0 %4188
    %v4190 = vsel %vm336, %v4152, 0.0
    %4191 = vadd.xlane.f32.xlu0 %v4190
    %v4192 = vpop.xlane.xlu0 %4191
    %v4193 = vsel %vm336, %v4153, 0.0
    %4194 = vadd.xlane.f32.xlu0 %v4193
    %v4195 = vpop.xlane.xlu0 %4194
    %v4196 = vsel %vm336, %v4154, 0.0
    %4197 = vadd.xlane.f32.xlu0 %v4196
    %v4198 = vpop.xlane.xlu0 %4197
    %v4199 = vsel %vm336, %v4155, 0.0
    %4200 = vadd.xlane.f32.xlu0 %v4199
    %v4201 = vpop.xlane.xlu0 %4200
    %v4202 = vsel %vm336, %v4156, 0.0
    %4203 = vadd.xlane.f32.xlu0 %v4202
    %v4204 = vpop.xlane.xlu0 %4203
    %v4205 = vadd.f32 %v4159, %v4162
    %v4206 = vrot.slane %v4205, 4
    %v4207 = vadd.f32 %v4205, %v4206
    %v4208 = vrot.slane %v4207, 2
    %v4209 = vadd.f32 %v4207, %v4208
    %v4210 = vrot.slane %v4209, 1
    %v4211 = vadd.f32 %v4209, %v4210
    %v4212 = vadd.f32 %v4165, %v4168
    %v4213 = vrot.slane %v4212, 4
    %v4214 = vadd.f32 %v4212, %v4213
    %v4215 = vrot.slane %v4214, 2
    %v4216 = vadd.f32 %v4214, %v4215
    %v4217 = vrot.slane %v4216, 1
    %v4218 = vadd.f32 %v4216, %v4217
    %v4219 = vadd.f32 %v4171, %v4174
    %v4220 = vrot.slane %v4219, 4
    %v4221 = vadd.f32 %v4219, %v4220
    %v4222 = vrot.slane %v4221, 2
    %v4223 = vadd.f32 %v4221, %v4222
    %v4224 = vrot.slane %v4223, 1
    %v4225 = vadd.f32 %v4223, %v4224
    %v4226 = vadd.f32 %v4177, %v4180
    %v4227 = vrot.slane %v4226, 4
    %v4228 = vadd.f32 %v4226, %v4227
    %v4229 = vrot.slane %v4228, 2
    %v4230 = vadd.f32 %v4228, %v4229
    %v4231 = vrot.slane %v4230, 1
    %v4232 = vadd.f32 %v4230, %v4231
    %v4233 = vadd.f32 %v4183, %v4186
    %v4234 = vrot.slane %v4233, 4
    %v4235 = vadd.f32 %v4233, %v4234
    %v4236 = vrot.slane %v4235, 2
    %v4237 = vadd.f32 %v4235, %v4236
    %v4238 = vrot.slane %v4237, 1
    %v4239 = vadd.f32 %v4237, %v4238
    %v4240 = vadd.f32 %v4189, %v4192
    %v4241 = vrot.slane %v4240, 4
    %v4242 = vadd.f32 %v4240, %v4241
    %v4243 = vrot.slane %v4242, 2
    %v4244 = vadd.f32 %v4242, %v4243
    %v4245 = vrot.slane %v4244, 1
    %v4246 = vadd.f32 %v4244, %v4245
    %v4247 = vadd.f32 %v4195, %v4198
    %v4248 = vrot.slane %v4247, 4
    %v4249 = vadd.f32 %v4247, %v4248
    %v4250 = vrot.slane %v4249, 2
    %v4251 = vadd.f32 %v4249, %v4250
    %v4252 = vrot.slane %v4251, 1
    %v4253 = vadd.f32 %v4251, %v4252
    %v4254 = vadd.f32 %v4201, %v4204
    %v4255 = vrot.slane %v4254, 4
    %v4256 = vadd.f32 %v4254, %v4255
    %v4257 = vrot.slane %v4256, 2
    %v4258 = vadd.f32 %v4256, %v4257
    %v4259 = vrot.slane %v4258, 1
    %v4260 = vadd.f32 %v4258, %v4259
    %v4261 = vadd.f32 %v4211, %v4239
    %v4262 = vadd.f32 %v4218, %v4246
    %v4263 = vadd.f32 %v4225, %v4253
    %v4264 = vadd.f32 %v4232, %v4260
    %v4265 = vmul.f32 %v4261, 0.001953125
    %v4266 = vmul.f32 %v4262, 0.001953125
    %v4267 = vmul.f32 %v4263, 0.001953125
    %v4268 = vmul.f32 %v4264, 0.001953125
    %v4269 = vadd.f32 %v4265, 1e-05
    %v4270 = vadd.f32 %v4266, 1e-05
    %v4271 = vadd.f32 %v4267, 1e-05
    %v4272 = vadd.f32 %v4268, 1e-05
    %v4273 = vrsqrt.pop %v4269
    %v4274 = vrsqrt.pop %v4270
    %v4275 = vrsqrt.pop %v4271
    %v4276 = vrsqrt.pop %v4272
    %v4277 = vld [vmem:[%s5] sm:$0x1]
    %v4278 = vld [vmem:[%s5 + $0x1] sm:$0x1]
    %v4279 = vld [vmem:[%s5 + $0x2] sm:$0x1]
    %v4280 = vld [vmem:[%s5 + $0x3] sm:$0x1]
    %v4281 = vmul.f32 %v4273, %v4277
    %v4282 = vmul.f32 %v4274, %v4278
    %v4283 = vmul.f32 %v4275, %v4279
    %v4284 = vmul.f32 %v4276, %v4280
    %v4285 = vld [vmem:[%s6] sm:$0x1]
    %v4286 = vld [vmem:[%s6 + $0x1] sm:$0x1]
    %v4287 = vld [vmem:[%s6 + $0x2] sm:$0x1]
    %v4288 = vld [vmem:[%s6 + $0x3] sm:$0x1]
    %v4289 = vmul.f32 %v4121, %v4281
    %v4290 = vmul.f32 %v4122, %v4282
    %v4291 = vmul.f32 %v4123, %v4283
    %v4292 = vmul.f32 %v4124, %v4284
    %v4293 = vsub.f32 %v4285, %v4289
    %v4294 = vsub.f32 %v4286, %v4290
    %v4295 = vsub.f32 %v4287, %v4291
    %v4296 = vsub.f32 %v4288, %v4292
    %v4301 = vlaneseq
    %v4302 = vshrl.u32 %v4301, 7
    %v4303 = vsub.s32 0, %v4302
    %v4304 = vrot.slane %v4281, %v4303
    %v4305 = vlaneseq
    %v4306 = vshrl.u32 %v4305, 7
    %v4307 = vsub.s32 0, %v4306
    %v4308 = vrot.slane %v4282, %v4307
    %v4309 = vlaneseq
    %v4310 = vshrl.u32 %v4309, 7
    %v4311 = vsub.s32 0, %v4310
    %v4312 = vrot.slane %v4283, %v4311
    %v4313 = vlaneseq
    %v4314 = vshrl.u32 %v4313, 7
    %v4315 = vsub.s32 0, %v4314
    %v4316 = vrot.slane %v4284, %v4315
    %4317 = vset.pattern.permute.xlu0 0
    %4318 = vperm.xlu0 %4317, %v4304
    %v4319 = vpop.permute.xlu0 %4318
    %4321 = vset.pattern.permute.xlu0 0
    %4322 = vperm.xlu0 %4321, %v4308
    %v4323 = vpop.permute.xlu0 %4322
    %4325 = vset.pattern.permute.xlu0 0
    %4326 = vperm.xlu0 %4325, %v4312
    %v4327 = vpop.permute.xlu0 %4326
    %4329 = vset.pattern.permute.xlu0 0
    %4330 = vperm.xlu0 %4329, %v4316
    %v4331 = vpop.permute.xlu0 %4330
    %v4333 = vmul.f32 %v3997, %v4319
    %v4334 = vmul.f32 %v3998, %v4319
    %v4335 = vmul.f32 %v3999, %v4323
    %v4336 = vmul.f32 %v4000, %v4323
    %v4337 = vmul.f32 %v4001, %v4327
    %v4338 = vmul.f32 %v4002, %v4327
    %v4339 = vmul.f32 %v4003, %v4331
    %v4340 = vmul.f32 %v4004, %v4331
    %v4341 = vmul.f32 %v4005, %v4319
    %v4342 = vmul.f32 %v4006, %v4319
    %v4343 = vmul.f32 %v4007, %v4323
    %v4344 = vmul.f32 %v4008, %v4323
    %v4345 = vmul.f32 %v4009, %v4327
    %v4346 = vmul.f32 %v4010, %v4327
    %v4347 = vmul.f32 %v4011, %v4331
    %v4348 = vmul.f32 %v4012, %v4331
    %v4353 = vlaneseq
    %v4354 = vshrl.u32 %v4353, 7
    %v4355 = vsub.s32 0, %v4354
    %v4356 = vrot.slane %v4293, %v4355
    %v4357 = vlaneseq
    %v4358 = vshrl.u32 %v4357, 7
    %v4359 = vsub.s32 0, %v4358
    %v4360 = vrot.slane %v4294, %v4359
    %v4361 = vlaneseq
    %v4362 = vshrl.u32 %v4361, 7
    %v4363 = vsub.s32 0, %v4362
    %v4364 = vrot.slane %v4295, %v4363
    %v4365 = vlaneseq
    %v4366 = vshrl.u32 %v4365, 7
    %v4367 = vsub.s32 0, %v4366
    %v4368 = vrot.slane %v4296, %v4367
    %4369 = vset.pattern.permute.xlu0 0
    %4370 = vperm.xlu0 %4369, %v4356
    %v4371 = vpop.permute.xlu0 %4370
    %4373 = vset.pattern.permute.xlu0 0
    %4374 = vperm.xlu0 %4373, %v4360
    %v4375 = vpop.permute.xlu0 %4374
    %4377 = vset.pattern.permute.xlu0 0
    %4378 = vperm.xlu0 %4377, %v4364
    %v4379 = vpop.permute.xlu0 %4378
    %4381 = vset.pattern.permute.xlu0 0
    %4382 = vperm.xlu0 %4381, %v4368
    %v4383 = vpop.permute.xlu0 %4382
    %v4385 = vadd.f32 %v4333, %v4371
    %v4386 = vadd.f32 %v4334, %v4371
    %v4387 = vadd.f32 %v4335, %v4375
    %v4388 = vadd.f32 %v4336, %v4375
    %v4389 = vadd.f32 %v4337, %v4379
    %v4390 = vadd.f32 %v4338, %v4379
    %v4391 = vadd.f32 %v4339, %v4383
    %v4392 = vadd.f32 %v4340, %v4383
    %v4393 = vadd.f32 %v4341, %v4371
    %v4394 = vadd.f32 %v4342, %v4371
    %v4395 = vadd.f32 %v4343, %v4375
    %v4396 = vadd.f32 %v4344, %v4375
    %v4397 = vadd.f32 %v4345, %v4379
    %v4398 = vadd.f32 %v4346, %v4379
    %v4399 = vadd.f32 %v4347, %v4383
    %v4400 = vadd.f32 %v4348, %v4383
    %4401 = vxpose.xlu0.b32.start [1/16] %v4385, 128
    %4402 = vxpose.xlu0.b32.cont [2/16] %v4386, 128
    %4403 = vxpose.xlu0.b32.cont [3/16] 0.0, 128
    %4404 = vxpose.xlu0.b32.cont [4/16] 0.0, 128
    %4405 = vxpose.xlu0.b32.cont [5/16] 0.0, 128
    %4406 = vxpose.xlu0.b32.cont [6/16] 0.0, 128
    %4407 = vxpose.xlu0.b32.cont [7/16] 0.0, 128
    %4408 = vxpose.xlu0.b32.cont [8/16] 0.0, 128
    %4409 = vxpose.xlu0.b32.cont [9/16] 0.0, 128
    %4410 = vxpose.xlu0.b32.cont [10/16] 0.0, 128
    %4411 = vxpose.xlu0.b32.cont [11/16] 0.0, 128
    %4412 = vxpose.xlu0.b32.cont [12/16] 0.0, 128
    %4413 = vxpose.xlu0.b32.cont [13/16] 0.0, 128
    %4414 = vxpose.xlu0.b32.cont [14/16] 0.0, 128
    %4415 = vxpose.xlu0.b32.cont [15/16] 0.0, 128
    %4416 = vxpose.xlu0.b32.end [16/16] 0.0, 128
    %v4417 = vpop.trf.xlu0
    %v4418 = vpop.trf.xlu0
    %v4419 = vpop.trf.xlu0
    %v4420 = vpop.trf.xlu0
    %v4421 = vpop.trf.xlu0
    %v4422 = vpop.trf.xlu0
    %v4423 = vpop.trf.xlu0
    %v4424 = vpop.trf.xlu0
    %v4425 = vpop.trf.xlu0
    %v4426 = vpop.trf.xlu0
    %v4427 = vpop.trf.xlu0
    %v4428 = vpop.trf.xlu0
    %v4429 = vpop.trf.xlu0
    %v4430 = vpop.trf.xlu0
    %v4431 = vpop.trf.xlu0
    %v4432 = vpop.trf.xlu0
    %4433 = vxpose.xlu0.b32.start [1/16] %v4387, 128
    %4434 = vxpose.xlu0.b32.cont [2/16] %v4388, 128
    %4435 = vxpose.xlu0.b32.cont [3/16] 0.0, 128
    %4436 = vxpose.xlu0.b32.cont [4/16] 0.0, 128
    %4437 = vxpose.xlu0.b32.cont [5/16] 0.0, 128
    %4438 = vxpose.xlu0.b32.cont [6/16] 0.0, 128
    %4439 = vxpose.xlu0.b32.cont [7/16] 0.0, 128
    %4440 = vxpose.xlu0.b32.cont [8/16] 0.0, 128
    %4441 = vxpose.xlu0.b32.cont [9/16] 0.0, 128
    %4442 = vxpose.xlu0.b32.cont [10/16] 0.0, 128
    %4443 = vxpose.xlu0.b32.cont [11/16] 0.0, 128
    %4444 = vxpose.xlu0.b32.cont [12/16] 0.0, 128
    %4445 = vxpose.xlu0.b32.cont [13/16] 0.0, 128
    %4446 = vxpose.xlu0.b32.cont [14/16] 0.0, 128
    %4447 = vxpose.xlu0.b32.cont [15/16] 0.0, 128
    %4448 = vxpose.xlu0.b32.end [16/16] 0.0, 128
    %v4449 = vpop.trf.xlu0
    %v4450 = vpop.trf.xlu0
    %v4451 = vpop.trf.xlu0
    %v4452 = vpop.trf.xlu0
    %v4453 = vpop.trf.xlu0
    %v4454 = vpop.trf.xlu0
    %v4455 = vpop.trf.xlu0
    %v4456 = vpop.trf.xlu0
    %v4457 = vpop.trf.xlu0
    %v4458 = vpop.trf.xlu0
    %v4459 = vpop.trf.xlu0
    %v4460 = vpop.trf.xlu0
    %v4461 = vpop.trf.xlu0
    %v4462 = vpop.trf.xlu0
    %v4463 = vpop.trf.xlu0
    %v4464 = vpop.trf.xlu0
    %4465 = vxpose.xlu0.b32.start [1/16] %v4389, 128
    %4466 = vxpose.xlu0.b32.cont [2/16] %v4390, 128
    %4467 = vxpose.xlu0.b32.cont [3/16] 0.0, 128
    %4468 = vxpose.xlu0.b32.cont [4/16] 0.0, 128
    %4469 = vxpose.xlu0.b32.cont [5/16] 0.0, 128
    %4470 = vxpose.xlu0.b32.cont [6/16] 0.0, 128
    %4471 = vxpose.xlu0.b32.cont [7/16] 0.0, 128
    %4472 = vxpose.xlu0.b32.cont [8/16] 0.0, 128
    %4473 = vxpose.xlu0.b32.cont [9/16] 0.0, 128
    %4474 = vxpose.xlu0.b32.cont [10/16] 0.0, 128
    %4475 = vxpose.xlu0.b32.cont [11/16] 0.0, 128
    %4476 = vxpose.xlu0.b32.cont [12/16] 0.0, 128
    %4477 = vxpose.xlu0.b32.cont [13/16] 0.0, 128
    %4478 = vxpose.xlu0.b32.cont [14/16] 0.0, 128
    %4479 = vxpose.xlu0.b32.cont [15/16] 0.0, 128
    %4480 = vxpose.xlu0.b32.end [16/16] 0.0, 128
    %v4481 = vpop.trf.xlu0
    %v4482 = vpop.trf.xlu0
    %v4483 = vpop.trf.xlu0
    %v4484 = vpop.trf.xlu0
    %v4485 = vpop.trf.xlu0
    %v4486 = vpop.trf.xlu0
    %v4487 = vpop.trf.xlu0
    %v4488 = vpop.trf.xlu0
    %v4489 = vpop.trf.xlu0
    %v4490 = vpop.trf.xlu0
    %v4491 = vpop.trf.xlu0
    %v4492 = vpop.trf.xlu0
    %v4493 = vpop.trf.xlu0
    %v4494 = vpop.trf.xlu0
    %v4495 = vpop.trf.xlu0
    %v4496 = vpop.trf.xlu0
    %4497 = vxpose.xlu0.b32.start [1/16] %v4391, 128
    %4498 = vxpose.xlu0.b32.cont [2/16] %v4392, 128
    %4499 = vxpose.xlu0.b32.cont [3/16] 0.0, 128
    %4500 = vxpose.xlu0.b32.cont [4/16] 0.0, 128
    %4501 = vxpose.xlu0.b32.cont [5/16] 0.0, 128
    %4502 = vxpose.xlu0.b32.cont [6/16] 0.0, 128
    %4503 = vxpose.xlu0.b32.cont [7/16] 0.0, 128
    %4504 = vxpose.xlu0.b32.cont [8/16] 0.0, 128
    %4505 = vxpose.xlu0.b32.cont [9/16] 0.0, 128
    %4506 = vxpose.xlu0.b32.cont [10/16] 0.0, 128
    %4507 = vxpose.xlu0.b32.cont [11/16] 0.0, 128
    %4508 = vxpose.xlu0.b32.cont [12/16] 0.0, 128
    %4509 = vxpose.xlu0.b32.cont [13/16] 0.0, 128
    %4510 = vxpose.xlu0.b32.cont [14/16] 0.0, 128
    %4511 = vxpose.xlu0.b32.cont [15/16] 0.0, 128
    %4512 = vxpose.xlu0.b32.end [16/16] 0.0, 128
    %v4513 = vpop.trf.xlu0
    %v4514 = vpop.trf.xlu0
    %v4515 = vpop.trf.xlu0
    %v4516 = vpop.trf.xlu0
    %v4517 = vpop.trf.xlu0
    %v4518 = vpop.trf.xlu0
    %v4519 = vpop.trf.xlu0
    %v4520 = vpop.trf.xlu0
    %v4521 = vpop.trf.xlu0
    %v4522 = vpop.trf.xlu0
    %v4523 = vpop.trf.xlu0
    %v4524 = vpop.trf.xlu0
    %v4525 = vpop.trf.xlu0
    %v4526 = vpop.trf.xlu0
    %v4527 = vpop.trf.xlu0
    %v4528 = vpop.trf.xlu0
    %4529 = vxpose.xlu0.b32.start [1/16] %v4393, 128
    %4530 = vxpose.xlu0.b32.cont [2/16] %v4394, 128
    %4531 = vxpose.xlu0.b32.cont [3/16] 0.0, 128
    %4532 = vxpose.xlu0.b32.cont [4/16] 0.0, 128
    %4533 = vxpose.xlu0.b32.cont [5/16] 0.0, 128
    %4534 = vxpose.xlu0.b32.cont [6/16] 0.0, 128
    %4535 = vxpose.xlu0.b32.cont [7/16] 0.0, 128
    %4536 = vxpose.xlu0.b32.cont [8/16] 0.0, 128
    %4537 = vxpose.xlu0.b32.cont [9/16] 0.0, 128
    %4538 = vxpose.xlu0.b32.cont [10/16] 0.0, 128
    %4539 = vxpose.xlu0.b32.cont [11/16] 0.0, 128
    %4540 = vxpose.xlu0.b32.cont [12/16] 0.0, 128
    %4541 = vxpose.xlu0.b32.cont [13/16] 0.0, 128
    %4542 = vxpose.xlu0.b32.cont [14/16] 0.0, 128
    %4543 = vxpose.xlu0.b32.cont [15/16] 0.0, 128
    %4544 = vxpose.xlu0.b32.end [16/16] 0.0, 128
    %v4545 = vpop.trf.xlu0
    %v4546 = vpop.trf.xlu0
    %v4547 = vpop.trf.xlu0
    %v4548 = vpop.trf.xlu0
    %v4549 = vpop.trf.xlu0
    %v4550 = vpop.trf.xlu0
    %v4551 = vpop.trf.xlu0
    %v4552 = vpop.trf.xlu0
    %v4553 = vpop.trf.xlu0
    %v4554 = vpop.trf.xlu0
    %v4555 = vpop.trf.xlu0
    %v4556 = vpop.trf.xlu0
    %v4557 = vpop.trf.xlu0
    %v4558 = vpop.trf.xlu0
    %v4559 = vpop.trf.xlu0
    %v4560 = vpop.trf.xlu0
    %4561 = vxpose.xlu0.b32.start [1/16] %v4395, 128
    %4562 = vxpose.xlu0.b32.cont [2/16] %v4396, 128
    %4563 = vxpose.xlu0.b32.cont [3/16] 0.0, 128
    %4564 = vxpose.xlu0.b32.cont [4/16] 0.0, 128
    %4565 = vxpose.xlu0.b32.cont [5/16] 0.0, 128
    %4566 = vxpose.xlu0.b32.cont [6/16] 0.0, 128
    %4567 = vxpose.xlu0.b32.cont [7/16] 0.0, 128
    %4568 = vxpose.xlu0.b32.cont [8/16] 0.0, 128
    %4569 = vxpose.xlu0.b32.cont [9/16] 0.0, 128
    %4570 = vxpose.xlu0.b32.cont [10/16] 0.0, 128
    %4571 = vxpose.xlu0.b32.cont [11/16] 0.0, 128
    %4572 = vxpose.xlu0.b32.cont [12/16] 0.0, 128
    %4573 = vxpose.xlu0.b32.cont [13/16] 0.0, 128
    %4574 = vxpose.xlu0.b32.cont [14/16] 0.0, 128
    %4575 = vxpose.xlu0.b32.cont [15/16] 0.0, 128
    %4576 = vxpose.xlu0.b32.end [16/16] 0.0, 128
    %v4577 = vpop.trf.xlu0
    %v4578 = vpop.trf.xlu0
    %v4579 = vpop.trf.xlu0
    %v4580 = vpop.trf.xlu0
    %v4581 = vpop.trf.xlu0
    %v4582 = vpop.trf.xlu0
    %v4583 = vpop.trf.xlu0
    %v4584 = vpop.trf.xlu0
    %v4585 = vpop.trf.xlu0
    %v4586 = vpop.trf.xlu0
    %v4587 = vpop.trf.xlu0
    %v4588 = vpop.trf.xlu0
    %v4589 = vpop.trf.xlu0
    %v4590 = vpop.trf.xlu0
    %v4591 = vpop.trf.xlu0
    %v4592 = vpop.trf.xlu0
    %4593 = vxpose.xlu0.b32.start [1/16] %v4397, 128
    %4594 = vxpose.xlu0.b32.cont [2/16] %v4398, 128
    %4595 = vxpose.xlu0.b32.cont [3/16] 0.0, 128
    %4596 = vxpose.xlu0.b32.cont [4/16] 0.0, 128
    %4597 = vxpose.xlu0.b32.cont [5/16] 0.0, 128
    %4598 = vxpose.xlu0.b32.cont [6/16] 0.0, 128
    %4599 = vxpose.xlu0.b32.cont [7/16] 0.0, 128
    %4600 = vxpose.xlu0.b32.cont [8/16] 0.0, 128
    %4601 = vxpose.xlu0.b32.cont [9/16] 0.0, 128
    %4602 = vxpose.xlu0.b32.cont [10/16] 0.0, 128
    %4603 = vxpose.xlu0.b32.cont [11/16] 0.0, 128
    %4604 = vxpose.xlu0.b32.cont [12/16] 0.0, 128
    %4605 = vxpose.xlu0.b32.cont [13/16] 0.0, 128
    %4606 = vxpose.xlu0.b32.cont [14/16] 0.0, 128
    %4607 = vxpose.xlu0.b32.cont [15/16] 0.0, 128
    %4608 = vxpose.xlu0.b32.end [16/16] 0.0, 128
    %v4609 = vpop.trf.xlu0
    %v4610 = vpop.trf.xlu0
    %v4611 = vpop.trf.xlu0
    %v4612 = vpop.trf.xlu0
    %v4613 = vpop.trf.xlu0
    %v4614 = vpop.trf.xlu0
    %v4615 = vpop.trf.xlu0
    %v4616 = vpop.trf.xlu0
    %v4617 = vpop.trf.xlu0
    %v4618 = vpop.trf.xlu0
    %v4619 = vpop.trf.xlu0
    %v4620 = vpop.trf.xlu0
    %v4621 = vpop.trf.xlu0
    %v4622 = vpop.trf.xlu0
    %v4623 = vpop.trf.xlu0
    %v4624 = vpop.trf.xlu0
    %4625 = vxpose.xlu0.b32.start [1/16] %v4399, 128
    %4626 = vxpose.xlu0.b32.cont [2/16] %v4400, 128
    %4627 = vxpose.xlu0.b32.cont [3/16] 0.0, 128
    %4628 = vxpose.xlu0.b32.cont [4/16] 0.0, 128
    %4629 = vxpose.xlu0.b32.cont [5/16] 0.0, 128
    %4630 = vxpose.xlu0.b32.cont [6/16] 0.0, 128
    %4631 = vxpose.xlu0.b32.cont [7/16] 0.0, 128
    %4632 = vxpose.xlu0.b32.cont [8/16] 0.0, 128
    %4633 = vxpose.xlu0.b32.cont [9/16] 0.0, 128
    %4634 = vxpose.xlu0.b32.cont [10/16] 0.0, 128
    %4635 = vxpose.xlu0.b32.cont [11/16] 0.0, 128
    %4636 = vxpose.xlu0.b32.cont [12/16] 0.0, 128
    %4637 = vxpose.xlu0.b32.cont [13/16] 0.0, 128
    %4638 = vxpose.xlu0.b32.cont [14/16] 0.0, 128
    %4639 = vxpose.xlu0.b32.cont [15/16] 0.0, 128
    %4640 = vxpose.xlu0.b32.end [16/16] 0.0, 128
    %v4641 = vpop.trf.xlu0
    %v4642 = vpop.trf.xlu0
    %v4643 = vpop.trf.xlu0
    %v4644 = vpop.trf.xlu0
    %v4645 = vpop.trf.xlu0
    %v4646 = vpop.trf.xlu0
    %v4647 = vpop.trf.xlu0
    %v4648 = vpop.trf.xlu0
    %v4649 = vpop.trf.xlu0
    %v4650 = vpop.trf.xlu0
    %v4651 = vpop.trf.xlu0
    %v4652 = vpop.trf.xlu0
    %v4653 = vpop.trf.xlu0
    %v4654 = vpop.trf.xlu0
    %v4655 = vpop.trf.xlu0
    %v4656 = vpop.trf.xlu0
    %4657 = vst.msk [vmem:[#allocation7] sm:$0xff] %vm336, %v4417
    %4658 = vst.msk [vmem:[#allocation7 + $0x8] sm:$0xff] %vm336, %v4418
    %4659 = vst.msk [vmem:[#allocation7 + $0x10] sm:$0xff] %vm336, %v4449
    %4660 = vst.msk [vmem:[#allocation7 + $0x18] sm:$0xff] %vm336, %v4450
    %4661 = vst.msk [vmem:[#allocation7 + $0x20] sm:$0xff] %vm336, %v4481
    %4662 = vst.msk [vmem:[#allocation7 + $0x28] sm:$0xff] %vm336, %v4482
    %4663 = vst.msk [vmem:[#allocation7 + $0x30] sm:$0xff] %vm336, %v4513
    %4664 = vst.msk [vmem:[#allocation7 + $0x38] sm:$0xff] %vm336, %v4514
    %4665 = vst.msk [vmem:[#allocation7 + $0x40] sm:$0xff] %vm336, %v4545
    %4666 = vst.msk [vmem:[#allocation7 + $0x48] sm:$0xff] %vm336, %v4546
    %4667 = vst.msk [vmem:[#allocation7 + $0x50] sm:$0xff] %vm336, %v4577
    %4668 = vst.msk [vmem:[#allocation7 + $0x58] sm:$0xff] %vm336, %v4578
    %4669 = vst.msk [vmem:[#allocation7 + $0x60] sm:$0xff] %vm336, %v4609
    %4670 = vst.msk [vmem:[#allocation7 + $0x68] sm:$0xff] %vm336, %v4610
    %4671 = vst.msk [vmem:[#allocation7 + $0x70] sm:$0xff] %vm336, %v4641
    %4672 = vst.msk [vmem:[#allocation7 + $0x78] sm:$0xff] %vm336, %v4642
    // Predicated region
    $region38: #{tpu_custom_call.1} parent=1 // pred_check
      _
    $region39: #{tpu_custom_call.1} parent=1 // pred_check_branch
      %4674 = sbr.rel (0) target = $region41
    $region40: #{tpu_custom_call.1} parent=1 // pred_region
      %s4676 = ssub.s32 2048, 2048
      %4677 = vsyncadd [#allocation4], %s4676
      %s4678 = sshll.u32 [#allocation7], 4
      %s4679 = int_to_ptr.vmem [resolvable:$true] %s4678
      %4684 = dma.vmem_to_hbm [thread:$0]  %s4679, 2048, %s7, [#allocation4], 128, 128, 8
    $region41: #{tpu_custom_call.1} parent=1 // pred_fallthru
      _
    // Predicated region
    $region42: #{tpu_custom_call.1} parent=1 // pred_check
      _
    $region43: #{tpu_custom_call.1} parent=1 // pred_check_branch
      %4686 = sbr.rel (0) target = $region45
    $region44: #{tpu_custom_call.1} parent=1 // pred_region
      %4687 = dma.done [#allocation4], 2048
    $region45: #{tpu_custom_call.1} parent=1 // pred_fallthru
      _
    %4688 = vsyncpa [#allocation3], 1
    %4689 = vsyncpa [#allocation6], 1
    %4690 = vsyncpa [#allocation4], 1

</llo_original>
